<compile_context>
chip_gen: v7x
topology: tpu7x:2x2x1
jax: 0.10.0
libtpu: 0.0.40
codegen_flags: <defaults>
</compile_context>

<pallas_src>
import math

import jax
import jax.numpy as jnp
from jax.experimental import pallas as pl
from jax.experimental.pallas import tpu as pltpu


def _round_up(a, m):
    return ((a + m - 1) // m) * m


def _sigmoid(x):
    # EUP exp + approx reciprocal (EUP slot) instead of a full-precision divide.
    return pl.reciprocal(1.0 + jnp.exp(-x), approx=True)


def _softplus(x):
    # numerically safe softplus: max(x,0) + log(1 + exp(-|x|))
    return jnp.maximum(x, 0.0) + jnp.log(1.0 + jnp.exp(-jnp.abs(x)))


def _full_spec(shape):
    """Whole-array BlockSpec (same block every grid step)."""
    zeros = (0,) * len(shape)
    return pl.BlockSpec(shape, lambda *_: zeros)


# -----------------------------------------------------------------------------
# SpaMamba kernel: time-chunked Mamba over one long sequence (L, d_model).
# State plane flattened to lanes: (chunk, d_inner*d_state).  Hidden state and
# causal-conv tail are carried across chunks in VMEM scratch.
# -----------------------------------------------------------------------------
def spa_mamba_kernel(x_ref, inx_w_ref, inz_w_ref, conv_w_ref, conv_b_ref,
                     wdelta_ref, dt_b_ref, b_w_ref, c_w_ref,
                     a_exp_ref, rep_di_ref, rep_ds_ref, sel_ref,
                     d_ref, out_w_ref,
                     o_ref,
                     h_s, tail_s, da_s, dbu_s):
    TL = x_ref.shape[0]
    di = conv_w_ref.shape[1]
    km1 = tail_s.shape[0]                              # d_conv - 1

    @pl.when(pl.program_id(0) == 0)
    def _init():
        h_s[...] = jnp.zeros_like(h_s)
        tail_s[...] = jnp.zeros_like(tail_s)

    # ---- in_proj (bf16 weights, f32 accumulate); x/z split at weight level ----
    x = x_ref[...].astype(jnp.bfloat16)                # (TL, dm)
    xi = jnp.dot(x, inx_w_ref[...], preferred_element_type=jnp.float32)  # (TL, di)
    z = jnp.dot(x, inz_w_ref[...], preferred_element_type=jnp.float32)

    # ---- causal depthwise conv along time (tail carried from prev chunk) ----
    conv_w = conv_w_ref[...]                           # (d_conv, di)
    padbuf = jnp.concatenate([tail_s[...], xi], axis=0)   # (TL + km1, di)
    xc = xi * conv_w[km1]
    for k in range(km1):
        xc = xc + padbuf[k:k + TL] * conv_w[k]
    xc = xc + conv_b_ref[...]
    xc = xc * _sigmoid(xc)                             # SiLU
    tail_s[...] = xi[TL - km1:]                        # carry for next chunk

    # ---- fused dt_proj + x_proj(B, C), bf16 matmuls ----
    xcb = xc.astype(jnp.bfloat16)
    delta = _softplus(
        jnp.dot(xcb, wdelta_ref[...], preferred_element_type=jnp.float32)
        + dt_b_ref[...])                               # (TL, di)
    bmat = jnp.dot(xcb, b_w_ref[...], preferred_element_type=jnp.float32)  # (TL, ds)
    cmat = jnp.dot(xcb, c_w_ref[...], preferred_element_type=jnp.float32)  # (TL, ds)

    # ---- lane-dense (TL, di*ds) scan coefficients via constant expansion
    #      matmuls (MXU), all exp / elementwise prep hoisted out of the scan ----
    da_s[...] = jnp.exp(
        jnp.dot(delta, a_exp_ref[...], preferred_element_type=jnp.float32))
    dbu_s[...] = (
        jnp.dot(delta * xc, rep_di_ref[...], preferred_element_type=jnp.float32)
        * jnp.dot(bmat, rep_ds_ref[...], preferred_element_type=jnp.float32))

    # ---- selective scan: pure VPU FMAs on 2 vregs, pairwise-combined so the
    #      serial dependence chain is halved; h_t overwrites dbu_s[t] ----
    U = 8                                              # steps per loop body

    def body(b, h):
        base = pl.multiple_of(b * U, U)
        for j in range(0, U, 2):
            t0 = base + j
            da0 = da_s[pl.ds(t0, 1), :]
            db0 = dbu_s[pl.ds(t0, 1), :]
            da1 = da_s[pl.ds(t0 + 1, 1), :]
            db1 = dbu_s[pl.ds(t0 + 1, 1), :]
            h0 = da0 * h + db0                         # h_{t0}   (off chain)
            h = (da1 * da0) * h + (da1 * db0 + db1)    # h_{t0+1} (on chain)
            dbu_s[pl.ds(t0, 1), :] = h0
            dbu_s[pl.ds(t0 + 1, 1), :] = h
        return h

    h_last = jax.lax.fori_loop(0, TL // U, body, h_s[...])
    h_s[...] = h_last                                  # carry to next chunk

    # ---- vectorized C-contraction for the whole chunk (post-scan) ----
    cc = jnp.dot(cmat, rep_ds_ref[...], preferred_element_type=jnp.float32)
    ys = jnp.dot(dbu_s[...] * cc, sel_ref[...],
                 preferred_element_type=jnp.float32)   # (TL, di)

    # ---- skip (D*u), gate with SiLU(z), out_proj ----
    y = (ys + xc * d_ref[...]) * (z * _sigmoid(z))
    o_ref[...] = jnp.dot(y.astype(jnp.bfloat16), out_w_ref[...],
                         preferred_element_type=jnp.float32)


def _pick_spa_chunk(L, d_inner, d_state, cap=1024):
    # keep da_s + dbu_s under ~12 MiB of VMEM scratch
    per_row = 2 * d_inner * d_state * 4
    c = min(cap, max(64, (12 * 1024 * 1024) // per_row))
    c = (c // 8) * 8
    c = min(c, _round_up(L, 8))
    return max(c, 8)


def run_spa_mamba(x_seq, p):
    """x_seq: (L, d_model) one long sequence -> (L, d_model)."""
    L, d_model = x_seq.shape
    d_conv, d_inner = p["conv_w_t"].shape
    d_state = p["rep_ds"].shape[0]
    dids = p["a_expand"].shape[1]                      # d_inner * d_state

    chunk = _pick_spa_chunk(L, d_inner, d_state)
    Lp = _round_up(L, chunk)
    if Lp != L:
        x_seq = jnp.concatenate(
            [x_seq, jnp.zeros((Lp - L, d_model), x_seq.dtype)], axis=0)

    weights = (p["inx_w_t"], p["inz_w_t"], p["conv_w_t"], p["conv_b"],
               p["wdelta_t"], p["dt_b"], p["b_w_t"], p["c_w_t"],
               p["a_expand"], p["rep_di"], p["rep_ds"], p["sel_sum"],
               p["d"], p["out_w_t"])

    out = pl.pallas_call(
        spa_mamba_kernel,
        out_shape=jax.ShapeDtypeStruct((Lp, d_model), jnp.float32),
        grid=(Lp // chunk,),
        in_specs=[pl.BlockSpec((chunk, d_model), lambda i: (i, 0))]
                 + [_full_spec(w.shape) for w in weights],
        out_specs=pl.BlockSpec((chunk, d_model), lambda i: (i, 0)),
        scratch_shapes=[
            pltpu.VMEM((1, dids), jnp.float32),            # h carry
            pltpu.VMEM((d_conv - 1, d_inner), jnp.float32),  # conv tail carry
            pltpu.VMEM((chunk, dids), jnp.float32),        # da
            pltpu.VMEM((chunk, dids), jnp.float32),        # dbu / h history
        ],
        compiler_params=pltpu.CompilerParams(
            dimension_semantics=("arbitrary",),            # state carry
            vmem_limit_bytes=48 * 1024 * 1024),
    )(x_seq, *weights)
    return out[:L]


# -----------------------------------------------------------------------------
# SpeMamba kernel: lane-dense layout (L, d, N_pixels), gridded over pixel
# tiles.  All projections are batched over the (tiny) token axis into single
# wide matmuls; only the (L-step) recurrence stays as a static loop.
# -----------------------------------------------------------------------------
def spe_mamba_kernel(x_ref, inx_w_ref, inz_w_ref, conv_w_ref, conv_b_ref,
                     wdelta_ref, dt_b_ref, b_w_ref, c_w_ref, neg_a_ref,
                     d_ref, out_w_ref, o_ref):
    L, dm, tile = x_ref.shape
    di, K = conv_w_ref.shape
    LT = L * tile

    # ---- batched in_proj: one (di, dm) x (dm, L*tile) matmul per branch ----
    x2 = jnp.concatenate([x_ref[l] for l in range(L)],
                         axis=1).astype(jnp.bfloat16)          # (dm, LT)
    xi_all = jnp.dot(inx_w_ref[...], x2, preferred_element_type=jnp.float32)
    z_all = jnp.dot(inz_w_ref[...], x2, preferred_element_type=jnp.float32)

    # ---- causal conv along time via lane-aligned shifts; taps / biases
    #      broadcast once (hoisted) ----
    conv_w = conv_w_ref[...]
    taps = [jnp.broadcast_to(conv_w[:, k:k + 1], (di, LT)) for k in range(K)]
    conv_bb = jnp.broadcast_to(conv_b_ref[...], (di, LT))
    xc_all = xi_all * taps[K - 1]
    for j in range(1, K):
        if j < L:
            prev = jnp.concatenate(
                [jnp.zeros((di, j * tile), jnp.float32),
                 xi_all[:, :LT - j * tile]], axis=1)
            xc_all = xc_all + prev * taps[K - 1 - j]
    xc_all = xc_all + conv_bb
    xc_all = xc_all * _sigmoid(xc_all)                         # SiLU

    # ---- batched dt / B / C projections ----
    xcb = xc_all.astype(jnp.bfloat16)
    delta_all = _softplus(
        jnp.dot(wdelta_ref[...], xcb, preferred_element_type=jnp.float32)
        + dt_b_ref[...])                                       # (di, LT)
    b_all = jnp.dot(b_w_ref[...], xcb, preferred_element_type=jnp.float32)
    c_all = jnp.dot(c_w_ref[...], xcb, preferred_element_type=jnp.float32)

    # ---- selective scan over the tiny token axis, pixels on lanes ----
    a3 = neg_a_ref[...][:, :, None]                            # (di, ds, 1)
    ds = neg_a_ref.shape[1]
    h = jnp.zeros((di, ds, tile), jnp.float32)
    ys_parts = []
    for l in range(L):
        lo = l * tile
        u = xc_all[:, lo:lo + tile]
        dl = delta_all[:, lo:lo + tile]
        bl = b_all[:, lo:lo + tile]
        cl = c_all[:, lo:lo + tile]
        da = jnp.exp(dl[:, None, :] * a3)
        h = da * h + (dl * u)[:, None, :] * bl[None, :, :]
        ys_parts.append(jnp.sum(h * cl[None, :, :], axis=1))   # (di, tile)
    ys_all = jnp.concatenate(ys_parts, axis=1)                 # (di, LT)

    # ---- skip, gate, batched out_proj, per-token lane-dense stores ----
    y_all = (ys_all + d_ref[...] * xc_all) * (z_all * _sigmoid(z_all))
    out_all = jnp.dot(out_w_ref[...], y_all.astype(jnp.bfloat16),
                      preferred_element_type=jnp.float32)      # (dm, LT)
    for l in range(L):
        o_ref[l] = out_all[:, l * tile:(l + 1) * tile]


def run_spe_mamba(xs, p, tile=256):
    """xs: (L=token_num, d_model, N_pixels) -> same shape."""
    L, dm, n = xs.shape
    if n >= tile:
        npad = _round_up(n, tile)
    else:
        tile = _round_up(n, 128)
        npad = tile
    if npad != n:
        xs = jnp.concatenate(
            [xs, jnp.zeros((L, dm, npad - n), xs.dtype)], axis=2)

    weights = (p["inx_w"], p["inz_w"], p["conv_w"], p["conv_b"], p["wdelta"],
               p["dt_b"], p["b_w"], p["c_w"], p["neg_a"], p["d"], p["out_w"])

    seq_spec = pl.BlockSpec((L, dm, tile), lambda i: (0, 0, i))
    out = pl.pallas_call(
        spe_mamba_kernel,
        out_shape=jax.ShapeDtypeStruct((L, dm, npad), jnp.float32),
        grid=(npad // tile,),
        in_specs=[seq_spec] + [_full_spec(w.shape) for w in weights],
        out_specs=seq_spec,
        compiler_params=pltpu.CompilerParams(
            dimension_semantics=("parallel",),
            vmem_limit_bytes=48 * 1024 * 1024),
    )(xs, *weights)
    return out[:, :, :n]


# -----------------------------------------------------------------------------
# Fused GroupNorm+SiLU+residual (both branches) + softmax-attention fusion.
# One grid step per batch image; spa_recon / spe_recon / x are read once and
# the final output written once.  softmax(att_w) is precomputed in the wrapper.
# -----------------------------------------------------------------------------
def gn_fusion_kernel(w_ref, spa_ref, spe_ref, x_ref, wspa_ref, bspa_ref,
                     wspe_ref, bspe_ref, o_ref):
    w = w_ref[...]                                     # (1, 2) softmax weights
    p0 = w[0, 0]
    p1 = w[0, 1]

    def gn_silu(v, gam, bet):
        mean = jnp.mean(v, axis=(1, 2), keepdims=True)
        var = jnp.mean(jnp.square(v - mean), axis=(1, 2), keepdims=True)
        y = (v - mean) * jax.lax.rsqrt(var + 1e-5) * gam + bet
        return y * _sigmoid(y)                         # SiLU

    ya = gn_silu(spa_ref[...], wspa_ref[...], bspa_ref[...])
    yb = gn_silu(spe_ref[...], wspe_ref[...], bspe_ref[...])
    # p0*(ya + x) + p1*(yb + x) + x  ==  p0*ya + p1*yb + (p0+p1+1)*x
    o_ref[...] = ya * p0 + yb * p1 + x_ref[...] * (p0 + p1 + 1.0)


def run_fused_gn_fusion(spa_recon, spe_recon, x, spa_p, spe_p, att_w):
    B, C, H, W = x.shape
    g = spa_p["group_num"]
    Cg, HW = C // g, H * W

    flat = lambda a: a.reshape(B * g, Cg, HW)
    par = lambda v: v.reshape(g, Cg, 1)
    p = jax.nn.softmax(att_w).astype(jnp.float32).reshape(1, 2)

    blk = pl.BlockSpec((g, Cg, HW), lambda b: (b, 0, 0))
    cst = pl.BlockSpec((g, Cg, 1), lambda b: (0, 0, 0))
    out = pl.pallas_call(
        gn_fusion_kernel,
        out_shape=jax.ShapeDtypeStruct((B * g, Cg, HW), jnp.float32),
        grid=(B,),
        in_specs=[pl.BlockSpec((1, 2), lambda b: (0, 0)),
                  blk, blk, blk, cst, cst, cst, cst],
        out_specs=blk,
        compiler_params=pltpu.CompilerParams(
            dimension_semantics=("parallel",)),
    )(p, flat(spa_recon), flat(spe_recon), flat(x),
      par(spa_p["gn_w"]), par(spa_p["gn_b"]),
      par(spe_p["gn_w"]), par(spe_p["gn_b"]))
    return out.reshape(B, C, H, W)


# -----------------------------------------------------------------------------
# Module-level wrappers (reshape/transpose glue only).
# -----------------------------------------------------------------------------
def spa_mamba_recon(x, p):
    B, C, H, W = x.shape
    # Reference does x.permute(0,2,3,1).view(1, -1, C): ONE sequence over all
    # B*H*W tokens (batch boundaries are intentionally not reset, as in spec).
    x_seq = jnp.transpose(x, (0, 2, 3, 1)).reshape(B * H * W, C)
    y = run_spa_mamba(x_seq, p["mamba"])
    return jnp.transpose(y.reshape(B, H, W, C), (0, 3, 1, 2))


def spe_mamba_recon(x, p):
    B, C, H, W = x.shape
    token_num, gcn = p["token_num"], p["gcn"]
    channel_num = token_num * gcn
    if C < channel_num:
        x_pad = jnp.concatenate(
            [x, jnp.zeros((B, channel_num - C, H, W), x.dtype)], axis=1)
    else:
        x_pad = x
    n = B * H * W
    # lane-dense layout: (token_num, gcn, B*H*W)
    xs = jnp.transpose(x_pad.reshape(B, token_num, gcn, H * W),
                       (1, 2, 0, 3)).reshape(token_num, gcn, n)
    y = run_spe_mamba(xs, p["mamba"])
    return jnp.transpose(y.reshape(token_num, gcn, B, H * W),
                         (2, 0, 1, 3)).reshape(B, channel_num, H, W)


def both_mamba_forward(x, params):
    B, C, H, W = x.shape
    spa_recon = spa_mamba_recon(x, params["spa"])       # pre-GN
    spe_recon = spe_mamba_recon(x, params["spe"])       # pre-GN
    channel_num = params["spe"]["token_num"] * params["spe"]["gcn"]
    # TODO(synk): with use_residual=True the reference adds a C-channel x to a
    # channel_num-channel projection; that only type-checks when they match.
    assert channel_num == C
    assert params["spa"]["group_num"] == params["spe"]["group_num"]
    # use_att=True -> softmax fusion ; use_residual=True -> + x ; fused with
    # both GroupNorm+SiLU+residual passes in a single kernel.
    return run_fused_gn_fusion(spa_recon, spe_recon, x,
                               params["spa"], params["spe"], params["att_w"])


# -----------------------------------------------------------------------------
# Deterministic parameter init (shapes follow Mamba(d_model, d_state=16,
# d_conv=4, expand=2); GroupNorm defaults: weight=1, bias=0).
# -----------------------------------------------------------------------------
def init_mamba_params(key, d_model, d_state=16, d_conv=4, expand=2):
    d_inner = expand * d_model
    dt_rank = math.ceil(d_model / 16)
    ks = jax.random.split(key, 7)
    s = 0.1
    return dict(
        in_w=jax.random.normal(ks[0], (2 * d_inner, d_model), jnp.float32) * s,
        conv_w=jax.random.normal(ks[1], (d_inner, d_conv), jnp.float32) * s,
        conv_b=jax.random.normal(ks[2], (d_inner,), jnp.float32) * s,
        xproj_w=jax.random.normal(ks[3], (dt_rank + 2 * d_state, d_inner),
                                  jnp.float32) * s,
        dt_w=jax.random.normal(ks[4], (d_inner, dt_rank), jnp.float32) * s,
        dt_b=jax.random.normal(ks[5], (d_inner,), jnp.float32) * s,
        out_w=jax.random.normal(ks[6], (d_model, d_inner), jnp.float32) * s,
        a_log=jnp.log(jnp.tile(
            jnp.arange(1, d_state + 1, dtype=jnp.float32)[None, :],
            (d_inner, 1))),
        d=jnp.ones((d_inner,), jnp.float32),
        dt_rank=dt_rank,
    )


def _expand_state_mats(a_log):
    """Constant matrices that expand (di)/(ds) vectors onto di*ds lanes."""
    di, ds = a_log.shape
    A = -jnp.exp(a_log)                                        # (di, ds)
    eye_di = jnp.eye(di, dtype=jnp.float32)
    a_expand = (eye_di[:, :, None] * A[None, :, :]).reshape(di, di * ds)
    rep_di = jnp.kron(eye_di, jnp.ones((1, ds), jnp.float32))   # (di, di*ds)
    rep_ds = jnp.tile(jnp.eye(ds, dtype=jnp.float32), (1, di))  # (ds, di*ds)
    sel_sum = rep_di.T                                          # (di*ds, di)
    return a_expand, rep_di, rep_ds, sel_sum


def prep_spa_mamba(raw):
    r = raw["dt_rank"]
    di, ds = raw["a_log"].shape
    a_expand, rep_di, rep_ds, sel_sum = _expand_state_mats(raw["a_log"])
    in_w_t = raw["in_w"].T                                      # (dm, 2*di)
    return dict(
        inx_w_t=in_w_t[:, :di].astype(jnp.bfloat16),
        inz_w_t=in_w_t[:, di:].astype(jnp.bfloat16),
        conv_w_t=raw["conv_w"].T,                               # (d_conv, di)
        conv_b=raw["conv_b"].reshape(1, -1),
        wdelta_t=(raw["xproj_w"][:r].T @ raw["dt_w"].T).astype(jnp.bfloat16),
        dt_b=raw["dt_b"].reshape(1, -1),
        b_w_t=raw["xproj_w"][r:r + ds].T.astype(jnp.bfloat16),  # (di, ds)
        c_w_t=raw["xproj_w"][r + ds:].T.astype(jnp.bfloat16),   # (di, ds)
        a_expand=a_expand, rep_di=rep_di, rep_ds=rep_ds, sel_sum=sel_sum,
        d=raw["d"].reshape(1, -1),
        out_w_t=raw["out_w"].T.astype(jnp.bfloat16),            # (di, dm)
    )


def prep_spe_mamba(raw):
    r = raw["dt_rank"]
    di, ds = raw["a_log"].shape
    return dict(
        inx_w=raw["in_w"][:di].astype(jnp.bfloat16),            # (di, dm)
        inz_w=raw["in_w"][di:].astype(jnp.bfloat16),
        conv_w=raw["conv_w"],                                   # (di, d_conv)
        conv_b=raw["conv_b"].reshape(-1, 1),
        wdelta=(raw["dt_w"] @ raw["xproj_w"][:r]).astype(jnp.bfloat16),
        dt_b=raw["dt_b"].reshape(-1, 1),
        b_w=raw["xproj_w"][r:r + ds].astype(jnp.bfloat16),      # (ds, di)
        c_w=raw["xproj_w"][r + ds:].astype(jnp.bfloat16),       # (ds, di)
        neg_a=-jnp.exp(raw["a_log"]),                           # (di, ds)
        d=raw["d"].reshape(-1, 1),
        out_w=raw["out_w"].astype(jnp.bfloat16),                # (dm, di)
    )


if __name__ == "__main__":
    key = jax.random.PRNGKey(0)
    B, C, H, W = 2, 8, 8, 8
    token_num, group_num = 4, 4
    k_x, k_spa, k_spe = jax.random.split(key, 3)

    x = jax.random.normal(k_x, (B, C, H, W), jnp.float32)

    gcn = math.ceil(C / token_num)              # group_channel_num
    channel_num = token_num * gcn

    params = {
        "spa": {
            "mamba": prep_spa_mamba(init_mamba_params(k_spa, C)),
            "gn_w": jnp.ones((C,), jnp.float32),
            "gn_b": jnp.zeros((C,), jnp.float32),
            "group_num": group_num,
        },
        "spe": {
            "mamba": prep_spe_mamba(init_mamba_params(k_spe, gcn)),
            "gn_w": jnp.ones((channel_num,), jnp.float32),
            "gn_b": jnp.zeros((channel_num,), jnp.float32),
            "group_num": group_num,
            "token_num": token_num,
            "gcn": gcn,
        },
        "att_w": jnp.ones((2,), jnp.float32) / 2.0,   # nn.Parameter(ones(2)/2)
    }

    out = both_mamba_forward(x, params)
    out = jax.block_until_ready(out)
    assert out.shape == (B, C, H, W)
    assert bool(jnp.all(jnp.isfinite(out)))
    print("KERNEL_OK")
</pallas_src>

<mosaic_0001>
module attributes {stable_mosaic.version = 11 : i64} {
  func.func @spa_mamba_kernel(%arg0: i32, %arg1: memref<128x8xf32, #tpu.memory_space<vmem>>, %arg2: memref<8x16xbf16, #tpu.memory_space<vmem>>, %arg3: memref<8x16xbf16, #tpu.memory_space<vmem>>, %arg4: memref<4x16xf32, #tpu.memory_space<vmem>>, %arg5: memref<1x16xf32, #tpu.memory_space<vmem>>, %arg6: memref<16x16xbf16, #tpu.memory_space<vmem>>, %arg7: memref<1x16xf32, #tpu.memory_space<vmem>>, %arg8: memref<16x16xbf16, #tpu.memory_space<vmem>>, %arg9: memref<16x16xbf16, #tpu.memory_space<vmem>>, %arg10: memref<16x256xf32, #tpu.memory_space<vmem>>, %arg11: memref<16x256xf32, #tpu.memory_space<vmem>>, %arg12: memref<16x256xf32, #tpu.memory_space<vmem>>, %arg13: memref<256x16xf32, #tpu.memory_space<vmem>>, %arg14: memref<1x16xf32, #tpu.memory_space<vmem>>, %arg15: memref<16x8xbf16, #tpu.memory_space<vmem>>, %arg16: memref<128x8xf32, #tpu.memory_space<vmem>>, %arg17: memref<1x256xf32, #tpu.memory_space<vmem>>, %arg18: memref<3x16xf32, #tpu.memory_space<vmem>>, %arg19: memref<128x256xf32, #tpu.memory_space<vmem>>, %arg20: memref<128x256xf32, #tpu.memory_space<vmem>>) attributes {dimension_semantics = [#tpu.dimension_semantics<arbitrary>], iteration_bounds = array<i64: 1>, scalar_prefetch = 0 : i64, scratch_operands = 4 : i64, tpu.core_type = #tpu.core_type<tc>, window_params = [{transform_indices = @transform_0, window_bounds = array<i64: 128, 8>}, {pipeline_mode = #tpu.pipeline_mode<synchronous>, transform_indices = @transform_1, window_bounds = array<i64: 8, 16>}, {pipeline_mode = #tpu.pipeline_mode<synchronous>, transform_indices = @transform_2, window_bounds = array<i64: 8, 16>}, {pipeline_mode = #tpu.pipeline_mode<synchronous>, transform_indices = @transform_3, window_bounds = array<i64: 4, 16>}, {pipeline_mode = #tpu.pipeline_mode<synchronous>, transform_indices = @transform_4, window_bounds = array<i64: 1, 16>}, {pipeline_mode = #tpu.pipeline_mode<synchronous>, transform_indices = @transform_5, window_bounds = array<i64: 16, 16>}, {pipeline_mode = #tpu.pipeline_mode<synchronous>, transform_indices = @transform_6, window_bounds = array<i64: 1, 16>}, {pipeline_mode = #tpu.pipeline_mode<synchronous>, transform_indices = @transform_7, window_bounds = array<i64: 16, 16>}, {pipeline_mode = #tpu.pipeline_mode<synchronous>, transform_indices = @transform_8, window_bounds = array<i64: 16, 16>}, {pipeline_mode = #tpu.pipeline_mode<synchronous>, transform_indices = @transform_9, window_bounds = array<i64: 16, 256>}, {pipeline_mode = #tpu.pipeline_mode<synchronous>, transform_indices = @transform_10, window_bounds = array<i64: 16, 256>}, {pipeline_mode = #tpu.pipeline_mode<synchronous>, transform_indices = @transform_11, window_bounds = array<i64: 16, 256>}, {pipeline_mode = #tpu.pipeline_mode<synchronous>, transform_indices = @transform_12, window_bounds = array<i64: 256, 16>}, {pipeline_mode = #tpu.pipeline_mode<synchronous>, transform_indices = @transform_13, window_bounds = array<i64: 1, 16>}, {pipeline_mode = #tpu.pipeline_mode<synchronous>, transform_indices = @transform_14, window_bounds = array<i64: 16, 8>}, {transform_indices = @transform_15, window_bounds = array<i64: 128, 8>}]} {
    %c0_i32 = arith.constant 0 : i32
    %0 = arith.cmpi eq, %arg0, %c0_i32 : i32
    %1 = arith.extui %0 : i1 to i32
    %c0_i32_0 = arith.constant 0 : i32
    %2 = arith.cmpi ne, %1, %c0_i32_0 : i32
    scf.if %2 {
      %cst_67 = arith.constant 0.000000e+00 : f32
      %107 = vector.broadcast %cst_67 : f32 to vector<1x256xf32>
      %c0_68 = arith.constant 0 : index
      %c0_69 = arith.constant 0 : index
      %108 = vector.load %arg17[%c0_68, %c0_69] : memref<1x256xf32, #tpu.memory_space<vmem>>, vector<1x256xf32>
      tpu.vector_store %arg17[%c0_68, %c0_69], %107 {strides = array<i32>} : memref<1x256xf32, #tpu.memory_space<vmem>>, vector<1x256xf32>,
      %cst_70 = arith.constant 0.000000e+00 : f32
      %109 = vector.broadcast %cst_70 : f32 to vector<3x16xf32>
      %c0_71 = arith.constant 0 : index
      %c0_72 = arith.constant 0 : index
      %110 = vector.load %arg18[%c0_71, %c0_72] : memref<3x16xf32, #tpu.memory_space<vmem>>, vector<3x16xf32>
      tpu.vector_store %arg18[%c0_71, %c0_72], %109 {strides = array<i32>} : memref<3x16xf32, #tpu.memory_space<vmem>>, vector<3x16xf32>,
    } else {
    }
    %c0 = arith.constant 0 : index
    %c0_1 = arith.constant 0 : index
    %3 = vector.load %arg1[%c0, %c0_1] : memref<128x8xf32, #tpu.memory_space<vmem>>, vector<128x8xf32>
    %4 = arith.truncf %3 : vector<128x8xf32> to vector<128x8xbf16>
    %c0_2 = arith.constant 0 : index
    %c0_3 = arith.constant 0 : index
    %5 = vector.load %arg2[%c0_2, %c0_3] : memref<8x16xbf16, #tpu.memory_space<vmem>>, vector<8x16xbf16>
    %cst = arith.constant dense<0.000000e+00> : vector<128x16xf32>
    %6 = tpu.matmul %4, %5, %cst {dimension_numbers = #tpu.dot_dimension_numbers<[1], [0], [0], [1], [0, 0, 1, 1], [], []>} : vector<128x8xbf16>, vector<8x16xbf16>, vector<128x16xf32> -> vector<128x16xf32>
    %c0_4 = arith.constant 0 : index
    %c0_5 = arith.constant 0 : index
    %7 = vector.load %arg3[%c0_4, %c0_5] : memref<8x16xbf16, #tpu.memory_space<vmem>>, vector<8x16xbf16>
    %cst_6 = arith.constant dense<0.000000e+00> : vector<128x16xf32>
    %8 = tpu.matmul %4, %7, %cst_6 {dimension_numbers = #tpu.dot_dimension_numbers<[1], [0], [0], [1], [0, 0, 1, 1], [], []>} : vector<128x8xbf16>, vector<8x16xbf16>, vector<128x16xf32> -> vector<128x16xf32>
    %c0_7 = arith.constant 0 : index
    %c0_8 = arith.constant 0 : index
    %9 = vector.load %arg4[%c0_7, %c0_8] : memref<4x16xf32, #tpu.memory_space<vmem>>, vector<4x16xf32>
    %c0_9 = arith.constant 0 : index
    %c0_10 = arith.constant 0 : index
    %10 = vector.load %arg18[%c0_9, %c0_10] : memref<3x16xf32, #tpu.memory_space<vmem>>, vector<3x16xf32>
    %11 = tpu.concatenate %10, %6 in 0 : vector<3x16xf32>, vector<128x16xf32> -> vector<131x16xf32>
    %12 = vector.extract_strided_slice %9 {offsets = [3, 0], sizes = [1, 16], strides = [1, 1]} : vector<4x16xf32> to vector<1x16xf32>
    %13 = vector.shape_cast %12 : vector<1x16xf32> to vector<16xf32>
    %14 = vector.shape_cast %13 : vector<16xf32> to vector<1x16xf32>
    %15 = vector.broadcast %14 : vector<1x16xf32> to vector<128x16xf32>
    %16 = arith.mulf %6, %15 : vector<128x16xf32>
    %17 = vector.extract_strided_slice %11 {offsets = [0, 0], sizes = [128, 16], strides = [1, 1]} : vector<131x16xf32> to vector<128x16xf32>
    %18 = vector.extract_strided_slice %9 {offsets = [0, 0], sizes = [1, 16], strides = [1, 1]} : vector<4x16xf32> to vector<1x16xf32>
    %19 = vector.shape_cast %18 : vector<1x16xf32> to vector<16xf32>
    %20 = vector.shape_cast %19 : vector<16xf32> to vector<1x16xf32>
    %21 = vector.broadcast %20 : vector<1x16xf32> to vector<128x16xf32>
    %22 = arith.mulf %17, %21 : vector<128x16xf32>
    %23 = arith.addf %16, %22 : vector<128x16xf32>
    %24 = vector.extract_strided_slice %11 {offsets = [1, 0], sizes = [128, 16], strides = [1, 1]} : vector<131x16xf32> to vector<128x16xf32>
    %25 = vector.extract_strided_slice %9 {offsets = [1, 0], sizes = [1, 16], strides = [1, 1]} : vector<4x16xf32> to vector<1x16xf32>
    %26 = vector.shape_cast %25 : vector<1x16xf32> to vector<16xf32>
    %27 = vector.shape_cast %26 : vector<16xf32> to vector<1x16xf32>
    %28 = vector.broadcast %27 : vector<1x16xf32> to vector<128x16xf32>
    %29 = arith.mulf %24, %28 : vector<128x16xf32>
    %30 = arith.addf %23, %29 : vector<128x16xf32>
    %31 = vector.extract_strided_slice %11 {offsets = [2, 0], sizes = [128, 16], strides = [1, 1]} : vector<131x16xf32> to vector<128x16xf32>
    %32 = vector.extract_strided_slice %9 {offsets = [2, 0], sizes = [1, 16], strides = [1, 1]} : vector<4x16xf32> to vector<1x16xf32>
    %33 = vector.shape_cast %32 : vector<1x16xf32> to vector<16xf32>
    %34 = vector.shape_cast %33 : vector<16xf32> to vector<1x16xf32>
    %35 = vector.broadcast %34 : vector<1x16xf32> to vector<128x16xf32>
    %36 = arith.mulf %31, %35 : vector<128x16xf32>
    %37 = arith.addf %30, %36 : vector<128x16xf32>
    %c0_11 = arith.constant 0 : index
    %c0_12 = arith.constant 0 : index
    %38 = vector.load %arg5[%c0_11, %c0_12] : memref<1x16xf32, #tpu.memory_space<vmem>>, vector<1x16xf32>
    %39 = vector.broadcast %38 : vector<1x16xf32> to vector<128x16xf32>
    %40 = arith.addf %37, %39 : vector<128x16xf32>
    %cst_13 = arith.constant 0.000000e+00 : f32
    %41 = vector.broadcast %cst_13 : f32 to vector<128x16xf32>
    %42 = arith.subf %41, %40 : vector<128x16xf32>
    %43 = math.exp %42 : vector<128x16xf32>
    %cst_14 = arith.constant 1.000000e+00 : f32
    %44 = vector.broadcast %cst_14 : f32 to vector<128x16xf32>
    %45 = arith.addf %44, %43 : vector<128x16xf32>
    %46 = tpu.reciprocal %45 {approx = true} : vector<128x16xf32> -> vector<128x16xf32>
    %47 = arith.mulf %40, %46 : vector<128x16xf32>
    %48 = vector.extract_strided_slice %6 {offsets = [125, 0], sizes = [3, 16], strides = [1, 1]} : vector<128x16xf32> to vector<3x16xf32>
    %c0_15 = arith.constant 0 : index
    %c0_16 = arith.constant 0 : index
    %49 = vector.load %arg18[%c0_15, %c0_16] : memref<3x16xf32, #tpu.memory_space<vmem>>, vector<3x16xf32>
    tpu.vector_store %arg18[%c0_15, %c0_16], %48 {strides = array<i32>} : memref<3x16xf32, #tpu.memory_space<vmem>>, vector<3x16xf32>,
    %50 = arith.truncf %47 : vector<128x16xf32> to vector<128x16xbf16>
    %c0_17 = arith.constant 0 : index
    %c0_18 = arith.constant 0 : index
    %51 = vector.load %arg6[%c0_17, %c0_18] : memref<16x16xbf16, #tpu.memory_space<vmem>>, vector<16x16xbf16>
    %cst_19 = arith.constant dense<0.000000e+00> : vector<128x16xf32>
    %52 = tpu.matmul %50, %51, %cst_19 {dimension_numbers = #tpu.dot_dimension_numbers<[1], [0], [0], [1], [0, 0, 1, 1], [], []>} : vector<128x16xbf16>, vector<16x16xbf16>, vector<128x16xf32> -> vector<128x16xf32>
    %c0_20 = arith.constant 0 : index
    %c0_21 = arith.constant 0 : index
    %53 = vector.load %arg7[%c0_20, %c0_21] : memref<1x16xf32, #tpu.memory_space<vmem>>, vector<1x16xf32>
    %54 = vector.broadcast %53 : vector<1x16xf32> to vector<128x16xf32>
    %55 = arith.addf %52, %54 : vector<128x16xf32>
    %cst_22 = arith.constant 0.000000e+00 : f32
    %56 = vector.broadcast %cst_22 : f32 to vector<128x16xf32>
    %57 = arith.maximumf %55, %56 : vector<128x16xf32>
    %58 = math.absf %55 : vector<128x16xf32>
    %cst_23 = arith.constant 0.000000e+00 : f32
    %59 = vector.broadcast %cst_23 : f32 to vector<128x16xf32>
    %60 = arith.subf %59, %58 : vector<128x16xf32>
    %61 = math.exp %60 : vector<128x16xf32>
    %cst_24 = arith.constant 1.000000e+00 : f32
    %62 = vector.broadcast %cst_24 : f32 to vector<128x16xf32>
    %63 = arith.addf %62, %61 : vector<128x16xf32>
    %64 = math.log %63 : vector<128x16xf32>
    %65 = arith.addf %57, %64 : vector<128x16xf32>
    %c0_25 = arith.constant 0 : index
    %c0_26 = arith.constant 0 : index
    %66 = vector.load %arg8[%c0_25, %c0_26] : memref<16x16xbf16, #tpu.memory_space<vmem>>, vector<16x16xbf16>
    %cst_27 = arith.constant dense<0.000000e+00> : vector<128x16xf32>
    %67 = tpu.matmul %50, %66, %cst_27 {dimension_numbers = #tpu.dot_dimension_numbers<[1], [0], [0], [1], [0, 0, 1, 1], [], []>} : vector<128x16xbf16>, vector<16x16xbf16>, vector<128x16xf32> -> vector<128x16xf32>
    %c0_28 = arith.constant 0 : index
    %c0_29 = arith.constant 0 : index
    %68 = vector.load %arg9[%c0_28, %c0_29] : memref<16x16xbf16, #tpu.memory_space<vmem>>, vector<16x16xbf16>
    %cst_30 = arith.constant dense<0.000000e+00> : vector<128x16xf32>
    %69 = tpu.matmul %50, %68, %cst_30 {dimension_numbers = #tpu.dot_dimension_numbers<[1], [0], [0], [1], [0, 0, 1, 1], [], []>} : vector<128x16xbf16>, vector<16x16xbf16>, vector<128x16xf32> -> vector<128x16xf32>
    %c0_31 = arith.constant 0 : index
    %c0_32 = arith.constant 0 : index
    %70 = vector.load %arg10[%c0_31, %c0_32] : memref<16x256xf32, #tpu.memory_space<vmem>>, vector<16x256xf32>
    %cst_33 = arith.constant dense<0.000000e+00> : vector<128x256xf32>
    %71 = tpu.matmul %65, %70, %cst_33 {dimension_numbers = #tpu.dot_dimension_numbers<[1], [0], [0], [1], [0, 0, 1, 1], [], []>} : vector<128x16xf32>, vector<16x256xf32>, vector<128x256xf32> -> vector<128x256xf32>
    %72 = math.exp %71 : vector<128x256xf32>
    %c0_34 = arith.constant 0 : index
    %c0_35 = arith.constant 0 : index
    %73 = vector.load %arg19[%c0_34, %c0_35] : memref<128x256xf32, #tpu.memory_space<vmem>>, vector<128x256xf32>
    tpu.vector_store %arg19[%c0_34, %c0_35], %72 {strides = array<i32>} : memref<128x256xf32, #tpu.memory_space<vmem>>, vector<128x256xf32>,
    %74 = arith.mulf %65, %47 : vector<128x16xf32>
    %c0_36 = arith.constant 0 : index
    %c0_37 = arith.constant 0 : index
    %75 = vector.load %arg11[%c0_36, %c0_37] : memref<16x256xf32, #tpu.memory_space<vmem>>, vector<16x256xf32>
    %cst_38 = arith.constant dense<0.000000e+00> : vector<128x256xf32>
    %76 = tpu.matmul %74, %75, %cst_38 {dimension_numbers = #tpu.dot_dimension_numbers<[1], [0], [0], [1], [0, 0, 1, 1], [], []>} : vector<128x16xf32>, vector<16x256xf32>, vector<128x256xf32> -> vector<128x256xf32>
    %c0_39 = arith.constant 0 : index
    %c0_40 = arith.constant 0 : index
    %77 = vector.load %arg12[%c0_39, %c0_40] : memref<16x256xf32, #tpu.memory_space<vmem>>, vector<16x256xf32>
    %cst_41 = arith.constant dense<0.000000e+00> : vector<128x256xf32>
    %78 = tpu.matmul %67, %77, %cst_41 {dimension_numbers = #tpu.dot_dimension_numbers<[1], [0], [0], [1], [0, 0, 1, 1], [], []>} : vector<128x16xf32>, vector<16x256xf32>, vector<128x256xf32> -> vector<128x256xf32>
    %79 = arith.mulf %76, %78 : vector<128x256xf32>
    %c0_42 = arith.constant 0 : index
    %c0_43 = arith.constant 0 : index
    %80 = vector.load %arg20[%c0_42, %c0_43] : memref<128x256xf32, #tpu.memory_space<vmem>>, vector<128x256xf32>
    tpu.vector_store %arg20[%c0_42, %c0_43], %79 {strides = array<i32>} : memref<128x256xf32, #tpu.memory_space<vmem>>, vector<128x256xf32>,
    %c0_44 = arith.constant 0 : index
    %c0_45 = arith.constant 0 : index
    %81 = vector.load %arg17[%c0_44, %c0_45] : memref<1x256xf32, #tpu.memory_space<vmem>>, vector<1x256xf32>
    %c0_i32_46 = arith.constant 0 : i32
    %c16_i32 = arith.constant 16 : i32
    %82 = arith.addi %c0_i32_46, %c16_i32 : i32
    %c1_i32 = arith.constant 1 : i32
    %83 = scf.for %arg21 = %c0_i32_46 to %82 step %c1_i32 iter_args(%arg22 = %81) -> (vector<1x256xf32>)  : i32 {
      %c8_i32 = arith.constant 8 : i32
      %107 = arith.muli %arg21, %c8_i32 : i32
      %108 = tpu.assume_multiple %107, 8 : i32
      %c0_i32_67 = arith.constant 0 : i32
      %109 = arith.addi %108, %c0_i32_67 : i32
      %110 = arith.index_cast %109 : i32 to index
      %c0_68 = arith.constant 0 : index
      %111 = vector.load %arg19[%110, %c0_68] : memref<128x256xf32, #tpu.memory_space<vmem>>, vector<1x256xf32>
      %112 = arith.index_cast %109 : i32 to index
      %c0_69 = arith.constant 0 : index
      %113 = vector.load %arg20[%112, %c0_69] : memref<128x256xf32, #tpu.memory_space<vmem>>, vector<1x256xf32>
      %c1_i32_70 = arith.constant 1 : i32
      %114 = arith.addi %109, %c1_i32_70 : i32
      %115 = arith.index_cast %114 : i32 to index
      %c0_71 = arith.constant 0 : index
      %116 = vector.load %arg19[%115, %c0_71] : memref<128x256xf32, #tpu.memory_space<vmem>>, vector<1x256xf32>
      %c1_i32_72 = arith.constant 1 : i32
      %117 = arith.addi %109, %c1_i32_72 : i32
      %118 = arith.index_cast %117 : i32 to index
      %c0_73 = arith.constant 0 : index
      %119 = vector.load %arg20[%118, %c0_73] : memref<128x256xf32, #tpu.memory_space<vmem>>, vector<1x256xf32>
      %120 = arith.mulf %111, %arg22 : vector<1x256xf32>
      %121 = arith.addf %120, %113 : vector<1x256xf32>
      %122 = arith.mulf %116, %111 : vector<1x256xf32>
      %123 = arith.mulf %122, %arg22 : vector<1x256xf32>
      %124 = arith.mulf %116, %113 : vector<1x256xf32>
      %125 = arith.addf %124, %119 : vector<1x256xf32>
      %126 = arith.addf %123, %125 : vector<1x256xf32>
      %127 = arith.index_cast %109 : i32 to index
      %c0_74 = arith.constant 0 : index
      %128 = vector.load %arg20[%127, %c0_74] : memref<128x256xf32, #tpu.memory_space<vmem>>, vector<1x256xf32>
      tpu.vector_store %arg20[%127, %c0_74], %121 {strides = array<i32>} : memref<128x256xf32, #tpu.memory_space<vmem>>, vector<1x256xf32>,
      %c1_i32_75 = arith.constant 1 : i32
      %129 = arith.addi %109, %c1_i32_75 : i32
      %130 = arith.index_cast %129 : i32 to index
      %c0_76 = arith.constant 0 : index
      %131 = vector.load %arg20[%130, %c0_76] : memref<128x256xf32, #tpu.memory_space<vmem>>, vector<1x256xf32>
      tpu.vector_store %arg20[%130, %c0_76], %126 {strides = array<i32>} : memref<128x256xf32, #tpu.memory_space<vmem>>, vector<1x256xf32>,
      %c2_i32 = arith.constant 2 : i32
      %132 = arith.addi %108, %c2_i32 : i32
      %133 = arith.index_cast %132 : i32 to index
      %c0_77 = arith.constant 0 : index
      %134 = vector.load %arg19[%133, %c0_77] : memref<128x256xf32, #tpu.memory_space<vmem>>, vector<1x256xf32>
      %135 = arith.index_cast %132 : i32 to index
      %c0_78 = arith.constant 0 : index
      %136 = vector.load %arg20[%135, %c0_78] : memref<128x256xf32, #tpu.memory_space<vmem>>, vector<1x256xf32>
      %c1_i32_79 = arith.constant 1 : i32
      %137 = arith.addi %132, %c1_i32_79 : i32
      %138 = arith.index_cast %137 : i32 to index
      %c0_80 = arith.constant 0 : index
      %139 = vector.load %arg19[%138, %c0_80] : memref<128x256xf32, #tpu.memory_space<vmem>>, vector<1x256xf32>
      %c1_i32_81 = arith.constant 1 : i32
      %140 = arith.addi %132, %c1_i32_81 : i32
      %141 = arith.index_cast %140 : i32 to index
      %c0_82 = arith.constant 0 : index
      %142 = vector.load %arg20[%141, %c0_82] : memref<128x256xf32, #tpu.memory_space<vmem>>, vector<1x256xf32>
      %143 = arith.mulf %134, %126 : vector<1x256xf32>
      %144 = arith.addf %143, %136 : vector<1x256xf32>
      %145 = arith.mulf %139, %134 : vector<1x256xf32>
      %146 = arith.mulf %145, %126 : vector<1x256xf32>
      %147 = arith.mulf %139, %136 : vector<1x256xf32>
      %148 = arith.addf %147, %142 : vector<1x256xf32>
      %149 = arith.addf %146, %148 : vector<1x256xf32>
      %150 = arith.index_cast %132 : i32 to index
      %c0_83 = arith.constant 0 : index
      %151 = vector.load %arg20[%150, %c0_83] : memref<128x256xf32, #tpu.memory_space<vmem>>, vector<1x256xf32>
      tpu.vector_store %arg20[%150, %c0_83], %144 {strides = array<i32>} : memref<128x256xf32, #tpu.memory_space<vmem>>, vector<1x256xf32>,
      %c1_i32_84 = arith.constant 1 : i32
      %152 = arith.addi %132, %c1_i32_84 : i32
      %153 = arith.index_cast %152 : i32 to index
      %c0_85 = arith.constant 0 : index
      %154 = vector.load %arg20[%153, %c0_85] : memref<128x256xf32, #tpu.memory_space<vmem>>, vector<1x256xf32>
      tpu.vector_store %arg20[%153, %c0_85], %149 {strides = array<i32>} : memref<128x256xf32, #tpu.memory_space<vmem>>, vector<1x256xf32>,
      %c4_i32 = arith.constant 4 : i32
      %155 = arith.addi %108, %c4_i32 : i32
      %156 = arith.index_cast %155 : i32 to index
      %c0_86 = arith.constant 0 : index
      %157 = vector.load %arg19[%156, %c0_86] : memref<128x256xf32, #tpu.memory_space<vmem>>, vector<1x256xf32>
      %158 = arith.index_cast %155 : i32 to index
      %c0_87 = arith.constant 0 : index
      %159 = vector.load %arg20[%158, %c0_87] : memref<128x256xf32, #tpu.memory_space<vmem>>, vector<1x256xf32>
      %c1_i32_88 = arith.constant 1 : i32
      %160 = arith.addi %155, %c1_i32_88 : i32
      %161 = arith.index_cast %160 : i32 to index
      %c0_89 = arith.constant 0 : index
      %162 = vector.load %arg19[%161, %c0_89] : memref<128x256xf32, #tpu.memory_space<vmem>>, vector<1x256xf32>
      %c1_i32_90 = arith.constant 1 : i32
      %163 = arith.addi %155, %c1_i32_90 : i32
      %164 = arith.index_cast %163 : i32 to index
      %c0_91 = arith.constant 0 : index
      %165 = vector.load %arg20[%164, %c0_91] : memref<128x256xf32, #tpu.memory_space<vmem>>, vector<1x256xf32>
      %166 = arith.mulf %157, %149 : vector<1x256xf32>
      %167 = arith.addf %166, %159 : vector<1x256xf32>
      %168 = arith.mulf %162, %157 : vector<1x256xf32>
      %169 = arith.mulf %168, %149 : vector<1x256xf32>
      %170 = arith.mulf %162, %159 : vector<1x256xf32>
      %171 = arith.addf %170, %165 : vector<1x256xf32>
      %172 = arith.addf %169, %171 : vector<1x256xf32>
      %173 = arith.index_cast %155 : i32 to index
      %c0_92 = arith.constant 0 : index
      %174 = vector.load %arg20[%173, %c0_92] : memref<128x256xf32, #tpu.memory_space<vmem>>, vector<1x256xf32>
      tpu.vector_store %arg20[%173, %c0_92], %167 {strides = array<i32>} : memref<128x256xf32, #tpu.memory_space<vmem>>, vector<1x256xf32>,
      %c1_i32_93 = arith.constant 1 : i32
      %175 = arith.addi %155, %c1_i32_93 : i32
      %176 = arith.index_cast %175 : i32 to index
      %c0_94 = arith.constant 0 : index
      %177 = vector.load %arg20[%176, %c0_94] : memref<128x256xf32, #tpu.memory_space<vmem>>, vector<1x256xf32>
      tpu.vector_store %arg20[%176, %c0_94], %172 {strides = array<i32>} : memref<128x256xf32, #tpu.memory_space<vmem>>, vector<1x256xf32>,
      %c6_i32 = arith.constant 6 : i32
      %178 = arith.addi %108, %c6_i32 : i32
      %179 = arith.index_cast %178 : i32 to index
      %c0_95 = arith.constant 0 : index
      %180 = vector.load %arg19[%179, %c0_95] : memref<128x256xf32, #tpu.memory_space<vmem>>, vector<1x256xf32>
      %181 = arith.index_cast %178 : i32 to index
      %c0_96 = arith.constant 0 : index
      %182 = vector.load %arg20[%181, %c0_96] : memref<128x256xf32, #tpu.memory_space<vmem>>, vector<1x256xf32>
      %c1_i32_97 = arith.constant 1 : i32
      %183 = arith.addi %178, %c1_i32_97 : i32
      %184 = arith.index_cast %183 : i32 to index
      %c0_98 = arith.constant 0 : index
      %185 = vector.load %arg19[%184, %c0_98] : memref<128x256xf32, #tpu.memory_space<vmem>>, vector<1x256xf32>
      %c1_i32_99 = arith.constant 1 : i32
      %186 = arith.addi %178, %c1_i32_99 : i32
      %187 = arith.index_cast %186 : i32 to index
      %c0_100 = arith.constant 0 : index
      %188 = vector.load %arg20[%187, %c0_100] : memref<128x256xf32, #tpu.memory_space<vmem>>, vector<1x256xf32>
      %189 = arith.mulf %180, %172 : vector<1x256xf32>
      %190 = arith.addf %189, %182 : vector<1x256xf32>
      %191 = arith.mulf %185, %180 : vector<1x256xf32>
      %192 = arith.mulf %191, %172 : vector<1x256xf32>
      %193 = arith.mulf %185, %182 : vector<1x256xf32>
      %194 = arith.addf %193, %188 : vector<1x256xf32>
      %195 = arith.addf %192, %194 : vector<1x256xf32>
      %196 = arith.index_cast %178 : i32 to index
      %c0_101 = arith.constant 0 : index
      %197 = vector.load %arg20[%196, %c0_101] : memref<128x256xf32, #tpu.memory_space<vmem>>, vector<1x256xf32>
      tpu.vector_store %arg20[%196, %c0_101], %190 {strides = array<i32>} : memref<128x256xf32, #tpu.memory_space<vmem>>, vector<1x256xf32>,
      %c1_i32_102 = arith.constant 1 : i32
      %198 = arith.addi %178, %c1_i32_102 : i32
      %199 = arith.index_cast %198 : i32 to index
      %c0_103 = arith.constant 0 : index
      %200 = vector.load %arg20[%199, %c0_103] : memref<128x256xf32, #tpu.memory_space<vmem>>, vector<1x256xf32>
      tpu.vector_store %arg20[%199, %c0_103], %195 {strides = array<i32>} : memref<128x256xf32, #tpu.memory_space<vmem>>, vector<1x256xf32>,
      scf.yield %195 : vector<1x256xf32>
    }
    %c16_i32_47 = arith.constant 16 : i32
    %c0_48 = arith.constant 0 : index
    %c0_49 = arith.constant 0 : index
    %84 = vector.load %arg17[%c0_48, %c0_49] : memref<1x256xf32, #tpu.memory_space<vmem>>, vector<1x256xf32>
    tpu.vector_store %arg17[%c0_48, %c0_49], %83 {strides = array<i32>} : memref<1x256xf32, #tpu.memory_space<vmem>>, vector<1x256xf32>,
    %c0_50 = arith.constant 0 : index
    %c0_51 = arith.constant 0 : index
    %85 = vector.load %arg12[%c0_50, %c0_51] : memref<16x256xf32, #tpu.memory_space<vmem>>, vector<16x256xf32>
    %cst_52 = arith.constant dense<0.000000e+00> : vector<128x256xf32>
    %86 = tpu.matmul %69, %85, %cst_52 {dimension_numbers = #tpu.dot_dimension_numbers<[1], [0], [0], [1], [0, 0, 1, 1], [], []>} : vector<128x16xf32>, vector<16x256xf32>, vector<128x256xf32> -> vector<128x256xf32>
    %c0_53 = arith.constant 0 : index
    %c0_54 = arith.constant 0 : index
    %87 = vector.load %arg20[%c0_53, %c0_54] : memref<128x256xf32, #tpu.memory_space<vmem>>, vector<128x256xf32>
    %88 = arith.mulf %87, %86 : vector<128x256xf32>
    %c0_55 = arith.constant 0 : index
    %c0_56 = arith.constant 0 : index
    %89 = vector.load %arg13[%c0_55, %c0_56] : memref<256x16xf32, #tpu.memory_space<vmem>>, vector<256x16xf32>
    %cst_57 = arith.constant dense<0.000000e+00> : vector<128x16xf32>
    %90 = tpu.matmul %88, %89, %cst_57 {dimension_numbers = #tpu.dot_dimension_numbers<[1], [0], [0], [1], [0, 0, 1, 1], [], []>} : vector<128x256xf32>, vector<256x16xf32>, vector<128x16xf32> -> vector<128x16xf32>
    %c0_58 = arith.constant 0 : index
    %c0_59 = arith.constant 0 : index
    %91 = vector.load %arg14[%c0_58, %c0_59] : memref<1x16xf32, #tpu.memory_space<vmem>>, vector<1x16xf32>
    %92 = vector.broadcast %91 : vector<1x16xf32> to vector<128x16xf32>
    %93 = arith.mulf %47, %92 : vector<128x16xf32>
    %94 = arith.addf %90, %93 : vector<128x16xf32>
    %cst_60 = arith.constant 0.000000e+00 : f32
    %95 = vector.broadcast %cst_60 : f32 to vector<128x16xf32>
    %96 = arith.subf %95, %8 : vector<128x16xf32>
    %97 = math.exp %96 : vector<128x16xf32>
    %cst_61 = arith.constant 1.000000e+00 : f32
    %98 = vector.broadcast %cst_61 : f32 to vector<128x16xf32>
    %99 = arith.addf %98, %97 : vector<128x16xf32>
    %100 = tpu.reciprocal %99 {approx = true} : vector<128x16xf32> -> vector<128x16xf32>
    %101 = arith.mulf %8, %100 : vector<128x16xf32>
    %102 = arith.mulf %94, %101 : vector<128x16xf32>
    %103 = arith.truncf %102 : vector<128x16xf32> to vector<128x16xbf16>
    %c0_62 = arith.constant 0 : index
    %c0_63 = arith.constant 0 : index
    %104 = vector.load %arg15[%c0_62, %c0_63] : memref<16x8xbf16, #tpu.memory_space<vmem>>, vector<16x8xbf16>
    %cst_64 = arith.constant dense<0.000000e+00> : vector<128x8xf32>
    %105 = tpu.matmul %103, %104, %cst_64 {dimension_numbers = #tpu.dot_dimension_numbers<[1], [0], [0], [1], [0, 0, 1, 1], [], []>} : vector<128x16xbf16>, vector<16x8xbf16>, vector<128x8xf32> -> vector<128x8xf32>
    %c0_65 = arith.constant 0 : index
    %c0_66 = arith.constant 0 : index
    %106 = vector.load %arg16[%c0_65, %c0_66] : memref<128x8xf32, #tpu.memory_space<vmem>>, vector<128x8xf32>
    tpu.vector_store %arg16[%c0_65, %c0_66], %105 {strides = array<i32>} : memref<128x8xf32, #tpu.memory_space<vmem>>, vector<128x8xf32>,
    return
  }
  func.func @transform_0(%arg0: i32) -> (i32, i32) {
    %c0_i32 = arith.constant 0 : i32
    %c0_i32_0 = arith.constant 0 : i32
    return %arg0, %c0_i32 : i32, i32
  }
  func.func @transform_1(%arg0: i32) -> (i32, i32) {
    %c0_i32 = arith.constant 0 : i32
    %c0_i32_0 = arith.constant 0 : i32
    %c0_i32_1 = arith.constant 0 : i32
    return %c0_i32, %c0_i32_0 : i32, i32
  }
  func.func @transform_2(%arg0: i32) -> (i32, i32) {
    %c0_i32 = arith.constant 0 : i32
    %c0_i32_0 = arith.constant 0 : i32
    %c0_i32_1 = arith.constant 0 : i32
    return %c0_i32, %c0_i32_0 : i32, i32
  }
  func.func @transform_3(%arg0: i32) -> (i32, i32) {
    %c0_i32 = arith.constant 0 : i32
    %c0_i32_0 = arith.constant 0 : i32
    %c0_i32_1 = arith.constant 0 : i32
    return %c0_i32, %c0_i32_0 : i32, i32
  }
  func.func @transform_4(%arg0: i32) -> (i32, i32) {
    %c0_i32 = arith.constant 0 : i32
    %c0_i32_0 = arith.constant 0 : i32
    %c0_i32_1 = arith.constant 0 : i32
    return %c0_i32, %c0_i32_0 : i32, i32
  }
  func.func @transform_5(%arg0: i32) -> (i32, i32) {
    %c0_i32 = arith.constant 0 : i32
    %c0_i32_0 = arith.constant 0 : i32
    %c0_i32_1 = arith.constant 0 : i32
    return %c0_i32, %c0_i32_0 : i32, i32
  }
  func.func @transform_6(%arg0: i32) -> (i32, i32) {
    %c0_i32 = arith.constant 0 : i32
    %c0_i32_0 = arith.constant 0 : i32
    %c0_i32_1 = arith.constant 0 : i32
    return %c0_i32, %c0_i32_0 : i32, i32
  }
  func.func @transform_7(%arg0: i32) -> (i32, i32) {
    %c0_i32 = arith.constant 0 : i32
    %c0_i32_0 = arith.constant 0 : i32
    %c0_i32_1 = arith.constant 0 : i32
    return %c0_i32, %c0_i32_0 : i32, i32
  }
  func.func @transform_8(%arg0: i32) -> (i32, i32) {
    %c0_i32 = arith.constant 0 : i32
    %c0_i32_0 = arith.constant 0 : i32
    %c0_i32_1 = arith.constant 0 : i32
    return %c0_i32, %c0_i32_0 : i32, i32
  }
  func.func @transform_9(%arg0: i32) -> (i32, i32) {
    %c0_i32 = arith.constant 0 : i32
    %c0_i32_0 = arith.constant 0 : i32
    %c0_i32_1 = arith.constant 0 : i32
    return %c0_i32, %c0_i32_0 : i32, i32
  }
  func.func @transform_10(%arg0: i32) -> (i32, i32) {
    %c0_i32 = arith.constant 0 : i32
    %c0_i32_0 = arith.constant 0 : i32
    %c0_i32_1 = arith.constant 0 : i32
    return %c0_i32, %c0_i32_0 : i32, i32
  }
  func.func @transform_11(%arg0: i32) -> (i32, i32) {
    %c0_i32 = arith.constant 0 : i32
    %c0_i32_0 = arith.constant 0 : i32
    %c0_i32_1 = arith.constant 0 : i32
    return %c0_i32, %c0_i32_0 : i32, i32
  }
  func.func @transform_12(%arg0: i32) -> (i32, i32) {
    %c0_i32 = arith.constant 0 : i32
    %c0_i32_0 = arith.constant 0 : i32
    %c0_i32_1 = arith.constant 0 : i32
    return %c0_i32, %c0_i32_0 : i32, i32
  }
  func.func @transform_13(%arg0: i32) -> (i32, i32) {
    %c0_i32 = arith.constant 0 : i32
    %c0_i32_0 = arith.constant 0 : i32
    %c0_i32_1 = arith.constant 0 : i32
    return %c0_i32, %c0_i32_0 : i32, i32
  }
  func.func @transform_14(%arg0: i32) -> (i32, i32) {
    %c0_i32 = arith.constant 0 : i32
    %c0_i32_0 = arith.constant 0 : i32
    %c0_i32_1 = arith.constant 0 : i32
    return %c0_i32, %c0_i32_0 : i32, i32
  }
  func.func @transform_15(%arg0: i32) -> (i32, i32) {
    %c0_i32 = arith.constant 0 : i32
    %c0_i32_0 = arith.constant 0 : i32
    return %arg0, %c0_i32 : i32, i32
  }
}

</mosaic_0001>

<llo_original>
// kernel: tpu_custom_call.1
$region0: #{tpu_custom_call.1}
  #allocation0 [shape = 'u32[]', space=smem, size = 0x4, offset = 0x4, fixed_abs, tag = 'smem constant byte address 0x4 - core index']
  #allocation1 [shape = 'u32[144,128]{1,0:T(1,128)}', space=vmem, size = 0x12000, scoped, tag = 'internal scratch']
  #allocation2 [shape = 'f32[1,256]{1,0:T(1,128)}', space=vmem, size = 0x400, scoped, tag = 'scratch operand']
  #allocation3 [shape = 'f32[3,16]{1,0:T(4,128)}', space=vmem, size = 0x800, scoped, tag = 'scratch operand']
  #allocation4 [shape = 'f32[128,256]{1,0:T(8,128)}', space=vmem, size = 0x20000, scoped, tag = 'scratch operand']
  #allocation5 [shape = 'f32[128,256]{1,0:T(8,128)}', space=vmem, size = 0x20000, scoped, tag = 'scratch operand']
  %s0 = inlined_call_operand.vmem [shape: f32[128,8], index: 0, kind: input, shape index: {}]
  %s1 = inlined_call_operand.vmem [shape: bf16[8,16], index: 1, kind: input, shape index: {}]
  %s2 = inlined_call_operand.vmem [shape: bf16[8,16], index: 2, kind: input, shape index: {}]
  %s3 = inlined_call_operand.vmem [shape: f32[4,16], index: 3, kind: input, shape index: {}]
  %s4 = inlined_call_operand.vmem [shape: f32[1,16], index: 4, kind: input, shape index: {}]
  %s5 = inlined_call_operand.vmem [shape: bf16[16,16], index: 5, kind: input, shape index: {}]
  %s6 = inlined_call_operand.vmem [shape: f32[1,16], index: 6, kind: input, shape index: {}]
  %s7 = inlined_call_operand.vmem [shape: bf16[16,16], index: 7, kind: input, shape index: {}]
  %s8 = inlined_call_operand.vmem [shape: bf16[16,16], index: 8, kind: input, shape index: {}]
  %s9 = inlined_call_operand.vmem [shape: f32[16,256], index: 9, kind: input, shape index: {}]
  %s10 = inlined_call_operand.vmem [shape: f32[16,256], index: 10, kind: input, shape index: {}]
  %s11 = inlined_call_operand.vmem [shape: f32[16,256], index: 11, kind: input, shape index: {}]
  %s12 = inlined_call_operand.vmem [shape: f32[256,16], index: 12, kind: input, shape index: {}]
  %s13 = inlined_call_operand.vmem [shape: f32[1,16], index: 13, kind: input, shape index: {}]
  %s14 = inlined_call_operand.vmem [shape: bf16[16,8], index: 14, kind: input, shape index: {}]
  %s15 = inlined_call_operand.vmem [shape: f32[128,8], index: 15, kind: output, shape index: {}]
  %s16 = sld [smem:[#allocation0]]
  $region81: #{tpu_custom_call.1} parent=0
    _
  %s18 = ssub.s32 1, %s16
  %s19 = scalar_select 0, %s18, %s16
  // Predicated region
  $region2: #{tpu_custom_call.1} parent=0 // pred_check
    _
  $region3: #{tpu_custom_call.1} parent=0 // pred_check_branch
    %21 = sbr.rel (0) target = $region5
  $region4: #{tpu_custom_call.1} parent=0 // pred_region
    _
  $region5: #{tpu_custom_call.1} parent=0 // pred_fallthru
    _
  // Predicated region
  $region6: #{tpu_custom_call.1} parent=0 // pred_check
    _
  $region7: #{tpu_custom_call.1} parent=0 // pred_check_branch
    %23 = sbr.rel (0) target = $region9
  $region8: #{tpu_custom_call.1} parent=0 // pred_region
    _
  $region9: #{tpu_custom_call.1} parent=0 // pred_fallthru
    _
  // Predicated region
  $region10: #{tpu_custom_call.1} parent=0 // pred_check
    _
  $region11: #{tpu_custom_call.1} parent=0 // pred_check_branch
    %25 = sbr.rel (0) target = $region13
  $region12: #{tpu_custom_call.1} parent=0 // pred_region
    _
  $region13: #{tpu_custom_call.1} parent=0 // pred_fallthru
    _
  // Predicated region
  $region14: #{tpu_custom_call.1} parent=0 // pred_check
    _
  $region15: #{tpu_custom_call.1} parent=0 // pred_check_branch
    %27 = sbr.rel (0) target = $region17
  $region16: #{tpu_custom_call.1} parent=0 // pred_region
    _
  $region17: #{tpu_custom_call.1} parent=0 // pred_fallthru
    _
  // Predicated region
  $region18: #{tpu_custom_call.1} parent=0 // pred_check
    _
  $region19: #{tpu_custom_call.1} parent=0 // pred_check_branch
    %29 = sbr.rel (0) target = $region21
  $region20: #{tpu_custom_call.1} parent=0 // pred_region
    _
  $region21: #{tpu_custom_call.1} parent=0 // pred_fallthru
    _
  // Predicated region
  $region22: #{tpu_custom_call.1} parent=0 // pred_check
    _
  $region23: #{tpu_custom_call.1} parent=0 // pred_check_branch
    %31 = sbr.rel (0) target = $region25
  $region24: #{tpu_custom_call.1} parent=0 // pred_region
    _
  $region25: #{tpu_custom_call.1} parent=0 // pred_fallthru
    _
  // Predicated region
  $region26: #{tpu_custom_call.1} parent=0 // pred_check
    _
  $region27: #{tpu_custom_call.1} parent=0 // pred_check_branch
    %33 = sbr.rel (0) target = $region29
  $region28: #{tpu_custom_call.1} parent=0 // pred_region
    _
  $region29: #{tpu_custom_call.1} parent=0 // pred_fallthru
    _
  // Predicated region
  $region30: #{tpu_custom_call.1} parent=0 // pred_check
    _
  $region31: #{tpu_custom_call.1} parent=0 // pred_check_branch
    %35 = sbr.rel (0) target = $region33
  $region32: #{tpu_custom_call.1} parent=0 // pred_region
    _
  $region33: #{tpu_custom_call.1} parent=0 // pred_fallthru
    _
  // Predicated region
  $region34: #{tpu_custom_call.1} parent=0 // pred_check
    _
  $region35: #{tpu_custom_call.1} parent=0 // pred_check_branch
    %37 = sbr.rel (0) target = $region37
  $region36: #{tpu_custom_call.1} parent=0 // pred_region
    _
  $region37: #{tpu_custom_call.1} parent=0 // pred_fallthru
    _
  // Predicated region
  $region38: #{tpu_custom_call.1} parent=0 // pred_check
    _
  $region39: #{tpu_custom_call.1} parent=0 // pred_check_branch
    %39 = sbr.rel (0) target = $region41
  $region40: #{tpu_custom_call.1} parent=0 // pred_region
    _
  $region41: #{tpu_custom_call.1} parent=0 // pred_fallthru
    _
  // Predicated region
  $region42: #{tpu_custom_call.1} parent=0 // pred_check
    _
  $region43: #{tpu_custom_call.1} parent=0 // pred_check_branch
    %41 = sbr.rel (0) target = $region45
  $region44: #{tpu_custom_call.1} parent=0 // pred_region
    _
  $region45: #{tpu_custom_call.1} parent=0 // pred_fallthru
    _
  // Predicated region
  $region46: #{tpu_custom_call.1} parent=0 // pred_check
    _
  $region47: #{tpu_custom_call.1} parent=0 // pred_check_branch
    %43 = sbr.rel (0) target = $region49
  $region48: #{tpu_custom_call.1} parent=0 // pred_region
    _
  $region49: #{tpu_custom_call.1} parent=0 // pred_fallthru
    _
  // Predicated region
  $region50: #{tpu_custom_call.1} parent=0 // pred_check
    _
  $region51: #{tpu_custom_call.1} parent=0 // pred_check_branch
    %45 = sbr.rel (0) target = $region53
  $region52: #{tpu_custom_call.1} parent=0 // pred_region
    _
  $region53: #{tpu_custom_call.1} parent=0 // pred_fallthru
    _
  // Predicated region
  $region54: #{tpu_custom_call.1} parent=0 // pred_check
    _
  $region55: #{tpu_custom_call.1} parent=0 // pred_check_branch
    %47 = sbr.rel (0) target = $region57
  $region56: #{tpu_custom_call.1} parent=0 // pred_region
    _
  $region57: #{tpu_custom_call.1} parent=0 // pred_fallthru
    _
  // Predicated region
  $region58: #{tpu_custom_call.1} parent=0 // pred_check
    _
  $region59: #{tpu_custom_call.1} parent=0 // pred_check_branch
    %49 = sbr.rel (0) target = $region61
  $region60: #{tpu_custom_call.1} parent=0 // pred_region
    _
  $region61: #{tpu_custom_call.1} parent=0 // pred_fallthru
    _
  %p51 = scmp.eq.s32.totalorder 0, 0
  // Predicated region
  $region62: #{tpu_custom_call.1} parent=0 // pred_check
    %p52 = pneg %p51
  $region63: #{tpu_custom_call.1} parent=0 // pred_check_branch
    %54 = sbr.rel (%p52) target = $region65
  $region64: #{tpu_custom_call.1} parent=0 // pred_region
    %v55 = vlaneseq
    %vm56 = vcmp.ge.s32.totalorder %v55, 0
    %vm57 = vcmp.lt.s32.totalorder %v55, 256
    %vm58 = vmand %vm56, %vm57
    %59 = vst.msk [vmem:[#allocation2] sm:$0x3] %vm58, 0.0
    %vm60 = vcmask 124928
    %61 = vst.msk [vmem:[#allocation3] sm:$0x7] %vm60, 0.0
  $region65: #{tpu_custom_call.1} parent=0 // pred_fallthru
    _
  %v62 = vld [vmem:[%s0] sm:$0xff]
  %v63 = vld [vmem:[%s0 + $0x8] sm:$0xff]
  %v64 = vld [vmem:[%s0 + $0x10] sm:$0xff]
  %v65 = vld [vmem:[%s0 + $0x18] sm:$0xff]
  %v66 = vld [vmem:[%s0 + $0x20] sm:$0xff]
  %v67 = vld [vmem:[%s0 + $0x28] sm:$0xff]
  %v68 = vld [vmem:[%s0 + $0x30] sm:$0xff]
  %v69 = vld [vmem:[%s0 + $0x38] sm:$0xff]
  %v70 = vld [vmem:[%s0 + $0x40] sm:$0xff]
  %v71 = vld [vmem:[%s0 + $0x48] sm:$0xff]
  %v72 = vld [vmem:[%s0 + $0x50] sm:$0xff]
  %v73 = vld [vmem:[%s0 + $0x58] sm:$0xff]
  %v74 = vld [vmem:[%s0 + $0x60] sm:$0xff]
  %v75 = vld [vmem:[%s0 + $0x68] sm:$0xff]
  %v76 = vld [vmem:[%s0 + $0x70] sm:$0xff]
  %v77 = vld [vmem:[%s0 + $0x78] sm:$0xff]
  %v78 = vpack.c.bf16 %v63, %v62
  %v79 = vpack.c.bf16 %v65, %v64
  %v80 = vpack.c.bf16 %v67, %v66
  %v81 = vpack.c.bf16 %v69, %v68
  %v82 = vpack.c.bf16 %v71, %v70
  %v83 = vpack.c.bf16 %v73, %v72
  %v84 = vpack.c.bf16 %v75, %v74
  %v85 = vpack.c.bf16 %v77, %v76
  %v86 = vld [vmem:[%s1] sm:$0xf]
  %vm87 = vcmask 64512
  %v89 = vsel %vm87, %v78, 0
  %v92 = vsel %vm87, %v79, 0
  %v95 = vsel %vm87, %v80, 0
  %v98 = vsel %vm87, %v81, 0
  %v101 = vsel %vm87, %v82, 0
  %v104 = vsel %vm87, %v83, 0
  %v107 = vsel %vm87, %v84, 0
  %v110 = vsel %vm87, %v85, 0
  %vm112 = vcmask 1043456
  %v114 = vsel %vm112, %v86, 0
  %116 = vmatprep.subr.bf16.mxu0 0
  %117 = vmatpush1.bf16.msra.mxu0 %v114
  %118 = vmatprep.subr.bf16.mxu0 0
  %119 = vmatpush1.bf16.msra.mxu0 0
  %120 = vmatprep.subr.bf16.mxu0 0
  %121 = vmatpush1.bf16.msra.mxu0 0
  %122 = vmatprep.subr.bf16.mxu0 0
  %123 = vmatpush1.bf16.msra.mxu0 0
  %124 = vmatprep.subr.bf16.mxu0 0
  %125 = vmatpush1.bf16.msra.mxu0 0
  %126 = vmatprep.subr.bf16.mxu0 0
  %127 = vmatpush1.bf16.msra.mxu0 0
  %128 = vmatprep.subr.bf16.mxu0 0
  %129 = vmatpush1.bf16.msra.mxu0 0
  %130 = vmatprep.subr.bf16.mxu0 0
  %131 = vmatpush1.bf16.msra.mxu0 0
  %132 = vmatprep.subr.bf16.mxu0 0
  %133 = vmatpush1.bf16.msra.mxu0 0
  %134 = vmatprep.subr.bf16.mxu0 0
  %135 = vmatpush1.bf16.msra.mxu0 0
  %136 = vmatprep.subr.bf16.mxu0 0
  %137 = vmatpush1.bf16.msra.mxu0 0
  %138 = vmatprep.subr.bf16.mxu0 0
  %139 = vmatpush1.bf16.msra.mxu0 0
  %140 = vmatprep.subr.bf16.mxu0 0
  %141 = vmatpush1.bf16.msra.mxu0 0
  %142 = vmatprep.subr.bf16.mxu0 0
  %143 = vmatpush1.bf16.msra.mxu0 0
  %144 = vmatprep.subr.bf16.mxu0 0
  %145 = vmatpush1.bf16.msra.mxu0 0
  %146 = vmatprep.subr.bf16.mxu0 0
  %147 = vmatpush1.bf16.msra.mxu0 0
  %148 = vmatprep.mubr.bf16.mxu0 0
  %149 = vmatmul.mubr.bf16.gmra.mrb[0].mxu0 %v89
  %v150 = vpop.f32.mrb[0].mxu0
  %v151 = vadd.f32 0.0, %v150
  %v152 = vpop.f32.mrb[0].mxu0
  %v153 = vpop.f32.mrb[0].mxu0
  %v154 = vadd.f32 0.0, %v153
  %v155 = vpop.f32.mrb[0].mxu0
  %156 = vmatprep.mubr.bf16.mxu0 0
  %157 = vmatmul.mubr.bf16.gmra.mrb[0].mxu0 %v92
  %v158 = vpop.f32.mrb[0].mxu0
  %v159 = vadd.f32 0.0, %v158
  %v160 = vpop.f32.mrb[0].mxu0
  %v161 = vpop.f32.mrb[0].mxu0
  %v162 = vadd.f32 0.0, %v161
  %v163 = vpop.f32.mrb[0].mxu0
  %164 = vmatprep.mubr.bf16.mxu0 0
  %165 = vmatmul.mubr.bf16.gmra.mrb[0].mxu0 %v95
  %v166 = vpop.f32.mrb[0].mxu0
  %v167 = vadd.f32 0.0, %v166
  %v168 = vpop.f32.mrb[0].mxu0
  %v169 = vpop.f32.mrb[0].mxu0
  %v170 = vadd.f32 0.0, %v169
  %v171 = vpop.f32.mrb[0].mxu0
  %172 = vmatprep.mubr.bf16.mxu0 0
  %173 = vmatmul.mubr.bf16.gmra.mrb[0].mxu0 %v98
  %v174 = vpop.f32.mrb[0].mxu0
  %v175 = vadd.f32 0.0, %v174
  %v176 = vpop.f32.mrb[0].mxu0
  %v177 = vpop.f32.mrb[0].mxu0
  %v178 = vadd.f32 0.0, %v177
  %v179 = vpop.f32.mrb[0].mxu0
  %180 = vmatprep.mubr.bf16.mxu0 0
  %181 = vmatmul.mubr.bf16.gmra.mrb[0].mxu0 %v101
  %v182 = vpop.f32.mrb[0].mxu0
  %v183 = vadd.f32 0.0, %v182
  %v184 = vpop.f32.mrb[0].mxu0
  %v185 = vpop.f32.mrb[0].mxu0
  %v186 = vadd.f32 0.0, %v185
  %v187 = vpop.f32.mrb[0].mxu0
  %188 = vmatprep.mubr.bf16.mxu0 0
  %189 = vmatmul.mubr.bf16.gmra.mrb[0].mxu0 %v104
  %v190 = vpop.f32.mrb[0].mxu0
  %v191 = vadd.f32 0.0, %v190
  %v192 = vpop.f32.mrb[0].mxu0
  %v193 = vpop.f32.mrb[0].mxu0
  %v194 = vadd.f32 0.0, %v193
  %v195 = vpop.f32.mrb[0].mxu0
  %196 = vmatprep.mubr.bf16.mxu0 0
  %197 = vmatmul.mubr.bf16.gmra.mrb[0].mxu0 %v107
  %v198 = vpop.f32.mrb[0].mxu0
  %v199 = vadd.f32 0.0, %v198
  %v200 = vpop.f32.mrb[0].mxu0
  %v201 = vpop.f32.mrb[0].mxu0
  %v202 = vadd.f32 0.0, %v201
  %v203 = vpop.f32.mrb[0].mxu0
  %204 = vmatprep.mubr.bf16.mxu0 0
  %205 = vmatmul.mubr.bf16.gmra.mrb[0].mxu0 %v110
  %v206 = vpop.f32.mrb[0].mxu0
  %v207 = vadd.f32 0.0, %v206
  %v208 = vpop.f32.mrb[0].mxu0
  %v209 = vpop.f32.mrb[0].mxu0
  %v210 = vadd.f32 0.0, %v209
  %v211 = vpop.f32.mrb[0].mxu0
  %212 = vdwg.mxu0
  %v213 = vld [vmem:[%s2] sm:$0xf]
  %v215 = vsel %vm112, %v213, 0
  %217 = vmatprep.subr.bf16.mxu0 0
  %218 = vmatpush1.bf16.msra.mxu0 %v215
  %219 = vmatprep.subr.bf16.mxu0 0
  %220 = vmatpush1.bf16.msra.mxu0 0
  %221 = vmatprep.subr.bf16.mxu0 0
  %222 = vmatpush1.bf16.msra.mxu0 0
  %223 = vmatprep.subr.bf16.mxu0 0
  %224 = vmatpush1.bf16.msra.mxu0 0
  %225 = vmatprep.subr.bf16.mxu0 0
  %226 = vmatpush1.bf16.msra.mxu0 0
  %227 = vmatprep.subr.bf16.mxu0 0
  %228 = vmatpush1.bf16.msra.mxu0 0
  %229 = vmatprep.subr.bf16.mxu0 0
  %230 = vmatpush1.bf16.msra.mxu0 0
  %231 = vmatprep.subr.bf16.mxu0 0
  %232 = vmatpush1.bf16.msra.mxu0 0
  %233 = vmatprep.subr.bf16.mxu0 0
  %234 = vmatpush1.bf16.msra.mxu0 0
  %235 = vmatprep.subr.bf16.mxu0 0
  %236 = vmatpush1.bf16.msra.mxu0 0
  %237 = vmatprep.subr.bf16.mxu0 0
  %238 = vmatpush1.bf16.msra.mxu0 0
  %239 = vmatprep.subr.bf16.mxu0 0
  %240 = vmatpush1.bf16.msra.mxu0 0
  %241 = vmatprep.subr.bf16.mxu0 0
  %242 = vmatpush1.bf16.msra.mxu0 0
  %243 = vmatprep.subr.bf16.mxu0 0
  %244 = vmatpush1.bf16.msra.mxu0 0
  %245 = vmatprep.subr.bf16.mxu0 0
  %246 = vmatpush1.bf16.msra.mxu0 0
  %247 = vmatprep.subr.bf16.mxu0 0
  %248 = vmatpush1.bf16.msra.mxu0 0
  %249 = vmatprep.mubr.bf16.mxu0 0
  %250 = vmatmul.mubr.bf16.gmra.mrb[0].mxu0 %v89
  %v251 = vpop.f32.mrb[0].mxu0
  %v252 = vadd.f32 0.0, %v251
  %v253 = vpop.f32.mrb[0].mxu0
  %v254 = vpop.f32.mrb[0].mxu0
  %v255 = vadd.f32 0.0, %v254
  %v256 = vpop.f32.mrb[0].mxu0
  %257 = vmatprep.mubr.bf16.mxu0 0
  %258 = vmatmul.mubr.bf16.gmra.mrb[0].mxu0 %v92
  %v259 = vpop.f32.mrb[0].mxu0
  %v260 = vadd.f32 0.0, %v259
  %v261 = vpop.f32.mrb[0].mxu0
  %v262 = vpop.f32.mrb[0].mxu0
  %v263 = vadd.f32 0.0, %v262
  %v264 = vpop.f32.mrb[0].mxu0
  %265 = vmatprep.mubr.bf16.mxu0 0
  %266 = vmatmul.mubr.bf16.gmra.mrb[0].mxu0 %v95
  %v267 = vpop.f32.mrb[0].mxu0
  %v268 = vadd.f32 0.0, %v267
  %v269 = vpop.f32.mrb[0].mxu0
  %v270 = vpop.f32.mrb[0].mxu0
  %v271 = vadd.f32 0.0, %v270
  %v272 = vpop.f32.mrb[0].mxu0
  %273 = vmatprep.mubr.bf16.mxu0 0
  %274 = vmatmul.mubr.bf16.gmra.mrb[0].mxu0 %v98
  %v275 = vpop.f32.mrb[0].mxu0
  %v276 = vadd.f32 0.0, %v275
  %v277 = vpop.f32.mrb[0].mxu0
  %v278 = vpop.f32.mrb[0].mxu0
  %v279 = vadd.f32 0.0, %v278
  %v280 = vpop.f32.mrb[0].mxu0
  %281 = vmatprep.mubr.bf16.mxu0 0
  %282 = vmatmul.mubr.bf16.gmra.mrb[0].mxu0 %v101
  %v283 = vpop.f32.mrb[0].mxu0
  %v284 = vadd.f32 0.0, %v283
  %v285 = vpop.f32.mrb[0].mxu0
  %v286 = vpop.f32.mrb[0].mxu0
  %v287 = vadd.f32 0.0, %v286
  %v288 = vpop.f32.mrb[0].mxu0
  %289 = vmatprep.mubr.bf16.mxu0 0
  %290 = vmatmul.mubr.bf16.gmra.mrb[0].mxu0 %v104
  %v291 = vpop.f32.mrb[0].mxu0
  %v292 = vadd.f32 0.0, %v291
  %v293 = vpop.f32.mrb[0].mxu0
  %v294 = vpop.f32.mrb[0].mxu0
  %v295 = vadd.f32 0.0, %v294
  %v296 = vpop.f32.mrb[0].mxu0
  %297 = vmatprep.mubr.bf16.mxu0 0
  %298 = vmatmul.mubr.bf16.gmra.mrb[0].mxu0 %v107
  %v299 = vpop.f32.mrb[0].mxu0
  %v300 = vadd.f32 0.0, %v299
  %v301 = vpop.f32.mrb[0].mxu0
  %v302 = vpop.f32.mrb[0].mxu0
  %v303 = vadd.f32 0.0, %v302
  %v304 = vpop.f32.mrb[0].mxu0
  %305 = vmatprep.mubr.bf16.mxu0 0
  %306 = vmatmul.mubr.bf16.gmra.mrb[0].mxu0 %v110
  %v307 = vpop.f32.mrb[0].mxu0
  %v308 = vadd.f32 0.0, %v307
  %v309 = vpop.f32.mrb[0].mxu0
  %v310 = vpop.f32.mrb[0].mxu0
  %v311 = vadd.f32 0.0, %v310
  %v312 = vpop.f32.mrb[0].mxu0
  %313 = vdwg.mxu0
  %v314 = vld [vmem:[%s3] sm:$0xf]
  %v315 = vld [vmem:[#allocation3] sm:$0x7]
  %vm332 = vcmask 1042432
  %v333 = vrot.slane %v151, 5
  %v334 = vrot.slane %v154, 5
  %v335 = vsel %vm332, %v333, %v334
  %v336 = vrot.slane %v159, 5
  %v337 = vsel %vm332, %v334, %v336
  %v338 = vrot.slane %v162, 5
  %v339 = vsel %vm332, %v336, %v338
  %v340 = vrot.slane %v167, 5
  %v341 = vsel %vm332, %v338, %v340
  %v342 = vrot.slane %v170, 5
  %v343 = vsel %vm332, %v340, %v342
  %v344 = vrot.slane %v175, 5
  %v345 = vsel %vm332, %v342, %v344
  %v346 = vrot.slane %v178, 5
  %v347 = vsel %vm332, %v344, %v346
  %v348 = vrot.slane %v183, 5
  %v349 = vsel %vm332, %v346, %v348
  %v350 = vrot.slane %v186, 5
  %v351 = vsel %vm332, %v348, %v350
  %v352 = vrot.slane %v191, 5
  %v353 = vsel %vm332, %v350, %v352
  %v354 = vrot.slane %v194, 5
  %v355 = vsel %vm332, %v352, %v354
  %v356 = vrot.slane %v199, 5
  %v357 = vsel %vm332, %v354, %v356
  %v358 = vrot.slane %v202, 5
  %v359 = vsel %vm332, %v356, %v358
  %v360 = vrot.slane %v207, 5
  %v361 = vsel %vm332, %v358, %v360
  %v362 = vrot.slane %v210, 5
  %v363 = vsel %vm332, %v360, %v362
  %v381 = vsel %vm332, %v315, %v333
  %v382 = vlaneseq
  %v383 = vshrl.u32 %v382, 7
  %v384 = vsub.s32 3, %v383
  %v385 = vrot.slane %v314, %v384
  %v386 = vmul.f32 %v151, %v385
  %v387 = vmul.f32 %v154, %v385
  %v388 = vmul.f32 %v159, %v385
  %v389 = vmul.f32 %v162, %v385
  %v390 = vmul.f32 %v167, %v385
  %v391 = vmul.f32 %v170, %v385
  %v392 = vmul.f32 %v175, %v385
  %v393 = vmul.f32 %v178, %v385
  %v394 = vmul.f32 %v183, %v385
  %v395 = vmul.f32 %v186, %v385
  %v396 = vmul.f32 %v191, %v385
  %v397 = vmul.f32 %v194, %v385
  %v398 = vmul.f32 %v199, %v385
  %v399 = vmul.f32 %v202, %v385
  %v400 = vmul.f32 %v207, %v385
  %v401 = vmul.f32 %v210, %v385
  %v402 = vlaneseq
  %v403 = vshrl.u32 %v402, 7
  %v404 = vsub.s32 0, %v403
  %v405 = vrot.slane %v314, %v404
  %v406 = vmul.f32 %v381, %v405
  %v407 = vmul.f32 %v335, %v405
  %v408 = vmul.f32 %v337, %v405
  %v409 = vmul.f32 %v339, %v405
  %v410 = vmul.f32 %v341, %v405
  %v411 = vmul.f32 %v343, %v405
  %v412 = vmul.f32 %v345, %v405
  %v413 = vmul.f32 %v347, %v405
  %v414 = vmul.f32 %v349, %v405
  %v415 = vmul.f32 %v351, %v405
  %v416 = vmul.f32 %v353, %v405
  %v417 = vmul.f32 %v355, %v405
  %v418 = vmul.f32 %v357, %v405
  %v419 = vmul.f32 %v359, %v405
  %v420 = vmul.f32 %v361, %v405
  %v421 = vmul.f32 %v363, %v405
  %v422 = vadd.f32 %v386, %v406
  %v423 = vadd.f32 %v387, %v407
  %v424 = vadd.f32 %v388, %v408
  %v425 = vadd.f32 %v389, %v409
  %v426 = vadd.f32 %v390, %v410
  %v427 = vadd.f32 %v391, %v411
  %v428 = vadd.f32 %v392, %v412
  %v429 = vadd.f32 %v393, %v413
  %v430 = vadd.f32 %v394, %v414
  %v431 = vadd.f32 %v395, %v415
  %v432 = vadd.f32 %v396, %v416
  %v433 = vadd.f32 %v397, %v417
  %v434 = vadd.f32 %v398, %v418
  %v435 = vadd.f32 %v399, %v419
  %v436 = vadd.f32 %v400, %v420
  %v437 = vadd.f32 %v401, %v421
  %v438 = vlaneseq
  %v439 = vshrl.u32 %v438, 7
  %v440 = vsub.s32 1, %v439
  %v441 = vrot.slane %v314, %v440
  %v442 = vmul.f32 %v381, %v441
  %v443 = vmul.f32 %v335, %v441
  %v444 = vmul.f32 %v337, %v441
  %v445 = vmul.f32 %v339, %v441
  %v446 = vmul.f32 %v341, %v441
  %v447 = vmul.f32 %v343, %v441
  %v448 = vmul.f32 %v345, %v441
  %v449 = vmul.f32 %v347, %v441
  %v450 = vmul.f32 %v349, %v441
  %v451 = vmul.f32 %v351, %v441
  %v452 = vmul.f32 %v353, %v441
  %v453 = vmul.f32 %v355, %v441
  %v454 = vmul.f32 %v357, %v441
  %v455 = vmul.f32 %v359, %v441
  %v456 = vmul.f32 %v361, %v441
  %v457 = vmul.f32 %v363, %v441
  %v458 = vmul.f32 %v362, %v441
  %vm476 = vcmask 1046528
  %v477 = vrot.slane %v442, 1
  %v478 = vrot.slane %v443, 1
  %v479 = vsel %vm476, %v477, %v478
  %v480 = vrot.slane %v444, 1
  %v481 = vsel %vm476, %v478, %v480
  %v482 = vrot.slane %v445, 1
  %v483 = vsel %vm476, %v480, %v482
  %v484 = vrot.slane %v446, 1
  %v485 = vsel %vm476, %v482, %v484
  %v486 = vrot.slane %v447, 1
  %v487 = vsel %vm476, %v484, %v486
  %v488 = vrot.slane %v448, 1
  %v489 = vsel %vm476, %v486, %v488
  %v490 = vrot.slane %v449, 1
  %v491 = vsel %vm476, %v488, %v490
  %v492 = vrot.slane %v450, 1
  %v493 = vsel %vm476, %v490, %v492
  %v494 = vrot.slane %v451, 1
  %v495 = vsel %vm476, %v492, %v494
  %v496 = vrot.slane %v452, 1
  %v497 = vsel %vm476, %v494, %v496
  %v498 = vrot.slane %v453, 1
  %v499 = vsel %vm476, %v496, %v498
  %v500 = vrot.slane %v454, 1
  %v501 = vsel %vm476, %v498, %v500
  %v502 = vrot.slane %v455, 1
  %v503 = vsel %vm476, %v500, %v502
  %v504 = vrot.slane %v456, 1
  %v505 = vsel %vm476, %v502, %v504
  %v506 = vrot.slane %v457, 1
  %v507 = vsel %vm476, %v504, %v506
  %v508 = vrot.slane %v458, 1
  %v509 = vsel %vm476, %v506, %v508
  %v526 = vadd.f32 %v422, %v479
  %v527 = vadd.f32 %v423, %v481
  %v528 = vadd.f32 %v424, %v483
  %v529 = vadd.f32 %v425, %v485
  %v530 = vadd.f32 %v426, %v487
  %v531 = vadd.f32 %v427, %v489
  %v532 = vadd.f32 %v428, %v491
  %v533 = vadd.f32 %v429, %v493
  %v534 = vadd.f32 %v430, %v495
  %v535 = vadd.f32 %v431, %v497
  %v536 = vadd.f32 %v432, %v499
  %v537 = vadd.f32 %v433, %v501
  %v538 = vadd.f32 %v434, %v503
  %v539 = vadd.f32 %v435, %v505
  %v540 = vadd.f32 %v436, %v507
  %v541 = vadd.f32 %v437, %v509
  %v542 = vlaneseq
  %v543 = vshrl.u32 %v542, 7
  %v544 = vsub.s32 2, %v543
  %v545 = vrot.slane %v314, %v544
  %v546 = vmul.f32 %v381, %v545
  %v547 = vmul.f32 %v335, %v545
  %v548 = vmul.f32 %v337, %v545
  %v549 = vmul.f32 %v339, %v545
  %v550 = vmul.f32 %v341, %v545
  %v551 = vmul.f32 %v343, %v545
  %v552 = vmul.f32 %v345, %v545
  %v553 = vmul.f32 %v347, %v545
  %v554 = vmul.f32 %v349, %v545
  %v555 = vmul.f32 %v351, %v545
  %v556 = vmul.f32 %v353, %v545
  %v557 = vmul.f32 %v355, %v545
  %v558 = vmul.f32 %v357, %v545
  %v559 = vmul.f32 %v359, %v545
  %v560 = vmul.f32 %v361, %v545
  %v561 = vmul.f32 %v363, %v545
  %v562 = vmul.f32 %v362, %v545
  %vm580 = vcmask 1045504
  %v581 = vrot.slane %v546, 2
  %v582 = vrot.slane %v547, 2
  %v583 = vsel %vm580, %v581, %v582
  %v584 = vrot.slane %v548, 2
  %v585 = vsel %vm580, %v582, %v584
  %v586 = vrot.slane %v549, 2
  %v587 = vsel %vm580, %v584, %v586
  %v588 = vrot.slane %v550, 2
  %v589 = vsel %vm580, %v586, %v588
  %v590 = vrot.slane %v551, 2
  %v591 = vsel %vm580, %v588, %v590
  %v592 = vrot.slane %v552, 2
  %v593 = vsel %vm580, %v590, %v592
  %v594 = vrot.slane %v553, 2
  %v595 = vsel %vm580, %v592, %v594
  %v596 = vrot.slane %v554, 2
  %v597 = vsel %vm580, %v594, %v596
  %v598 = vrot.slane %v555, 2
  %v599 = vsel %vm580, %v596, %v598
  %v600 = vrot.slane %v556, 2
  %v601 = vsel %vm580, %v598, %v600
  %v602 = vrot.slane %v557, 2
  %v603 = vsel %vm580, %v600, %v602
  %v604 = vrot.slane %v558, 2
  %v605 = vsel %vm580, %v602, %v604
  %v606 = vrot.slane %v559, 2
  %v607 = vsel %vm580, %v604, %v606
  %v608 = vrot.slane %v560, 2
  %v609 = vsel %vm580, %v606, %v608
  %v610 = vrot.slane %v561, 2
  %v611 = vsel %vm580, %v608, %v610
  %v612 = vrot.slane %v562, 2
  %v613 = vsel %vm580, %v610, %v612
  %v630 = vadd.f32 %v526, %v583
  %v631 = vadd.f32 %v527, %v585
  %v632 = vadd.f32 %v528, %v587
  %v633 = vadd.f32 %v529, %v589
  %v634 = vadd.f32 %v530, %v591
  %v635 = vadd.f32 %v531, %v593
  %v636 = vadd.f32 %v532, %v595
  %v637 = vadd.f32 %v533, %v597
  %v638 = vadd.f32 %v534, %v599
  %v639 = vadd.f32 %v535, %v601
  %v640 = vadd.f32 %v536, %v603
  %v641 = vadd.f32 %v537, %v605
  %v642 = vadd.f32 %v538, %v607
  %v643 = vadd.f32 %v539, %v609
  %v644 = vadd.f32 %v540, %v611
  %v645 = vadd.f32 %v541, %v613
  %v646 = vld [vmem:[%s4] sm:$0x1]
  %v648 = vlaneseq
  %v649 = vshrl.u32 %v648, 7
  %v650 = vsub.s32 0, %v649
  %v651 = vrot.slane %v646, %v650
  %v653 = vadd.f32 %v630, %v651
  %v654 = vadd.f32 %v631, %v651
  %v655 = vadd.f32 %v632, %v651
  %v656 = vadd.f32 %v633, %v651
  %v657 = vadd.f32 %v634, %v651
  %v658 = vadd.f32 %v635, %v651
  %v659 = vadd.f32 %v636, %v651
  %v660 = vadd.f32 %v637, %v651
  %v661 = vadd.f32 %v638, %v651
  %v662 = vadd.f32 %v639, %v651
  %v663 = vadd.f32 %v640, %v651
  %v664 = vadd.f32 %v641, %v651
  %v665 = vadd.f32 %v642, %v651
  %v666 = vadd.f32 %v643, %v651
  %v667 = vadd.f32 %v644, %v651
  %v668 = vadd.f32 %v645, %v651
  %v669 = vsub.f32 0.0, %v653
  %v670 = vsub.f32 0.0, %v654
  %v671 = vsub.f32 0.0, %v655
  %v672 = vsub.f32 0.0, %v656
  %v673 = vsub.f32 0.0, %v657
  %v674 = vsub.f32 0.0, %v658
  %v675 = vsub.f32 0.0, %v659
  %v676 = vsub.f32 0.0, %v660
  %v677 = vsub.f32 0.0, %v661
  %v678 = vsub.f32 0.0, %v662
  %v679 = vsub.f32 0.0, %v663
  %v680 = vsub.f32 0.0, %v664
  %v681 = vsub.f32 0.0, %v665
  %v682 = vsub.f32 0.0, %v666
  %v683 = vsub.f32 0.0, %v667
  %v684 = vsub.f32 0.0, %v668
  %v685 = vmul.f32 %v669, 1.442695
  %v686 = vpow.pop %v685
  %v687 = vmul.f32 %v670, 1.442695
  %v688 = vpow.pop %v687
  %v689 = vmul.f32 %v671, 1.442695
  %v690 = vpow.pop %v689
  %v691 = vmul.f32 %v672, 1.442695
  %v692 = vpow.pop %v691
  %v693 = vmul.f32 %v673, 1.442695
  %v694 = vpow.pop %v693
  %v695 = vmul.f32 %v674, 1.442695
  %v696 = vpow.pop %v695
  %v697 = vmul.f32 %v675, 1.442695
  %v698 = vpow.pop %v697
  %v699 = vmul.f32 %v676, 1.442695
  %v700 = vpow.pop %v699
  %v701 = vmul.f32 %v677, 1.442695
  %v702 = vpow.pop %v701
  %v703 = vmul.f32 %v678, 1.442695
  %v704 = vpow.pop %v703
  %v705 = vmul.f32 %v679, 1.442695
  %v706 = vpow.pop %v705
  %v707 = vmul.f32 %v680, 1.442695
  %v708 = vpow.pop %v707
  %v709 = vmul.f32 %v681, 1.442695
  %v710 = vpow.pop %v709
  %v711 = vmul.f32 %v682, 1.442695
  %v712 = vpow.pop %v711
  %v713 = vmul.f32 %v683, 1.442695
  %v714 = vpow.pop %v713
  %v715 = vmul.f32 %v684, 1.442695
  %v716 = vpow.pop %v715
  %v717 = vadd.f32 %v686, 1.0
  %v718 = vadd.f32 %v688, 1.0
  %v719 = vadd.f32 %v690, 1.0
  %v720 = vadd.f32 %v692, 1.0
  %v721 = vadd.f32 %v694, 1.0
  %v722 = vadd.f32 %v696, 1.0
  %v723 = vadd.f32 %v698, 1.0
  %v724 = vadd.f32 %v700, 1.0
  %v725 = vadd.f32 %v702, 1.0
  %v726 = vadd.f32 %v704, 1.0
  %v727 = vadd.f32 %v706, 1.0
  %v728 = vadd.f32 %v708, 1.0
  %v729 = vadd.f32 %v710, 1.0
  %v730 = vadd.f32 %v712, 1.0
  %v731 = vadd.f32 %v714, 1.0
  %v732 = vadd.f32 %v716, 1.0
  %v733 = vrcp.pop %v717
  %v734 = vrcp.pop %v718
  %v735 = vrcp.pop %v719
  %v736 = vrcp.pop %v720
  %v737 = vrcp.pop %v721
  %v738 = vrcp.pop %v722
  %v739 = vrcp.pop %v723
  %v740 = vrcp.pop %v724
  %v741 = vrcp.pop %v725
  %v742 = vrcp.pop %v726
  %v743 = vrcp.pop %v727
  %v744 = vrcp.pop %v728
  %v745 = vrcp.pop %v729
  %v746 = vrcp.pop %v730
  %v747 = vrcp.pop %v731
  %v748 = vrcp.pop %v732
  %v749 = vmul.f32 %v653, %v733
  %v750 = vmul.f32 %v654, %v734
  %v751 = vmul.f32 %v655, %v735
  %v752 = vmul.f32 %v656, %v736
  %v753 = vmul.f32 %v657, %v737
  %v754 = vmul.f32 %v658, %v738
  %v755 = vmul.f32 %v659, %v739
  %v756 = vmul.f32 %v660, %v740
  %v757 = vmul.f32 %v661, %v741
  %v758 = vmul.f32 %v662, %v742
  %v759 = vmul.f32 %v663, %v743
  %v760 = vmul.f32 %v664, %v744
  %v761 = vmul.f32 %v665, %v745
  %v762 = vmul.f32 %v666, %v746
  %v763 = vmul.f32 %v667, %v747
  %v764 = vmul.f32 %v668, %v748
  %vm765 = vcmask 130053
  %766 = vst.msk [vmem:[#allocation3 - $0x5] sm:$0xe0] %vm765, %v210
  %v767 = vpack.c.bf16 %v750, %v749
  %v768 = vpack.c.bf16 %v752, %v751
  %v769 = vpack.c.bf16 %v754, %v753
  %v770 = vpack.c.bf16 %v756, %v755
  %v771 = vpack.c.bf16 %v758, %v757
  %v772 = vpack.c.bf16 %v760, %v759
  %v773 = vpack.c.bf16 %v762, %v761
  %v774 = vpack.c.bf16 %v764, %v763
  %v775 = vld [vmem:[%s5] sm:$0xf]
  %v776 = vld [vmem:[%s5 + $0x4] sm:$0xf]
  %v777 = vld [vmem:[%s6] sm:$0x1]
  %v779 = vlaneseq
  %v780 = vshrl.u32 %v779, 7
  %v781 = vsub.s32 0, %v780
  %v782 = vrot.slane %v777, %v781
  %v786 = vunpack.c.l.b16 %v775
  %v787 = vunpack.c.l.b16 %v776
  %v788 = vpack.c.b16 %v787, %v786
  %vm790 = vcmask 130048
  %v792 = vsel %vm790, %v767, 0
  %v795 = vsel %vm790, %v768, 0
  %v798 = vsel %vm790, %v769, 0
  %v801 = vsel %vm790, %v770, 0
  %v804 = vsel %vm790, %v771, 0
  %v807 = vsel %vm790, %v772, 0
  %v810 = vsel %vm790, %v773, 0
  %v813 = vsel %vm790, %v774, 0
  %815 = vmatprep.subr.bf16.mxu0 0
  %816 = vmatpush1.bf16.msra.mxu0 %v788
  %817 = vmatprep.subr.bf16.mxu0 0
  %818 = vmatpush1.bf16.msra.mxu0 0
  %819 = vmatprep.subr.bf16.mxu0 0
  %820 = vmatpush1.bf16.msra.mxu0 0
  %821 = vmatprep.subr.bf16.mxu0 0
  %822 = vmatpush1.bf16.msra.mxu0 0
  %823 = vmatprep.subr.bf16.mxu0 0
  %824 = vmatpush1.bf16.msra.mxu0 0
  %825 = vmatprep.subr.bf16.mxu0 0
  %826 = vmatpush1.bf16.msra.mxu0 0
  %827 = vmatprep.subr.bf16.mxu0 0
  %828 = vmatpush1.bf16.msra.mxu0 0
  %829 = vmatprep.subr.bf16.mxu0 0
  %830 = vmatpush1.bf16.msra.mxu0 0
  %831 = vmatprep.subr.bf16.mxu0 0
  %832 = vmatpush1.bf16.msra.mxu0 0
  %833 = vmatprep.subr.bf16.mxu0 0
  %834 = vmatpush1.bf16.msra.mxu0 0
  %835 = vmatprep.subr.bf16.mxu0 0
  %836 = vmatpush1.bf16.msra.mxu0 0
  %837 = vmatprep.subr.bf16.mxu0 0
  %838 = vmatpush1.bf16.msra.mxu0 0
  %839 = vmatprep.subr.bf16.mxu0 0
  %840 = vmatpush1.bf16.msra.mxu0 0
  %841 = vmatprep.subr.bf16.mxu0 0
  %842 = vmatpush1.bf16.msra.mxu0 0
  %843 = vmatprep.subr.bf16.mxu0 0
  %844 = vmatpush1.bf16.msra.mxu0 0
  %845 = vmatprep.subr.bf16.mxu0 0
  %846 = vmatpush1.bf16.msra.mxu0 0
  %847 = vmatprep.mubr.bf16.mxu0 0
  %848 = vmatmul.mubr.bf16.gmra.mrb[0].mxu0 %v792
  %v849 = vpop.f32.mrb[0].mxu0
  %v850 = vadd.f32 %v782, %v849
  %v851 = vpop.f32.mrb[0].mxu0
  %v852 = vpop.f32.mrb[0].mxu0
  %v853 = vadd.f32 %v782, %v852
  %v854 = vpop.f32.mrb[0].mxu0
  %855 = vmatprep.mubr.bf16.mxu0 0
  %856 = vmatmul.mubr.bf16.gmra.mrb[0].mxu0 %v795
  %v857 = vpop.f32.mrb[0].mxu0
  %v858 = vadd.f32 %v782, %v857
  %v859 = vpop.f32.mrb[0].mxu0
  %v860 = vpop.f32.mrb[0].mxu0
  %v861 = vadd.f32 %v782, %v860
  %v862 = vpop.f32.mrb[0].mxu0
  %863 = vmatprep.mubr.bf16.mxu0 0
  %864 = vmatmul.mubr.bf16.gmra.mrb[0].mxu0 %v798
  %v865 = vpop.f32.mrb[0].mxu0
  %v866 = vadd.f32 %v782, %v865
  %v867 = vpop.f32.mrb[0].mxu0
  %v868 = vpop.f32.mrb[0].mxu0
  %v869 = vadd.f32 %v782, %v868
  %v870 = vpop.f32.mrb[0].mxu0
  %871 = vmatprep.mubr.bf16.mxu0 0
  %872 = vmatmul.mubr.bf16.gmra.mrb[0].mxu0 %v801
  %v873 = vpop.f32.mrb[0].mxu0
  %v874 = vadd.f32 %v782, %v873
  %v875 = vpop.f32.mrb[0].mxu0
  %v876 = vpop.f32.mrb[0].mxu0
  %v877 = vadd.f32 %v782, %v876
  %v878 = vpop.f32.mrb[0].mxu0
  %879 = vmatprep.mubr.bf16.mxu0 0
  %880 = vmatmul.mubr.bf16.gmra.mrb[0].mxu0 %v804
  %v881 = vpop.f32.mrb[0].mxu0
  %v882 = vadd.f32 %v782, %v881
  %v883 = vpop.f32.mrb[0].mxu0
  %v884 = vpop.f32.mrb[0].mxu0
  %v885 = vadd.f32 %v782, %v884
  %v886 = vpop.f32.mrb[0].mxu0
  %887 = vmatprep.mubr.bf16.mxu0 0
  %888 = vmatmul.mubr.bf16.gmra.mrb[0].mxu0 %v807
  %v889 = vpop.f32.mrb[0].mxu0
  %v890 = vadd.f32 %v782, %v889
  %v891 = vpop.f32.mrb[0].mxu0
  %v892 = vpop.f32.mrb[0].mxu0
  %v893 = vadd.f32 %v782, %v892
  %v894 = vpop.f32.mrb[0].mxu0
  %895 = vmatprep.mubr.bf16.mxu0 0
  %896 = vmatmul.mubr.bf16.gmra.mrb[0].mxu0 %v810
  %v897 = vpop.f32.mrb[0].mxu0
  %v898 = vadd.f32 %v782, %v897
  %v899 = vpop.f32.mrb[0].mxu0
  %v900 = vpop.f32.mrb[0].mxu0
  %v901 = vadd.f32 %v782, %v900
  %v902 = vpop.f32.mrb[0].mxu0
  %903 = vmatprep.mubr.bf16.mxu0 0
  %904 = vmatmul.mubr.bf16.gmra.mrb[0].mxu0 %v813
  %v905 = vpop.f32.mrb[0].mxu0
  %v906 = vadd.f32 %v782, %v905
  %v907 = vpop.f32.mrb[0].mxu0
  %v908 = vpop.f32.mrb[0].mxu0
  %v909 = vadd.f32 %v782, %v908
  %v910 = vpop.f32.mrb[0].mxu0
  %911 = vdwg.mxu0
  %v912 = vmax.f32 %v850, 0.0
  %v913 = vmax.f32 %v853, 0.0
  %v914 = vmax.f32 %v858, 0.0
  %v915 = vmax.f32 %v861, 0.0
  %v916 = vmax.f32 %v866, 0.0
  %v917 = vmax.f32 %v869, 0.0
  %v918 = vmax.f32 %v874, 0.0
  %v919 = vmax.f32 %v877, 0.0
  %v920 = vmax.f32 %v882, 0.0
  %v921 = vmax.f32 %v885, 0.0
  %v922 = vmax.f32 %v890, 0.0
  %v923 = vmax.f32 %v893, 0.0
  %v924 = vmax.f32 %v898, 0.0
  %v925 = vmax.f32 %v901, 0.0
  %v926 = vmax.f32 %v906, 0.0
  %v927 = vmax.f32 %v909, 0.0
  %v928 = vand.u32 2147483647, %v850
  %v929 = vand.u32 2147483647, %v853
  %v930 = vand.u32 2147483647, %v858
  %v931 = vand.u32 2147483647, %v861
  %v932 = vand.u32 2147483647, %v866
  %v933 = vand.u32 2147483647, %v869
  %v934 = vand.u32 2147483647, %v874
  %v935 = vand.u32 2147483647, %v877
  %v936 = vand.u32 2147483647, %v882
  %v937 = vand.u32 2147483647, %v885
  %v938 = vand.u32 2147483647, %v890
  %v939 = vand.u32 2147483647, %v893
  %v940 = vand.u32 2147483647, %v898
  %v941 = vand.u32 2147483647, %v901
  %v942 = vand.u32 2147483647, %v906
  %v943 = vand.u32 2147483647, %v909
  %v944 = vsub.f32 0.0, %v928
  %v945 = vsub.f32 0.0, %v929
  %v946 = vsub.f32 0.0, %v930
  %v947 = vsub.f32 0.0, %v931
  %v948 = vsub.f32 0.0, %v932
  %v949 = vsub.f32 0.0, %v933
  %v950 = vsub.f32 0.0, %v934
  %v951 = vsub.f32 0.0, %v935
  %v952 = vsub.f32 0.0, %v936
  %v953 = vsub.f32 0.0, %v937
  %v954 = vsub.f32 0.0, %v938
  %v955 = vsub.f32 0.0, %v939
  %v956 = vsub.f32 0.0, %v940
  %v957 = vsub.f32 0.0, %v941
  %v958 = vsub.f32 0.0, %v942
  %v959 = vsub.f32 0.0, %v943
  %v960 = vmul.f32 %v944, 1.442695
  %v961 = vpow.pop %v960
  %v962 = vmul.f32 %v945, 1.442695
  %v963 = vpow.pop %v962
  %v964 = vmul.f32 %v946, 1.442695
  %v965 = vpow.pop %v964
  %v966 = vmul.f32 %v947, 1.442695
  %v967 = vpow.pop %v966
  %v968 = vmul.f32 %v948, 1.442695
  %v969 = vpow.pop %v968
  %v970 = vmul.f32 %v949, 1.442695
  %v971 = vpow.pop %v970
  %v972 = vmul.f32 %v950, 1.442695
  %v973 = vpow.pop %v972
  %v974 = vmul.f32 %v951, 1.442695
  %v975 = vpow.pop %v974
  %v976 = vmul.f32 %v952, 1.442695
  %v977 = vpow.pop %v976
  %v978 = vmul.f32 %v953, 1.442695
  %v979 = vpow.pop %v978
  %v980 = vmul.f32 %v954, 1.442695
  %v981 = vpow.pop %v980
  %v982 = vmul.f32 %v955, 1.442695
  %v983 = vpow.pop %v982
  %v984 = vmul.f32 %v956, 1.442695
  %v985 = vpow.pop %v984
  %v986 = vmul.f32 %v957, 1.442695
  %v987 = vpow.pop %v986
  %v988 = vmul.f32 %v958, 1.442695
  %v989 = vpow.pop %v988
  %v990 = vmul.f32 %v959, 1.442695
  %v991 = vpow.pop %v990
  %v992 = vadd.f32 %v961, 1.0
  %v993 = vadd.f32 %v963, 1.0
  %v994 = vadd.f32 %v965, 1.0
  %v995 = vadd.f32 %v967, 1.0
  %v996 = vadd.f32 %v969, 1.0
  %v997 = vadd.f32 %v971, 1.0
  %v998 = vadd.f32 %v973, 1.0
  %v999 = vadd.f32 %v975, 1.0
  %v1000 = vadd.f32 %v977, 1.0
  %v1001 = vadd.f32 %v979, 1.0
  %v1002 = vadd.f32 %v981, 1.0
  %v1003 = vadd.f32 %v983, 1.0
  %v1004 = vadd.f32 %v985, 1.0
  %v1005 = vadd.f32 %v987, 1.0
  %v1006 = vadd.f32 %v989, 1.0
  %v1007 = vadd.f32 %v991, 1.0
  %v1008 = vlog2.pop %v992
  %v1009 = vmul.f32 %v1008, 0.6931472
  %v1010 = vlog2.pop %v993
  %v1011 = vmul.f32 %v1010, 0.6931472
  %v1012 = vlog2.pop %v994
  %v1013 = vmul.f32 %v1012, 0.6931472
  %v1014 = vlog2.pop %v995
  %v1015 = vmul.f32 %v1014, 0.6931472
  %v1016 = vlog2.pop %v996
  %v1017 = vmul.f32 %v1016, 0.6931472
  %v1018 = vlog2.pop %v997
  %v1019 = vmul.f32 %v1018, 0.6931472
  %v1020 = vlog2.pop %v998
  %v1021 = vmul.f32 %v1020, 0.6931472
  %v1022 = vlog2.pop %v999
  %v1023 = vmul.f32 %v1022, 0.6931472
  %v1024 = vlog2.pop %v1000
  %v1025 = vmul.f32 %v1024, 0.6931472
  %v1026 = vlog2.pop %v1001
  %v1027 = vmul.f32 %v1026, 0.6931472
  %v1028 = vlog2.pop %v1002
  %v1029 = vmul.f32 %v1028, 0.6931472
  %v1030 = vlog2.pop %v1003
  %v1031 = vmul.f32 %v1030, 0.6931472
  %v1032 = vlog2.pop %v1004
  %v1033 = vmul.f32 %v1032, 0.6931472
  %v1034 = vlog2.pop %v1005
  %v1035 = vmul.f32 %v1034, 0.6931472
  %v1036 = vlog2.pop %v1006
  %v1037 = vmul.f32 %v1036, 0.6931472
  %v1038 = vlog2.pop %v1007
  %v1039 = vmul.f32 %v1038, 0.6931472
  %v1040 = vadd.f32 %v912, %v1009
  %v1041 = vadd.f32 %v913, %v1011
  %v1042 = vadd.f32 %v914, %v1013
  %v1043 = vadd.f32 %v915, %v1015
  %v1044 = vadd.f32 %v916, %v1017
  %v1045 = vadd.f32 %v917, %v1019
  %v1046 = vadd.f32 %v918, %v1021
  %v1047 = vadd.f32 %v919, %v1023
  %v1048 = vadd.f32 %v920, %v1025
  %v1049 = vadd.f32 %v921, %v1027
  %v1050 = vadd.f32 %v922, %v1029
  %v1051 = vadd.f32 %v923, %v1031
  %v1052 = vadd.f32 %v924, %v1033
  %v1053 = vadd.f32 %v925, %v1035
  %v1054 = vadd.f32 %v926, %v1037
  %v1055 = vadd.f32 %v927, %v1039
  %v1056 = vld [vmem:[%s7] sm:$0xf]
  %v1057 = vld [vmem:[%s7 + $0x4] sm:$0xf]
  %v1060 = vunpack.c.l.b16 %v1056
  %v1061 = vunpack.c.l.b16 %v1057
  %v1062 = vpack.c.b16 %v1061, %v1060
  %1064 = vmatprep.subr.bf16.mxu0 0
  %1065 = vmatpush1.bf16.msra.mxu0 %v1062
  %1066 = vmatprep.subr.bf16.mxu0 0
  %1067 = vmatpush1.bf16.msra.mxu0 0
  %1068 = vmatprep.subr.bf16.mxu0 0
  %1069 = vmatpush1.bf16.msra.mxu0 0
  %1070 = vmatprep.subr.bf16.mxu0 0
  %1071 = vmatpush1.bf16.msra.mxu0 0
  %1072 = vmatprep.subr.bf16.mxu0 0
  %1073 = vmatpush1.bf16.msra.mxu0 0
  %1074 = vmatprep.subr.bf16.mxu0 0
  %1075 = vmatpush1.bf16.msra.mxu0 0
  %1076 = vmatprep.subr.bf16.mxu0 0
  %1077 = vmatpush1.bf16.msra.mxu0 0
  %1078 = vmatprep.subr.bf16.mxu0 0
  %1079 = vmatpush1.bf16.msra.mxu0 0
  %1080 = vmatprep.subr.bf16.mxu0 0
  %1081 = vmatpush1.bf16.msra.mxu0 0
  %1082 = vmatprep.subr.bf16.mxu0 0
  %1083 = vmatpush1.bf16.msra.mxu0 0
  %1084 = vmatprep.subr.bf16.mxu0 0
  %1085 = vmatpush1.bf16.msra.mxu0 0
  %1086 = vmatprep.subr.bf16.mxu0 0
  %1087 = vmatpush1.bf16.msra.mxu0 0
  %1088 = vmatprep.subr.bf16.mxu0 0
  %1089 = vmatpush1.bf16.msra.mxu0 0
  %1090 = vmatprep.subr.bf16.mxu0 0
  %1091 = vmatpush1.bf16.msra.mxu0 0
  %1092 = vmatprep.subr.bf16.mxu0 0
  %1093 = vmatpush1.bf16.msra.mxu0 0
  %1094 = vmatprep.subr.bf16.mxu0 0
  %1095 = vmatpush1.bf16.msra.mxu0 0
  %1096 = vmatprep.mubr.bf16.mxu0 0
  %1097 = vmatmul.mubr.bf16.gmra.mrb[0].mxu0 %v792
  %v1098 = vpop.f32.mrb[0].mxu0
  %v1099 = vadd.f32 0.0, %v1098
  %v1100 = vpop.f32.mrb[0].mxu0
  %v1101 = vpop.f32.mrb[0].mxu0
  %v1102 = vadd.f32 0.0, %v1101
  %v1103 = vpop.f32.mrb[0].mxu0
  %1104 = vmatprep.mubr.bf16.mxu0 0
  %1105 = vmatmul.mubr.bf16.gmra.mrb[0].mxu0 %v795
  %v1106 = vpop.f32.mrb[0].mxu0
  %v1107 = vadd.f32 0.0, %v1106
  %v1108 = vpop.f32.mrb[0].mxu0
  %v1109 = vpop.f32.mrb[0].mxu0
  %v1110 = vadd.f32 0.0, %v1109
  %v1111 = vpop.f32.mrb[0].mxu0
  %1112 = vmatprep.mubr.bf16.mxu0 0
  %1113 = vmatmul.mubr.bf16.gmra.mrb[0].mxu0 %v798
  %v1114 = vpop.f32.mrb[0].mxu0
  %v1115 = vadd.f32 0.0, %v1114
  %v1116 = vpop.f32.mrb[0].mxu0
  %v1117 = vpop.f32.mrb[0].mxu0
  %v1118 = vadd.f32 0.0, %v1117
  %v1119 = vpop.f32.mrb[0].mxu0
  %1120 = vmatprep.mubr.bf16.mxu0 0
  %1121 = vmatmul.mubr.bf16.gmra.mrb[0].mxu0 %v801
  %v1122 = vpop.f32.mrb[0].mxu0
  %v1123 = vadd.f32 0.0, %v1122
  %v1124 = vpop.f32.mrb[0].mxu0
  %v1125 = vpop.f32.mrb[0].mxu0
  %v1126 = vadd.f32 0.0, %v1125
  %v1127 = vpop.f32.mrb[0].mxu0
  %1128 = vmatprep.mubr.bf16.mxu0 0
  %1129 = vmatmul.mubr.bf16.gmra.mrb[0].mxu0 %v804
  %v1130 = vpop.f32.mrb[0].mxu0
  %v1131 = vadd.f32 0.0, %v1130
  %v1132 = vpop.f32.mrb[0].mxu0
  %v1133 = vpop.f32.mrb[0].mxu0
  %v1134 = vadd.f32 0.0, %v1133
  %v1135 = vpop.f32.mrb[0].mxu0
  %1136 = vmatprep.mubr.bf16.mxu0 0
  %1137 = vmatmul.mubr.bf16.gmra.mrb[0].mxu0 %v807
  %v1138 = vpop.f32.mrb[0].mxu0
  %v1139 = vadd.f32 0.0, %v1138
  %v1140 = vpop.f32.mrb[0].mxu0
  %v1141 = vpop.f32.mrb[0].mxu0
  %v1142 = vadd.f32 0.0, %v1141
  %v1143 = vpop.f32.mrb[0].mxu0
  %1144 = vmatprep.mubr.bf16.mxu0 0
  %1145 = vmatmul.mubr.bf16.gmra.mrb[0].mxu0 %v810
  %v1146 = vpop.f32.mrb[0].mxu0
  %v1147 = vadd.f32 0.0, %v1146
  %v1148 = vpop.f32.mrb[0].mxu0
  %v1149 = vpop.f32.mrb[0].mxu0
  %v1150 = vadd.f32 0.0, %v1149
  %v1151 = vpop.f32.mrb[0].mxu0
  %1152 = vmatprep.mubr.bf16.mxu0 0
  %1153 = vmatmul.mubr.bf16.gmra.mrb[0].mxu0 %v813
  %v1154 = vpop.f32.mrb[0].mxu0
  %v1155 = vadd.f32 0.0, %v1154
  %v1156 = vpop.f32.mrb[0].mxu0
  %v1157 = vpop.f32.mrb[0].mxu0
  %v1158 = vadd.f32 0.0, %v1157
  %v1159 = vpop.f32.mrb[0].mxu0
  %1160 = vdwg.mxu0
  %v1161 = vld [vmem:[%s8] sm:$0xf]
  %v1162 = vld [vmem:[%s8 + $0x4] sm:$0xf]
  %v1165 = vunpack.c.l.b16 %v1161
  %v1166 = vunpack.c.l.b16 %v1162
  %v1167 = vpack.c.b16 %v1166, %v1165
  %1169 = vmatprep.subr.bf16.mxu0 0
  %1170 = vmatpush1.bf16.msra.mxu0 %v1167
  %1171 = vmatprep.subr.bf16.mxu0 0
  %1172 = vmatpush1.bf16.msra.mxu0 0
  %1173 = vmatprep.subr.bf16.mxu0 0
  %1174 = vmatpush1.bf16.msra.mxu0 0
  %1175 = vmatprep.subr.bf16.mxu0 0
  %1176 = vmatpush1.bf16.msra.mxu0 0
  %1177 = vmatprep.subr.bf16.mxu0 0
  %1178 = vmatpush1.bf16.msra.mxu0 0
  %1179 = vmatprep.subr.bf16.mxu0 0
  %1180 = vmatpush1.bf16.msra.mxu0 0
  %1181 = vmatprep.subr.bf16.mxu0 0
  %1182 = vmatpush1.bf16.msra.mxu0 0
  %1183 = vmatprep.subr.bf16.mxu0 0
  %1184 = vmatpush1.bf16.msra.mxu0 0
  %1185 = vmatprep.subr.bf16.mxu0 0
  %1186 = vmatpush1.bf16.msra.mxu0 0
  %1187 = vmatprep.subr.bf16.mxu0 0
  %1188 = vmatpush1.bf16.msra.mxu0 0
  %1189 = vmatprep.subr.bf16.mxu0 0
  %1190 = vmatpush1.bf16.msra.mxu0 0
  %1191 = vmatprep.subr.bf16.mxu0 0
  %1192 = vmatpush1.bf16.msra.mxu0 0
  %1193 = vmatprep.subr.bf16.mxu0 0
  %1194 = vmatpush1.bf16.msra.mxu0 0
  %1195 = vmatprep.subr.bf16.mxu0 0
  %1196 = vmatpush1.bf16.msra.mxu0 0
  %1197 = vmatprep.subr.bf16.mxu0 0
  %1198 = vmatpush1.bf16.msra.mxu0 0
  %1199 = vmatprep.subr.bf16.mxu0 0
  %1200 = vmatpush1.bf16.msra.mxu0 0
  %1201 = vmatprep.mubr.bf16.mxu0 0
  %1202 = vmatmul.mubr.bf16.gmra.mrb[0].mxu0 %v792
  %v1203 = vpop.f32.mrb[0].mxu0
  %v1204 = vadd.f32 0.0, %v1203
  %v1205 = vpop.f32.mrb[0].mxu0
  %v1206 = vpop.f32.mrb[0].mxu0
  %v1207 = vadd.f32 0.0, %v1206
  %v1208 = vpop.f32.mrb[0].mxu0
  %1209 = vmatprep.mubr.bf16.mxu0 0
  %1210 = vmatmul.mubr.bf16.gmra.mrb[0].mxu0 %v795
  %v1211 = vpop.f32.mrb[0].mxu0
  %v1212 = vadd.f32 0.0, %v1211
  %v1213 = vpop.f32.mrb[0].mxu0
  %v1214 = vpop.f32.mrb[0].mxu0
  %v1215 = vadd.f32 0.0, %v1214
  %v1216 = vpop.f32.mrb[0].mxu0
  %1217 = vmatprep.mubr.bf16.mxu0 0
  %1218 = vmatmul.mubr.bf16.gmra.mrb[0].mxu0 %v798
  %v1219 = vpop.f32.mrb[0].mxu0
  %v1220 = vadd.f32 0.0, %v1219
  %v1221 = vpop.f32.mrb[0].mxu0
  %v1222 = vpop.f32.mrb[0].mxu0
  %v1223 = vadd.f32 0.0, %v1222
  %v1224 = vpop.f32.mrb[0].mxu0
  %1225 = vmatprep.mubr.bf16.mxu0 0
  %1226 = vmatmul.mubr.bf16.gmra.mrb[0].mxu0 %v801
  %v1227 = vpop.f32.mrb[0].mxu0
  %v1228 = vadd.f32 0.0, %v1227
  %v1229 = vpop.f32.mrb[0].mxu0
  %v1230 = vpop.f32.mrb[0].mxu0
  %v1231 = vadd.f32 0.0, %v1230
  %v1232 = vpop.f32.mrb[0].mxu0
  %1233 = vmatprep.mubr.bf16.mxu0 0
  %1234 = vmatmul.mubr.bf16.gmra.mrb[0].mxu0 %v804
  %v1235 = vpop.f32.mrb[0].mxu0
  %v1236 = vadd.f32 0.0, %v1235
  %v1237 = vpop.f32.mrb[0].mxu0
  %v1238 = vpop.f32.mrb[0].mxu0
  %v1239 = vadd.f32 0.0, %v1238
  %v1240 = vpop.f32.mrb[0].mxu0
  %1241 = vmatprep.mubr.bf16.mxu0 0
  %1242 = vmatmul.mubr.bf16.gmra.mrb[0].mxu0 %v807
  %v1243 = vpop.f32.mrb[0].mxu0
  %v1244 = vadd.f32 0.0, %v1243
  %v1245 = vpop.f32.mrb[0].mxu0
  %v1246 = vpop.f32.mrb[0].mxu0
  %v1247 = vadd.f32 0.0, %v1246
  %v1248 = vpop.f32.mrb[0].mxu0
  %1249 = vmatprep.mubr.bf16.mxu0 0
  %1250 = vmatmul.mubr.bf16.gmra.mrb[0].mxu0 %v810
  %v1251 = vpop.f32.mrb[0].mxu0
  %v1252 = vadd.f32 0.0, %v1251
  %v1253 = vpop.f32.mrb[0].mxu0
  %v1254 = vpop.f32.mrb[0].mxu0
  %v1255 = vadd.f32 0.0, %v1254
  %v1256 = vpop.f32.mrb[0].mxu0
  %1257 = vmatprep.mubr.bf16.mxu0 0
  %1258 = vmatmul.mubr.bf16.gmra.mrb[0].mxu0 %v813
  %v1259 = vpop.f32.mrb[0].mxu0
  %v1260 = vadd.f32 0.0, %v1259
  %v1261 = vpop.f32.mrb[0].mxu0
  %v1262 = vpop.f32.mrb[0].mxu0
  %v1263 = vadd.f32 0.0, %v1262
  %v1264 = vpop.f32.mrb[0].mxu0
  %1265 = vdwg.mxu0
  %v1266 = vld [vmem:[%s9] sm:$0xff]
  %v1267 = vld [vmem:[%s9 + $0x8] sm:$0xff]
  %v1268 = vld [vmem:[%s9 + $0x10] sm:$0xff]
  %v1269 = vld [vmem:[%s9 + $0x18] sm:$0xff]
  %v1271 = vsel %vm790, %v1040, 0
  %v1274 = vsel %vm790, %v1041, 0
  %v1277 = vsel %vm790, %v1042, 0
  %v1280 = vsel %vm790, %v1043, 0
  %v1283 = vsel %vm790, %v1044, 0
  %v1286 = vsel %vm790, %v1045, 0
  %v1289 = vsel %vm790, %v1046, 0
  %v1292 = vsel %vm790, %v1047, 0
  %v1295 = vsel %vm790, %v1048, 0
  %v1298 = vsel %vm790, %v1049, 0
  %v1301 = vsel %vm790, %v1050, 0
  %v1304 = vsel %vm790, %v1051, 0
  %v1307 = vsel %vm790, %v1052, 0
  %v1310 = vsel %vm790, %v1053, 0
  %v1313 = vsel %vm790, %v1054, 0
  %v1316 = vsel %vm790, %v1055, 0
  %1318 = vmatprep.subr.mxu0 %v1267
  %1319 = vmatpush1.msra.mxu0 %v1266
  %1320 = vmatprep.subr.mxu0 %v1269
  %1321 = vmatpush1.msra.mxu0 %v1268
  %1322 = vmatprep.subr.mxu0 0.0
  %1323 = vmatpush1.msra.mxu0 0.0
  %1324 = vmatprep.subr.mxu0 0.0
  %1325 = vmatpush1.msra.mxu0 0.0
  %1326 = vmatprep.subr.mxu0 0.0
  %1327 = vmatpush1.msra.mxu0 0.0
  %1328 = vmatprep.subr.mxu0 0.0
  %1329 = vmatpush1.msra.mxu0 0.0
  %1330 = vmatprep.subr.mxu0 0.0
  %1331 = vmatpush1.msra.mxu0 0.0
  %1332 = vmatprep.subr.mxu0 0.0
  %1333 = vmatpush1.msra.mxu0 0.0
  %1334 = vmatprep.subr.mxu0 0.0
  %1335 = vmatpush1.msra.mxu0 0.0
  %1336 = vmatprep.subr.mxu0 0.0
  %1337 = vmatpush1.msra.mxu0 0.0
  %1338 = vmatprep.subr.mxu0 0.0
  %1339 = vmatpush1.msra.mxu0 0.0
  %1340 = vmatprep.subr.mxu0 0.0
  %1341 = vmatpush1.msra.mxu0 0.0
  %1342 = vmatprep.subr.mxu0 0.0
  %1343 = vmatpush1.msra.mxu0 0.0
  %1344 = vmatprep.subr.mxu0 0.0
  %1345 = vmatpush1.msra.mxu0 0.0
  %1346 = vmatprep.subr.mxu0 0.0
  %1347 = vmatpush1.msra.mxu0 0.0
  %1348 = vmatprep.subr.mxu0 0.0
  %1349 = vmatpush1.msra.mxu0 0.0
  %1350 = vmatprep.subr.mxu0 0.0
  %1351 = vmatpush1.msra.mxu0 0.0
  %1352 = vmatprep.subr.mxu0 0.0
  %1353 = vmatpush1.msra.mxu0 0.0
  %1354 = vmatprep.subr.mxu0 0.0
  %1355 = vmatpush1.msra.mxu0 0.0
  %1356 = vmatprep.subr.mxu0 0.0
  %1357 = vmatpush1.msra.mxu0 0.0
  %1358 = vmatprep.subr.mxu0 0.0
  %1359 = vmatpush1.msra.mxu0 0.0
  %1360 = vmatprep.subr.mxu0 0.0
  %1361 = vmatpush1.msra.mxu0 0.0
  %1362 = vmatprep.subr.mxu0 0.0
  %1363 = vmatpush1.msra.mxu0 0.0
  %1364 = vmatprep.subr.mxu0 0.0
  %1365 = vmatpush1.msra.mxu0 0.0
  %1366 = vmatprep.subr.mxu0 0.0
  %1367 = vmatpush1.msra.mxu0 0.0
  %1368 = vmatprep.subr.mxu0 0.0
  %1369 = vmatpush1.msra.mxu0 0.0
  %1370 = vmatprep.subr.mxu0 0.0
  %1371 = vmatpush1.msra.mxu0 0.0
  %1372 = vmatprep.subr.mxu0 0.0
  %1373 = vmatpush1.msra.mxu0 0.0
  %1374 = vmatprep.subr.mxu0 0.0
  %1375 = vmatpush1.msra.mxu0 0.0
  %1376 = vmatprep.subr.mxu0 0.0
  %1377 = vmatpush1.msra.mxu0 0.0
  %1378 = vmatprep.subr.mxu0 0.0
  %1379 = vmatpush1.msra.mxu0 0.0
  %1380 = vmatprep.subr.mxu0 0.0
  %1381 = vmatpush1.msra.mxu0 0.0
  %1382 = vmatprep.mubr.f32.mxu0 0.0
  %1383 = vmatmul.mubr.f32.gmra.mrb[0].mxu0 %v1271
  %v1384 = vpop.f32.mrb[0].mxu0
  %v1385 = vadd.f32 0.0, %v1384
  %v1386 = vpop.f32.mrb[0].mxu0
  %v1387 = vadd.f32 0.0, %v1386
  %1388 = vmatprep.mubr.f32.mxu0 0.0
  %1389 = vmatmul.mubr.f32.gmra.mrb[0].mxu0 %v1274
  %v1390 = vpop.f32.mrb[0].mxu0
  %v1391 = vadd.f32 0.0, %v1390
  %v1392 = vpop.f32.mrb[0].mxu0
  %v1393 = vadd.f32 0.0, %v1392
  %1394 = vmatprep.mubr.f32.mxu0 0.0
  %1395 = vmatmul.mubr.f32.gmra.mrb[0].mxu0 %v1277
  %v1396 = vpop.f32.mrb[0].mxu0
  %v1397 = vadd.f32 0.0, %v1396
  %v1398 = vpop.f32.mrb[0].mxu0
  %v1399 = vadd.f32 0.0, %v1398
  %1400 = vmatprep.mubr.f32.mxu0 0.0
  %1401 = vmatmul.mubr.f32.gmra.mrb[0].mxu0 %v1280
  %v1402 = vpop.f32.mrb[0].mxu0
  %v1403 = vadd.f32 0.0, %v1402
  %v1404 = vpop.f32.mrb[0].mxu0
  %v1405 = vadd.f32 0.0, %v1404
  %1406 = vmatprep.mubr.f32.mxu0 0.0
  %1407 = vmatmul.mubr.f32.gmra.mrb[0].mxu0 %v1283
  %v1408 = vpop.f32.mrb[0].mxu0
  %v1409 = vadd.f32 0.0, %v1408
  %v1410 = vpop.f32.mrb[0].mxu0
  %v1411 = vadd.f32 0.0, %v1410
  %1412 = vmatprep.mubr.f32.mxu0 0.0
  %1413 = vmatmul.mubr.f32.gmra.mrb[0].mxu0 %v1286
  %v1414 = vpop.f32.mrb[0].mxu0
  %v1415 = vadd.f32 0.0, %v1414
  %v1416 = vpop.f32.mrb[0].mxu0
  %v1417 = vadd.f32 0.0, %v1416
  %1418 = vmatprep.mubr.f32.mxu0 0.0
  %1419 = vmatmul.mubr.f32.gmra.mrb[0].mxu0 %v1289
  %v1420 = vpop.f32.mrb[0].mxu0
  %v1421 = vadd.f32 0.0, %v1420
  %v1422 = vpop.f32.mrb[0].mxu0
  %v1423 = vadd.f32 0.0, %v1422
  %1424 = vmatprep.mubr.f32.mxu0 0.0
  %1425 = vmatmul.mubr.f32.gmra.mrb[0].mxu0 %v1292
  %v1426 = vpop.f32.mrb[0].mxu0
  %v1427 = vadd.f32 0.0, %v1426
  %v1428 = vpop.f32.mrb[0].mxu0
  %v1429 = vadd.f32 0.0, %v1428
  %1430 = vmatprep.mubr.f32.mxu0 0.0
  %1431 = vmatmul.mubr.f32.gmra.mrb[0].mxu0 %v1295
  %v1432 = vpop.f32.mrb[0].mxu0
  %v1433 = vadd.f32 0.0, %v1432
  %v1434 = vpop.f32.mrb[0].mxu0
  %v1435 = vadd.f32 0.0, %v1434
  %1436 = vmatprep.mubr.f32.mxu0 0.0
  %1437 = vmatmul.mubr.f32.gmra.mrb[0].mxu0 %v1298
  %v1438 = vpop.f32.mrb[0].mxu0
  %v1439 = vadd.f32 0.0, %v1438
  %v1440 = vpop.f32.mrb[0].mxu0
  %v1441 = vadd.f32 0.0, %v1440
  %1442 = vmatprep.mubr.f32.mxu0 0.0
  %1443 = vmatmul.mubr.f32.gmra.mrb[0].mxu0 %v1301
  %v1444 = vpop.f32.mrb[0].mxu0
  %v1445 = vadd.f32 0.0, %v1444
  %v1446 = vpop.f32.mrb[0].mxu0
  %v1447 = vadd.f32 0.0, %v1446
  %1448 = vmatprep.mubr.f32.mxu0 0.0
  %1449 = vmatmul.mubr.f32.gmra.mrb[0].mxu0 %v1304
  %v1450 = vpop.f32.mrb[0].mxu0
  %v1451 = vadd.f32 0.0, %v1450
  %v1452 = vpop.f32.mrb[0].mxu0
  %v1453 = vadd.f32 0.0, %v1452
  %1454 = vmatprep.mubr.f32.mxu0 0.0
  %1455 = vmatmul.mubr.f32.gmra.mrb[0].mxu0 %v1307
  %v1456 = vpop.f32.mrb[0].mxu0
  %v1457 = vadd.f32 0.0, %v1456
  %v1458 = vpop.f32.mrb[0].mxu0
  %v1459 = vadd.f32 0.0, %v1458
  %1460 = vmatprep.mubr.f32.mxu0 0.0
  %1461 = vmatmul.mubr.f32.gmra.mrb[0].mxu0 %v1310
  %v1462 = vpop.f32.mrb[0].mxu0
  %v1463 = vadd.f32 0.0, %v1462
  %v1464 = vpop.f32.mrb[0].mxu0
  %v1465 = vadd.f32 0.0, %v1464
  %1466 = vmatprep.mubr.f32.mxu0 0.0
  %1467 = vmatmul.mubr.f32.gmra.mrb[0].mxu0 %v1313
  %v1468 = vpop.f32.mrb[0].mxu0
  %v1469 = vadd.f32 0.0, %v1468
  %v1470 = vpop.f32.mrb[0].mxu0
  %v1471 = vadd.f32 0.0, %v1470
  %1472 = vmatprep.mubr.f32.mxu0 0.0
  %1473 = vmatmul.mubr.f32.gmra.mrb[0].mxu0 %v1316
  %v1474 = vpop.f32.mrb[0].mxu0
  %v1475 = vadd.f32 0.0, %v1474
  %v1476 = vpop.f32.mrb[0].mxu0
  %v1477 = vadd.f32 0.0, %v1476
  %1478 = vdwg.mxu0
  %v1479 = vmul.f32 %v1385, 1.442695
  %v1480 = vpow.pop %v1479
  %v1481 = vmul.f32 %v1387, 1.442695
  %v1482 = vpow.pop %v1481
  %v1483 = vmul.f32 %v1391, 1.442695
  %v1484 = vpow.pop %v1483
  %v1485 = vmul.f32 %v1393, 1.442695
  %v1486 = vpow.pop %v1485
  %v1487 = vmul.f32 %v1397, 1.442695
  %v1488 = vpow.pop %v1487
  %v1489 = vmul.f32 %v1399, 1.442695
  %v1490 = vpow.pop %v1489
  %v1491 = vmul.f32 %v1403, 1.442695
  %v1492 = vpow.pop %v1491
  %v1493 = vmul.f32 %v1405, 1.442695
  %v1494 = vpow.pop %v1493
  %v1495 = vmul.f32 %v1409, 1.442695
  %v1496 = vpow.pop %v1495
  %v1497 = vmul.f32 %v1411, 1.442695
  %v1498 = vpow.pop %v1497
  %v1499 = vmul.f32 %v1415, 1.442695
  %v1500 = vpow.pop %v1499
  %v1501 = vmul.f32 %v1417, 1.442695
  %v1502 = vpow.pop %v1501
  %v1503 = vmul.f32 %v1421, 1.442695
  %v1504 = vpow.pop %v1503
  %v1505 = vmul.f32 %v1423, 1.442695
  %v1506 = vpow.pop %v1505
  %v1507 = vmul.f32 %v1427, 1.442695
  %v1508 = vpow.pop %v1507
  %v1509 = vmul.f32 %v1429, 1.442695
  %v1510 = vpow.pop %v1509
  %v1511 = vmul.f32 %v1433, 1.442695
  %v1512 = vpow.pop %v1511
  %v1513 = vmul.f32 %v1435, 1.442695
  %v1514 = vpow.pop %v1513
  %v1515 = vmul.f32 %v1439, 1.442695
  %v1516 = vpow.pop %v1515
  %v1517 = vmul.f32 %v1441, 1.442695
  %v1518 = vpow.pop %v1517
  %v1519 = vmul.f32 %v1445, 1.442695
  %v1520 = vpow.pop %v1519
  %v1521 = vmul.f32 %v1447, 1.442695
  %v1522 = vpow.pop %v1521
  %v1523 = vmul.f32 %v1451, 1.442695
  %v1524 = vpow.pop %v1523
  %v1525 = vmul.f32 %v1453, 1.442695
  %v1526 = vpow.pop %v1525
  %v1527 = vmul.f32 %v1457, 1.442695
  %v1528 = vpow.pop %v1527
  %v1529 = vmul.f32 %v1459, 1.442695
  %v1530 = vpow.pop %v1529
  %v1531 = vmul.f32 %v1463, 1.442695
  %v1532 = vpow.pop %v1531
  %v1533 = vmul.f32 %v1465, 1.442695
  %v1534 = vpow.pop %v1533
  %v1535 = vmul.f32 %v1469, 1.442695
  %v1536 = vpow.pop %v1535
  %v1537 = vmul.f32 %v1471, 1.442695
  %v1538 = vpow.pop %v1537
  %v1539 = vmul.f32 %v1475, 1.442695
  %v1540 = vpow.pop %v1539
  %v1541 = vmul.f32 %v1477, 1.442695
  %v1542 = vpow.pop %v1541
  %1543 = vst [vmem:[#allocation4] sm:$0xff] %v1480
  %1544 = vst [vmem:[#allocation4 + $0x8] sm:$0xff] %v1482
  %1545 = vst [vmem:[#allocation4 + $0x10] sm:$0xff] %v1484
  %1546 = vst [vmem:[#allocation4 + $0x18] sm:$0xff] %v1486
  %1547 = vst [vmem:[#allocation4 + $0x20] sm:$0xff] %v1488
  %1548 = vst [vmem:[#allocation4 + $0x28] sm:$0xff] %v1490
  %1549 = vst [vmem:[#allocation4 + $0x30] sm:$0xff] %v1492
  %1550 = vst [vmem:[#allocation4 + $0x38] sm:$0xff] %v1494
  %1551 = vst [vmem:[#allocation4 + $0x40] sm:$0xff] %v1496
  %1552 = vst [vmem:[#allocation4 + $0x48] sm:$0xff] %v1498
  %1553 = vst [vmem:[#allocation4 + $0x50] sm:$0xff] %v1500
  %1554 = vst [vmem:[#allocation4 + $0x58] sm:$0xff] %v1502
  %1555 = vst [vmem:[#allocation4 + $0x60] sm:$0xff] %v1504
  %1556 = vst [vmem:[#allocation4 + $0x68] sm:$0xff] %v1506
  %1557 = vst [vmem:[#allocation4 + $0x70] sm:$0xff] %v1508
  %1558 = vst [vmem:[#allocation4 + $0x78] sm:$0xff] %v1510
  %1559 = vst [vmem:[#allocation4 + $0x80] sm:$0xff] %v1512
  %1560 = vst [vmem:[#allocation4 + $0x88] sm:$0xff] %v1514
  %1561 = vst [vmem:[#allocation4 + $0x90] sm:$0xff] %v1516
  %1562 = vst [vmem:[#allocation4 + $0x98] sm:$0xff] %v1518
  %1563 = vst [vmem:[#allocation4 + $0xa0] sm:$0xff] %v1520
  %1564 = vst [vmem:[#allocation4 + $0xa8] sm:$0xff] %v1522
  %1565 = vst [vmem:[#allocation4 + $0xb0] sm:$0xff] %v1524
  %1566 = vst [vmem:[#allocation4 + $0xb8] sm:$0xff] %v1526
  %1567 = vst [vmem:[#allocation4 + $0xc0] sm:$0xff] %v1528
  %1568 = vst [vmem:[#allocation4 + $0xc8] sm:$0xff] %v1530
  %1569 = vst [vmem:[#allocation4 + $0xd0] sm:$0xff] %v1532
  %1570 = vst [vmem:[#allocation4 + $0xd8] sm:$0xff] %v1534
  %1571 = vst [vmem:[#allocation4 + $0xe0] sm:$0xff] %v1536
  %1572 = vst [vmem:[#allocation4 + $0xe8] sm:$0xff] %v1538
  %1573 = vst [vmem:[#allocation4 + $0xf0] sm:$0xff] %v1540
  %1574 = vst [vmem:[#allocation4 + $0xf8] sm:$0xff] %v1542
  %v1575 = vmul.f32 %v1040, %v749
  %v1576 = vmul.f32 %v1041, %v750
  %v1577 = vmul.f32 %v1042, %v751
  %v1578 = vmul.f32 %v1043, %v752
  %v1579 = vmul.f32 %v1044, %v753
  %v1580 = vmul.f32 %v1045, %v754
  %v1581 = vmul.f32 %v1046, %v755
  %v1582 = vmul.f32 %v1047, %v756
  %v1583 = vmul.f32 %v1048, %v757
  %v1584 = vmul.f32 %v1049, %v758
  %v1585 = vmul.f32 %v1050, %v759
  %v1586 = vmul.f32 %v1051, %v760
  %v1587 = vmul.f32 %v1052, %v761
  %v1588 = vmul.f32 %v1053, %v762
  %v1589 = vmul.f32 %v1054, %v763
  %v1590 = vmul.f32 %v1055, %v764
  %v1591 = vld [vmem:[%s10] sm:$0xff]
  %v1592 = vld [vmem:[%s10 + $0x8] sm:$0xff]
  %v1593 = vld [vmem:[%s10 + $0x10] sm:$0xff]
  %v1594 = vld [vmem:[%s10 + $0x18] sm:$0xff]
  %v1596 = vsel %vm790, %v1575, 0
  %v1599 = vsel %vm790, %v1576, 0
  %v1602 = vsel %vm790, %v1577, 0
  %v1605 = vsel %vm790, %v1578, 0
  %v1608 = vsel %vm790, %v1579, 0
  %v1611 = vsel %vm790, %v1580, 0
  %v1614 = vsel %vm790, %v1581, 0
  %v1617 = vsel %vm790, %v1582, 0
  %v1620 = vsel %vm790, %v1583, 0
  %v1623 = vsel %vm790, %v1584, 0
  %v1626 = vsel %vm790, %v1585, 0
  %v1629 = vsel %vm790, %v1586, 0
  %v1632 = vsel %vm790, %v1587, 0
  %v1635 = vsel %vm790, %v1588, 0
  %v1638 = vsel %vm790, %v1589, 0
  %v1641 = vsel %vm790, %v1590, 0
  %1643 = vmatprep.subr.mxu0 %v1592
  %1644 = vmatpush1.msra.mxu0 %v1591
  %1645 = vmatprep.subr.mxu0 %v1594
  %1646 = vmatpush1.msra.mxu0 %v1593
  %1647 = vmatprep.subr.mxu0 0.0
  %1648 = vmatpush1.msra.mxu0 0.0
  %1649 = vmatprep.subr.mxu0 0.0
  %1650 = vmatpush1.msra.mxu0 0.0
  %1651 = vmatprep.subr.mxu0 0.0
  %1652 = vmatpush1.msra.mxu0 0.0
  %1653 = vmatprep.subr.mxu0 0.0
  %1654 = vmatpush1.msra.mxu0 0.0
  %1655 = vmatprep.subr.mxu0 0.0
  %1656 = vmatpush1.msra.mxu0 0.0
  %1657 = vmatprep.subr.mxu0 0.0
  %1658 = vmatpush1.msra.mxu0 0.0
  %1659 = vmatprep.subr.mxu0 0.0
  %1660 = vmatpush1.msra.mxu0 0.0
  %1661 = vmatprep.subr.mxu0 0.0
  %1662 = vmatpush1.msra.mxu0 0.0
  %1663 = vmatprep.subr.mxu0 0.0
  %1664 = vmatpush1.msra.mxu0 0.0
  %1665 = vmatprep.subr.mxu0 0.0
  %1666 = vmatpush1.msra.mxu0 0.0
  %1667 = vmatprep.subr.mxu0 0.0
  %1668 = vmatpush1.msra.mxu0 0.0
  %1669 = vmatprep.subr.mxu0 0.0
  %1670 = vmatpush1.msra.mxu0 0.0
  %1671 = vmatprep.subr.mxu0 0.0
  %1672 = vmatpush1.msra.mxu0 0.0
  %1673 = vmatprep.subr.mxu0 0.0
  %1674 = vmatpush1.msra.mxu0 0.0
  %1675 = vmatprep.subr.mxu0 0.0
  %1676 = vmatpush1.msra.mxu0 0.0
  %1677 = vmatprep.subr.mxu0 0.0
  %1678 = vmatpush1.msra.mxu0 0.0
  %1679 = vmatprep.subr.mxu0 0.0
  %1680 = vmatpush1.msra.mxu0 0.0
  %1681 = vmatprep.subr.mxu0 0.0
  %1682 = vmatpush1.msra.mxu0 0.0
  %1683 = vmatprep.subr.mxu0 0.0
  %1684 = vmatpush1.msra.mxu0 0.0
  %1685 = vmatprep.subr.mxu0 0.0
  %1686 = vmatpush1.msra.mxu0 0.0
  %1687 = vmatprep.subr.mxu0 0.0
  %1688 = vmatpush1.msra.mxu0 0.0
  %1689 = vmatprep.subr.mxu0 0.0
  %1690 = vmatpush1.msra.mxu0 0.0
  %1691 = vmatprep.subr.mxu0 0.0
  %1692 = vmatpush1.msra.mxu0 0.0
  %1693 = vmatprep.subr.mxu0 0.0
  %1694 = vmatpush1.msra.mxu0 0.0
  %1695 = vmatprep.subr.mxu0 0.0
  %1696 = vmatpush1.msra.mxu0 0.0
  %1697 = vmatprep.subr.mxu0 0.0
  %1698 = vmatpush1.msra.mxu0 0.0
  %1699 = vmatprep.subr.mxu0 0.0
  %1700 = vmatpush1.msra.mxu0 0.0
  %1701 = vmatprep.subr.mxu0 0.0
  %1702 = vmatpush1.msra.mxu0 0.0
  %1703 = vmatprep.subr.mxu0 0.0
  %1704 = vmatpush1.msra.mxu0 0.0
  %1705 = vmatprep.subr.mxu0 0.0
  %1706 = vmatpush1.msra.mxu0 0.0
  %1707 = vmatprep.mubr.f32.mxu0 0.0
  %1708 = vmatmul.mubr.f32.gmra.mrb[0].mxu0 %v1596
  %v1709 = vpop.f32.mrb[0].mxu0
  %v1710 = vadd.f32 0.0, %v1709
  %v1711 = vpop.f32.mrb[0].mxu0
  %v1712 = vadd.f32 0.0, %v1711
  %1713 = vmatprep.mubr.f32.mxu0 0.0
  %1714 = vmatmul.mubr.f32.gmra.mrb[0].mxu0 %v1599
  %v1715 = vpop.f32.mrb[0].mxu0
  %v1716 = vadd.f32 0.0, %v1715
  %v1717 = vpop.f32.mrb[0].mxu0
  %v1718 = vadd.f32 0.0, %v1717
  %1719 = vmatprep.mubr.f32.mxu0 0.0
  %1720 = vmatmul.mubr.f32.gmra.mrb[0].mxu0 %v1602
  %v1721 = vpop.f32.mrb[0].mxu0
  %v1722 = vadd.f32 0.0, %v1721
  %v1723 = vpop.f32.mrb[0].mxu0
  %v1724 = vadd.f32 0.0, %v1723
  %1725 = vmatprep.mubr.f32.mxu0 0.0
  %1726 = vmatmul.mubr.f32.gmra.mrb[0].mxu0 %v1605
  %v1727 = vpop.f32.mrb[0].mxu0
  %v1728 = vadd.f32 0.0, %v1727
  %v1729 = vpop.f32.mrb[0].mxu0
  %v1730 = vadd.f32 0.0, %v1729
  %1731 = vmatprep.mubr.f32.mxu0 0.0
  %1732 = vmatmul.mubr.f32.gmra.mrb[0].mxu0 %v1608
  %v1733 = vpop.f32.mrb[0].mxu0
  %v1734 = vadd.f32 0.0, %v1733
  %v1735 = vpop.f32.mrb[0].mxu0
  %v1736 = vadd.f32 0.0, %v1735
  %1737 = vmatprep.mubr.f32.mxu0 0.0
  %1738 = vmatmul.mubr.f32.gmra.mrb[0].mxu0 %v1611
  %v1739 = vpop.f32.mrb[0].mxu0
  %v1740 = vadd.f32 0.0, %v1739
  %v1741 = vpop.f32.mrb[0].mxu0
  %v1742 = vadd.f32 0.0, %v1741
  %1743 = vmatprep.mubr.f32.mxu0 0.0
  %1744 = vmatmul.mubr.f32.gmra.mrb[0].mxu0 %v1614
  %v1745 = vpop.f32.mrb[0].mxu0
  %v1746 = vadd.f32 0.0, %v1745
  %v1747 = vpop.f32.mrb[0].mxu0
  %v1748 = vadd.f32 0.0, %v1747
  %1749 = vmatprep.mubr.f32.mxu0 0.0
  %1750 = vmatmul.mubr.f32.gmra.mrb[0].mxu0 %v1617
  %v1751 = vpop.f32.mrb[0].mxu0
  %v1752 = vadd.f32 0.0, %v1751
  %v1753 = vpop.f32.mrb[0].mxu0
  %v1754 = vadd.f32 0.0, %v1753
  %1755 = vmatprep.mubr.f32.mxu0 0.0
  %1756 = vmatmul.mubr.f32.gmra.mrb[0].mxu0 %v1620
  %v1757 = vpop.f32.mrb[0].mxu0
  %v1758 = vadd.f32 0.0, %v1757
  %v1759 = vpop.f32.mrb[0].mxu0
  %v1760 = vadd.f32 0.0, %v1759
  %1761 = vmatprep.mubr.f32.mxu0 0.0
  %1762 = vmatmul.mubr.f32.gmra.mrb[0].mxu0 %v1623
  %v1763 = vpop.f32.mrb[0].mxu0
  %v1764 = vadd.f32 0.0, %v1763
  %v1765 = vpop.f32.mrb[0].mxu0
  %v1766 = vadd.f32 0.0, %v1765
  %1767 = vmatprep.mubr.f32.mxu0 0.0
  %1768 = vmatmul.mubr.f32.gmra.mrb[0].mxu0 %v1626
  %v1769 = vpop.f32.mrb[0].mxu0
  %v1770 = vadd.f32 0.0, %v1769
  %v1771 = vpop.f32.mrb[0].mxu0
  %v1772 = vadd.f32 0.0, %v1771
  %1773 = vmatprep.mubr.f32.mxu0 0.0
  %1774 = vmatmul.mubr.f32.gmra.mrb[0].mxu0 %v1629
  %v1775 = vpop.f32.mrb[0].mxu0
  %v1776 = vadd.f32 0.0, %v1775
  %v1777 = vpop.f32.mrb[0].mxu0
  %v1778 = vadd.f32 0.0, %v1777
  %1779 = vmatprep.mubr.f32.mxu0 0.0
  %1780 = vmatmul.mubr.f32.gmra.mrb[0].mxu0 %v1632
  %v1781 = vpop.f32.mrb[0].mxu0
  %v1782 = vadd.f32 0.0, %v1781
  %v1783 = vpop.f32.mrb[0].mxu0
  %v1784 = vadd.f32 0.0, %v1783
  %1785 = vmatprep.mubr.f32.mxu0 0.0
  %1786 = vmatmul.mubr.f32.gmra.mrb[0].mxu0 %v1635
  %v1787 = vpop.f32.mrb[0].mxu0
  %v1788 = vadd.f32 0.0, %v1787
  %v1789 = vpop.f32.mrb[0].mxu0
  %v1790 = vadd.f32 0.0, %v1789
  %1791 = vmatprep.mubr.f32.mxu0 0.0
  %1792 = vmatmul.mubr.f32.gmra.mrb[0].mxu0 %v1638
  %v1793 = vpop.f32.mrb[0].mxu0
  %v1794 = vadd.f32 0.0, %v1793
  %v1795 = vpop.f32.mrb[0].mxu0
  %v1796 = vadd.f32 0.0, %v1795
  %1797 = vmatprep.mubr.f32.mxu0 0.0
  %1798 = vmatmul.mubr.f32.gmra.mrb[0].mxu0 %v1641
  %v1799 = vpop.f32.mrb[0].mxu0
  %v1800 = vadd.f32 0.0, %v1799
  %v1801 = vpop.f32.mrb[0].mxu0
  %v1802 = vadd.f32 0.0, %v1801
  %1803 = vdwg.mxu0
  %v1804 = vld [vmem:[%s11] sm:$0xff]
  %v1805 = vld [vmem:[%s11 + $0x8] sm:$0xff]
  %v1806 = vld [vmem:[%s11 + $0x10] sm:$0xff]
  %v1807 = vld [vmem:[%s11 + $0x18] sm:$0xff]
  %v1809 = vsel %vm790, %v1099, 0
  %v1812 = vsel %vm790, %v1102, 0
  %v1815 = vsel %vm790, %v1107, 0
  %v1818 = vsel %vm790, %v1110, 0
  %v1821 = vsel %vm790, %v1115, 0
  %v1824 = vsel %vm790, %v1118, 0
  %v1827 = vsel %vm790, %v1123, 0
  %v1830 = vsel %vm790, %v1126, 0
  %v1833 = vsel %vm790, %v1131, 0
  %v1836 = vsel %vm790, %v1134, 0
  %v1839 = vsel %vm790, %v1139, 0
  %v1842 = vsel %vm790, %v1142, 0
  %v1845 = vsel %vm790, %v1147, 0
  %v1848 = vsel %vm790, %v1150, 0
  %v1851 = vsel %vm790, %v1155, 0
  %v1854 = vsel %vm790, %v1158, 0
  %1856 = vmatprep.subr.mxu0 %v1805
  %1857 = vmatpush1.msra.mxu0 %v1804
  %1858 = vmatprep.subr.mxu0 %v1807
  %1859 = vmatpush1.msra.mxu0 %v1806
  %1860 = vmatprep.subr.mxu0 0.0
  %1861 = vmatpush1.msra.mxu0 0.0
  %1862 = vmatprep.subr.mxu0 0.0
  %1863 = vmatpush1.msra.mxu0 0.0
  %1864 = vmatprep.subr.mxu0 0.0
  %1865 = vmatpush1.msra.mxu0 0.0
  %1866 = vmatprep.subr.mxu0 0.0
  %1867 = vmatpush1.msra.mxu0 0.0
  %1868 = vmatprep.subr.mxu0 0.0
  %1869 = vmatpush1.msra.mxu0 0.0
  %1870 = vmatprep.subr.mxu0 0.0
  %1871 = vmatpush1.msra.mxu0 0.0
  %1872 = vmatprep.subr.mxu0 0.0
  %1873 = vmatpush1.msra.mxu0 0.0
  %1874 = vmatprep.subr.mxu0 0.0
  %1875 = vmatpush1.msra.mxu0 0.0
  %1876 = vmatprep.subr.mxu0 0.0
  %1877 = vmatpush1.msra.mxu0 0.0
  %1878 = vmatprep.subr.mxu0 0.0
  %1879 = vmatpush1.msra.mxu0 0.0
  %1880 = vmatprep.subr.mxu0 0.0
  %1881 = vmatpush1.msra.mxu0 0.0
  %1882 = vmatprep.subr.mxu0 0.0
  %1883 = vmatpush1.msra.mxu0 0.0
  %1884 = vmatprep.subr.mxu0 0.0
  %1885 = vmatpush1.msra.mxu0 0.0
  %1886 = vmatprep.subr.mxu0 0.0
  %1887 = vmatpush1.msra.mxu0 0.0
  %1888 = vmatprep.subr.mxu0 0.0
  %1889 = vmatpush1.msra.mxu0 0.0
  %1890 = vmatprep.subr.mxu0 0.0
  %1891 = vmatpush1.msra.mxu0 0.0
  %1892 = vmatprep.subr.mxu0 0.0
  %1893 = vmatpush1.msra.mxu0 0.0
  %1894 = vmatprep.subr.mxu0 0.0
  %1895 = vmatpush1.msra.mxu0 0.0
  %1896 = vmatprep.subr.mxu0 0.0
  %1897 = vmatpush1.msra.mxu0 0.0
  %1898 = vmatprep.subr.mxu0 0.0
  %1899 = vmatpush1.msra.mxu0 0.0
  %1900 = vmatprep.subr.mxu0 0.0
  %1901 = vmatpush1.msra.mxu0 0.0
  %1902 = vmatprep.subr.mxu0 0.0
  %1903 = vmatpush1.msra.mxu0 0.0
  %1904 = vmatprep.subr.mxu0 0.0
  %1905 = vmatpush1.msra.mxu0 0.0
  %1906 = vmatprep.subr.mxu0 0.0
  %1907 = vmatpush1.msra.mxu0 0.0
  %1908 = vmatprep.subr.mxu0 0.0
  %1909 = vmatpush1.msra.mxu0 0.0
  %1910 = vmatprep.subr.mxu0 0.0
  %1911 = vmatpush1.msra.mxu0 0.0
  %1912 = vmatprep.subr.mxu0 0.0
  %1913 = vmatpush1.msra.mxu0 0.0
  %1914 = vmatprep.subr.mxu0 0.0
  %1915 = vmatpush1.msra.mxu0 0.0
  %1916 = vmatprep.subr.mxu0 0.0
  %1917 = vmatpush1.msra.mxu0 0.0
  %1918 = vmatprep.subr.mxu0 0.0
  %1919 = vmatpush1.msra.mxu0 0.0
  %1920 = vmatprep.mubr.f32.mxu0 0.0
  %1921 = vmatmul.mubr.f32.gmra.mrb[0].mxu0 %v1809
  %v1922 = vpop.f32.mrb[0].mxu0
  %v1923 = vadd.f32 0.0, %v1922
  %v1924 = vpop.f32.mrb[0].mxu0
  %v1925 = vadd.f32 0.0, %v1924
  %1926 = vmatprep.mubr.f32.mxu0 0.0
  %1927 = vmatmul.mubr.f32.gmra.mrb[0].mxu0 %v1812
  %v1928 = vpop.f32.mrb[0].mxu0
  %v1929 = vadd.f32 0.0, %v1928
  %v1930 = vpop.f32.mrb[0].mxu0
  %v1931 = vadd.f32 0.0, %v1930
  %1932 = vmatprep.mubr.f32.mxu0 0.0
  %1933 = vmatmul.mubr.f32.gmra.mrb[0].mxu0 %v1815
  %v1934 = vpop.f32.mrb[0].mxu0
  %v1935 = vadd.f32 0.0, %v1934
  %v1936 = vpop.f32.mrb[0].mxu0
  %v1937 = vadd.f32 0.0, %v1936
  %1938 = vmatprep.mubr.f32.mxu0 0.0
  %1939 = vmatmul.mubr.f32.gmra.mrb[0].mxu0 %v1818
  %v1940 = vpop.f32.mrb[0].mxu0
  %v1941 = vadd.f32 0.0, %v1940
  %v1942 = vpop.f32.mrb[0].mxu0
  %v1943 = vadd.f32 0.0, %v1942
  %1944 = vmatprep.mubr.f32.mxu0 0.0
  %1945 = vmatmul.mubr.f32.gmra.mrb[0].mxu0 %v1821
  %v1946 = vpop.f32.mrb[0].mxu0
  %v1947 = vadd.f32 0.0, %v1946
  %v1948 = vpop.f32.mrb[0].mxu0
  %v1949 = vadd.f32 0.0, %v1948
  %1950 = vmatprep.mubr.f32.mxu0 0.0
  %1951 = vmatmul.mubr.f32.gmra.mrb[0].mxu0 %v1824
  %v1952 = vpop.f32.mrb[0].mxu0
  %v1953 = vadd.f32 0.0, %v1952
  %v1954 = vpop.f32.mrb[0].mxu0
  %v1955 = vadd.f32 0.0, %v1954
  %1956 = vmatprep.mubr.f32.mxu0 0.0
  %1957 = vmatmul.mubr.f32.gmra.mrb[0].mxu0 %v1827
  %v1958 = vpop.f32.mrb[0].mxu0
  %v1959 = vadd.f32 0.0, %v1958
  %v1960 = vpop.f32.mrb[0].mxu0
  %v1961 = vadd.f32 0.0, %v1960
  %1962 = vmatprep.mubr.f32.mxu0 0.0
  %1963 = vmatmul.mubr.f32.gmra.mrb[0].mxu0 %v1830
  %v1964 = vpop.f32.mrb[0].mxu0
  %v1965 = vadd.f32 0.0, %v1964
  %v1966 = vpop.f32.mrb[0].mxu0
  %v1967 = vadd.f32 0.0, %v1966
  %1968 = vmatprep.mubr.f32.mxu0 0.0
  %1969 = vmatmul.mubr.f32.gmra.mrb[0].mxu0 %v1833
  %v1970 = vpop.f32.mrb[0].mxu0
  %v1971 = vadd.f32 0.0, %v1970
  %v1972 = vpop.f32.mrb[0].mxu0
  %v1973 = vadd.f32 0.0, %v1972
  %1974 = vmatprep.mubr.f32.mxu0 0.0
  %1975 = vmatmul.mubr.f32.gmra.mrb[0].mxu0 %v1836
  %v1976 = vpop.f32.mrb[0].mxu0
  %v1977 = vadd.f32 0.0, %v1976
  %v1978 = vpop.f32.mrb[0].mxu0
  %v1979 = vadd.f32 0.0, %v1978
  %1980 = vmatprep.mubr.f32.mxu0 0.0
  %1981 = vmatmul.mubr.f32.gmra.mrb[0].mxu0 %v1839
  %v1982 = vpop.f32.mrb[0].mxu0
  %v1983 = vadd.f32 0.0, %v1982
  %v1984 = vpop.f32.mrb[0].mxu0
  %v1985 = vadd.f32 0.0, %v1984
  %1986 = vmatprep.mubr.f32.mxu0 0.0
  %1987 = vmatmul.mubr.f32.gmra.mrb[0].mxu0 %v1842
  %v1988 = vpop.f32.mrb[0].mxu0
  %v1989 = vadd.f32 0.0, %v1988
  %v1990 = vpop.f32.mrb[0].mxu0
  %v1991 = vadd.f32 0.0, %v1990
  %1992 = vmatprep.mubr.f32.mxu0 0.0
  %1993 = vmatmul.mubr.f32.gmra.mrb[0].mxu0 %v1845
  %v1994 = vpop.f32.mrb[0].mxu0
  %v1995 = vadd.f32 0.0, %v1994
  %v1996 = vpop.f32.mrb[0].mxu0
  %v1997 = vadd.f32 0.0, %v1996
  %1998 = vmatprep.mubr.f32.mxu0 0.0
  %1999 = vmatmul.mubr.f32.gmra.mrb[0].mxu0 %v1848
  %v2000 = vpop.f32.mrb[0].mxu0
  %v2001 = vadd.f32 0.0, %v2000
  %v2002 = vpop.f32.mrb[0].mxu0
  %v2003 = vadd.f32 0.0, %v2002
  %2004 = vmatprep.mubr.f32.mxu0 0.0
  %2005 = vmatmul.mubr.f32.gmra.mrb[0].mxu0 %v1851
  %v2006 = vpop.f32.mrb[0].mxu0
  %v2007 = vadd.f32 0.0, %v2006
  %v2008 = vpop.f32.mrb[0].mxu0
  %v2009 = vadd.f32 0.0, %v2008
  %2010 = vmatprep.mubr.f32.mxu0 0.0
  %2011 = vmatmul.mubr.f32.gmra.mrb[0].mxu0 %v1854
  %v2012 = vpop.f32.mrb[0].mxu0
  %v2013 = vadd.f32 0.0, %v2012
  %v2014 = vpop.f32.mrb[0].mxu0
  %v2015 = vadd.f32 0.0, %v2014
  %2016 = vdwg.mxu0
  %v2017 = vmul.f32 %v1710, %v1923
  %v2018 = vmul.f32 %v1712, %v1925
  %v2019 = vmul.f32 %v1716, %v1929
  %v2020 = vmul.f32 %v1718, %v1931
  %v2021 = vmul.f32 %v1722, %v1935
  %v2022 = vmul.f32 %v1724, %v1937
  %v2023 = vmul.f32 %v1728, %v1941
  %v2024 = vmul.f32 %v1730, %v1943
  %v2025 = vmul.f32 %v1734, %v1947
  %v2026 = vmul.f32 %v1736, %v1949
  %v2027 = vmul.f32 %v1740, %v1953
  %v2028 = vmul.f32 %v1742, %v1955
  %v2029 = vmul.f32 %v1746, %v1959
  %v2030 = vmul.f32 %v1748, %v1961
  %v2031 = vmul.f32 %v1752, %v1965
  %v2032 = vmul.f32 %v1754, %v1967
  %v2033 = vmul.f32 %v1758, %v1971
  %v2034 = vmul.f32 %v1760, %v1973
  %v2035 = vmul.f32 %v1764, %v1977
  %v2036 = vmul.f32 %v1766, %v1979
  %v2037 = vmul.f32 %v1770, %v1983
  %v2038 = vmul.f32 %v1772, %v1985
  %v2039 = vmul.f32 %v1776, %v1989
  %v2040 = vmul.f32 %v1778, %v1991
  %v2041 = vmul.f32 %v1782, %v1995
  %v2042 = vmul.f32 %v1784, %v1997
  %v2043 = vmul.f32 %v1788, %v2001
  %v2044 = vmul.f32 %v1790, %v2003
  %v2045 = vmul.f32 %v1794, %v2007
  %v2046 = vmul.f32 %v1796, %v2009
  %v2047 = vmul.f32 %v1800, %v2013
  %v2048 = vmul.f32 %v1802, %v2015
  %2049 = vst [vmem:[#allocation5] sm:$0xff] %v2017
  %2050 = vst [vmem:[#allocation5 + $0x8] sm:$0xff] %v2018
  %2051 = vst [vmem:[#allocation5 + $0x10] sm:$0xff] %v2019
  %2052 = vst [vmem:[#allocation5 + $0x18] sm:$0xff] %v2020
  %2053 = vst [vmem:[#allocation5 + $0x20] sm:$0xff] %v2021
  %2054 = vst [vmem:[#allocation5 + $0x28] sm:$0xff] %v2022
  %2055 = vst [vmem:[#allocation5 + $0x30] sm:$0xff] %v2023
  %2056 = vst [vmem:[#allocation5 + $0x38] sm:$0xff] %v2024
  %2057 = vst [vmem:[#allocation5 + $0x40] sm:$0xff] %v2025
  %2058 = vst [vmem:[#allocation5 + $0x48] sm:$0xff] %v2026
  %2059 = vst [vmem:[#allocation5 + $0x50] sm:$0xff] %v2027
  %2060 = vst [vmem:[#allocation5 + $0x58] sm:$0xff] %v2028
  %2061 = vst [vmem:[#allocation5 + $0x60] sm:$0xff] %v2029
  %2062 = vst [vmem:[#allocation5 + $0x68] sm:$0xff] %v2030
  %2063 = vst [vmem:[#allocation5 + $0x70] sm:$0xff] %v2031
  %2064 = vst [vmem:[#allocation5 + $0x78] sm:$0xff] %v2032
  %2065 = vst [vmem:[#allocation5 + $0x80] sm:$0xff] %v2033
  %2066 = vst [vmem:[#allocation5 + $0x88] sm:$0xff] %v2034
  %2067 = vst [vmem:[#allocation5 + $0x90] sm:$0xff] %v2035
  %2068 = vst [vmem:[#allocation5 + $0x98] sm:$0xff] %v2036
  %2069 = vst [vmem:[#allocation5 + $0xa0] sm:$0xff] %v2037
  %2070 = vst [vmem:[#allocation5 + $0xa8] sm:$0xff] %v2038
  %2071 = vst [vmem:[#allocation5 + $0xb0] sm:$0xff] %v2039
  %2072 = vst [vmem:[#allocation5 + $0xb8] sm:$0xff] %v2040
  %2073 = vst [vmem:[#allocation5 + $0xc0] sm:$0xff] %v2041
  %2074 = vst [vmem:[#allocation5 + $0xc8] sm:$0xff] %v2042
  %2075 = vst [vmem:[#allocation5 + $0xd0] sm:$0xff] %v2043
  %2076 = vst [vmem:[#allocation5 + $0xd8] sm:$0xff] %v2044
  %2077 = vst [vmem:[#allocation5 + $0xe0] sm:$0xff] %v2045
  %2078 = vst [vmem:[#allocation5 + $0xe8] sm:$0xff] %v2046
  %2079 = vst [vmem:[#allocation5 + $0xf0] sm:$0xff] %v2047
  %2080 = vst [vmem:[#allocation5 + $0xf8] sm:$0xff] %v2048
  %v2081 = vld [vmem:[#allocation2] sm:$0x3]
  loop: start=0, step=1, limit=16
  $region66: #{tpu_custom_call.1} parent=0 // loop_pre_header
    _
  $region67: #{tpu_custom_call.1} parent=0 // loop_header
    %s2083 = sphi 0, %s2087
    %p2084 = scmp.ge.s32.totalorder %s2083, 16
    %v2088 = vphi %v2081, %v2226
  $region68: #{tpu_custom_call.1} parent=0 // loop_header_branch
    %2086 = sbr.rel (%p2084) target = $region72
  $region69: #{tpu_custom_call.1} parent=0 // loop_body
    %s2089 = smul.u32 %s2083, 8
    %s2090 = sshra.s32 %s2089, 3
    %s2091 = sand.u32 %s2089, 7
    %s2092 = smul.u32 %s2090, 2
    %s2093 = smul.addr %s2092, 8
    %s2094 = scalar_lea.vmem [#allocation4], %s2093
    %v2095 = vld [vmem:[%s2094] ss:$8 sm:$0x3]
    %s2096 = smul.addr %s2092, 8
    %s2097 = scalar_lea.vmem [#allocation5], %s2096
    %v2098 = vld [vmem:[%s2097] ss:$8 sm:$0x3]
    %s2099 = sadd.s32 %s2089, 1
    %s2100 = sshra.s32 %s2099, 3
    %s2101 = sand.u32 %s2099, 7
    %s2102 = sshra.s32 %s2099, 3
    %s2103 = sand.u32 %s2099, 7
    %s2104 = smul.u32 %s2100, 2
    %s2105 = smul.u32 %s2104, 8
    %s2106 = sadd.s32 %s2105, %s2103
    %s2107 = scalar_lea.vmem [#allocation4], %s2106
    %v2108 = vld [vmem:[%s2107] ss:$8 sm:$0x3]
    %s2109 = scalar_lea.vmem [#allocation5], %s2106
    %v2110 = vld [vmem:[%s2109] ss:$8 sm:$0x3]
    %v2111 = vmul.f32 %v2095, %v2088
    %v2112 = vadd.f32 %v2111, %v2098
    %v2113 = vmul.f32 %v2108, %v2095
    %v2114 = vmul.f32 %v2113, %v2088
    %v2115 = vmul.f32 %v2108, %v2098
    %v2116 = vadd.f32 %v2115, %v2110
    %v2117 = vadd.f32 %v2114, %v2116
    %v2118 = vlaneseq
    %vm2119 = vcmp.ge.s32.totalorder %v2118, 0
    %vm2120 = vcmp.lt.s32.totalorder %v2118, 256
    %vm2121 = vmand %vm2119, %vm2120
    %2122 = vst.msk [vmem:[%s2097] ss:$8 sm:$0x3] %vm2121, %v2112
    %2123 = vst.msk [vmem:[%s2097] ss:$8 sm:$0x0] %vm2121, %v2112
    %2124 = vst.msk [vmem:[%s2109] ss:$8 sm:$0x3] %vm2121, %v2117
    %2125 = vst.msk [vmem:[%s2109] ss:$8 sm:$0x0] %vm2121, %v2117
    %s2126 = sadd.s32 %s2089, 2
    %s2127 = sshra.s32 %s2126, 3
    %s2128 = sand.u32 %s2126, 7
    %s2129 = sshra.s32 %s2126, 3
    %s2130 = sand.u32 %s2126, 7
    %s2131 = smul.u32 %s2127, 2
    %s2132 = smul.u32 %s2131, 8
    %s2133 = sadd.s32 %s2132, %s2130
    %s2134 = scalar_lea.vmem [#allocation4], %s2133
    %v2135 = vld [vmem:[%s2134] ss:$8 sm:$0x3]
    %s2136 = scalar_lea.vmem [#allocation5], %s2133
    %v2137 = vld [vmem:[%s2136] ss:$8 sm:$0x3]
    %s2138 = sadd.s32 %s2089, 3
    %s2139 = sshra.s32 %s2138, 3
    %s2140 = sand.u32 %s2138, 7
    %s2141 = sshra.s32 %s2138, 3
    %s2142 = sand.u32 %s2138, 7
    %s2143 = smul.u32 %s2139, 2
    %s2144 = smul.u32 %s2143, 8
    %s2145 = sadd.s32 %s2144, %s2142
    %s2146 = scalar_lea.vmem [#allocation4], %s2145
    %v2147 = vld [vmem:[%s2146] ss:$8 sm:$0x3]
    %s2148 = scalar_lea.vmem [#allocation5], %s2145
    %v2149 = vld [vmem:[%s2148] ss:$8 sm:$0x3]
    %v2150 = vmul.f32 %v2135, %v2117
    %v2151 = vadd.f32 %v2150, %v2137
    %v2152 = vmul.f32 %v2147, %v2135
    %v2153 = vmul.f32 %v2152, %v2117
    %v2154 = vmul.f32 %v2147, %v2137
    %v2155 = vadd.f32 %v2154, %v2149
    %v2156 = vadd.f32 %v2153, %v2155
    %2157 = vst.msk [vmem:[%s2136] ss:$8 sm:$0x3] %vm2121, %v2151
    %2158 = vst.msk [vmem:[%s2136] ss:$8 sm:$0x0] %vm2121, %v2151
    %2159 = vst.msk [vmem:[%s2148] ss:$8 sm:$0x3] %vm2121, %v2156
    %2160 = vst.msk [vmem:[%s2148] ss:$8 sm:$0x0] %vm2121, %v2156
    %s2161 = sadd.s32 %s2089, 4
    %s2162 = sshra.s32 %s2161, 3
    %s2163 = sand.u32 %s2161, 7
    %s2164 = sshra.s32 %s2161, 3
    %s2165 = sand.u32 %s2161, 7
    %s2166 = smul.u32 %s2162, 2
    %s2167 = smul.u32 %s2166, 8
    %s2168 = sadd.s32 %s2167, %s2165
    %s2169 = scalar_lea.vmem [#allocation4], %s2168
    %v2170 = vld [vmem:[%s2169] ss:$8 sm:$0x3]
    %s2171 = scalar_lea.vmem [#allocation5], %s2168
    %v2172 = vld [vmem:[%s2171] ss:$8 sm:$0x3]
    %s2173 = sadd.s32 %s2089, 5
    %s2174 = sshra.s32 %s2173, 3
    %s2175 = sand.u32 %s2173, 7
    %s2176 = sshra.s32 %s2173, 3
    %s2177 = sand.u32 %s2173, 7
    %s2178 = smul.u32 %s2174, 2
    %s2179 = smul.u32 %s2178, 8
    %s2180 = sadd.s32 %s2179, %s2177
    %s2181 = scalar_lea.vmem [#allocation4], %s2180
    %v2182 = vld [vmem:[%s2181] ss:$8 sm:$0x3]
    %s2183 = scalar_lea.vmem [#allocation5], %s2180
    %v2184 = vld [vmem:[%s2183] ss:$8 sm:$0x3]
    %v2185 = vmul.f32 %v2170, %v2156
    %v2186 = vadd.f32 %v2185, %v2172
    %v2187 = vmul.f32 %v2182, %v2170
    %v2188 = vmul.f32 %v2187, %v2156
    %v2189 = vmul.f32 %v2182, %v2172
    %v2190 = vadd.f32 %v2189, %v2184
    %v2191 = vadd.f32 %v2188, %v2190
    %2192 = vst.msk [vmem:[%s2171] ss:$8 sm:$0x3] %vm2121, %v2186
    %2193 = vst.msk [vmem:[%s2171] ss:$8 sm:$0x0] %vm2121, %v2186
    %2194 = vst.msk [vmem:[%s2183] ss:$8 sm:$0x3] %vm2121, %v2191
    %2195 = vst.msk [vmem:[%s2183] ss:$8 sm:$0x0] %vm2121, %v2191
    %s2196 = sadd.s32 %s2089, 6
    %s2197 = sshra.s32 %s2196, 3
    %s2198 = sand.u32 %s2196, 7
    %s2199 = sshra.s32 %s2196, 3
    %s2200 = sand.u32 %s2196, 7
    %s2201 = smul.u32 %s2197, 2
    %s2202 = smul.u32 %s2201, 8
    %s2203 = sadd.s32 %s2202, %s2200
    %s2204 = scalar_lea.vmem [#allocation4], %s2203
    %v2205 = vld [vmem:[%s2204] ss:$8 sm:$0x3]
    %s2206 = scalar_lea.vmem [#allocation5], %s2203
    %v2207 = vld [vmem:[%s2206] ss:$8 sm:$0x3]
    %s2208 = sadd.s32 %s2089, 7
    %s2209 = sshra.s32 %s2208, 3
    %s2210 = sand.u32 %s2208, 7
    %s2211 = sshra.s32 %s2208, 3
    %s2212 = sand.u32 %s2208, 7
    %s2213 = smul.u32 %s2209, 2
    %s2214 = smul.u32 %s2213, 8
    %s2215 = sadd.s32 %s2214, %s2212
    %s2216 = scalar_lea.vmem [#allocation4], %s2215
    %v2217 = vld [vmem:[%s2216] ss:$8 sm:$0x3]
    %s2218 = scalar_lea.vmem [#allocation5], %s2215
    %v2219 = vld [vmem:[%s2218] ss:$8 sm:$0x3]
    %v2220 = vmul.f32 %v2205, %v2191
    %v2221 = vadd.f32 %v2220, %v2207
    %v2222 = vmul.f32 %v2217, %v2205
    %v2223 = vmul.f32 %v2222, %v2191
    %v2224 = vmul.f32 %v2217, %v2207
    %v2225 = vadd.f32 %v2224, %v2219
    %v2226 = vadd.f32 %v2223, %v2225
    %2227 = vst.msk [vmem:[%s2206] ss:$8 sm:$0x3] %vm2121, %v2221
    %2228 = vst.msk [vmem:[%s2206] ss:$8 sm:$0x0] %vm2121, %v2221
    %2229 = vst.msk [vmem:[%s2218] ss:$8 sm:$0x3] %vm2121, %v2226
    %2230 = vst.msk [vmem:[%s2218] ss:$8 sm:$0x0] %vm2121, %v2226
  $region70: #{tpu_custom_call.1} parent=0 // loop_footer
    %s2087 = sadd.s32 1, %s2083
  $region71: #{tpu_custom_call.1} parent=0 // loop_footer_branch
    %2082 = sbr.rel target = $region67
  $region72: #{tpu_custom_call.1} parent=0 // loop_exit
    _
  %v2231 = vlaneseq
  %vm2232 = vcmp.ge.s32.totalorder %v2231, 0
  %vm2233 = vcmp.lt.s32.totalorder %v2231, 256
  %vm2234 = vmand %vm2232, %vm2233
  %2235 = vst.msk [vmem:[#allocation2] sm:$0x3] %vm2234, %v2088
  %v2236 = vld [vmem:[%s11] sm:$0xff]
  %v2237 = vld [vmem:[%s11 + $0x8] sm:$0xff]
  %v2238 = vld [vmem:[%s11 + $0x10] sm:$0xff]
  %v2239 = vld [vmem:[%s11 + $0x18] sm:$0xff]
  %v2241 = vsel %vm790, %v1204, 0
  %v2244 = vsel %vm790, %v1207, 0
  %v2247 = vsel %vm790, %v1212, 0
  %v2250 = vsel %vm790, %v1215, 0
  %v2253 = vsel %vm790, %v1220, 0
  %v2256 = vsel %vm790, %v1223, 0
  %v2259 = vsel %vm790, %v1228, 0
  %v2262 = vsel %vm790, %v1231, 0
  %v2265 = vsel %vm790, %v1236, 0
  %v2268 = vsel %vm790, %v1239, 0
  %v2271 = vsel %vm790, %v1244, 0
  %v2274 = vsel %vm790, %v1247, 0
  %v2277 = vsel %vm790, %v1252, 0
  %v2280 = vsel %vm790, %v1255, 0
  %v2283 = vsel %vm790, %v1260, 0
  %v2286 = vsel %vm790, %v1263, 0
  %2288 = vmatprep.subr.mxu0 %v2237
  %2289 = vmatpush1.msra.mxu0 %v2236
  %2290 = vmatprep.subr.mxu0 %v2239
  %2291 = vmatpush1.msra.mxu0 %v2238
  %2292 = vmatprep.subr.mxu0 0.0
  %2293 = vmatpush1.msra.mxu0 0.0
  %2294 = vmatprep.subr.mxu0 0.0
  %2295 = vmatpush1.msra.mxu0 0.0
  %2296 = vmatprep.subr.mxu0 0.0
  %2297 = vmatpush1.msra.mxu0 0.0
  %2298 = vmatprep.subr.mxu0 0.0
  %2299 = vmatpush1.msra.mxu0 0.0
  %2300 = vmatprep.subr.mxu0 0.0
  %2301 = vmatpush1.msra.mxu0 0.0
  %2302 = vmatprep.subr.mxu0 0.0
  %2303 = vmatpush1.msra.mxu0 0.0
  %2304 = vmatprep.subr.mxu0 0.0
  %2305 = vmatpush1.msra.mxu0 0.0
  %2306 = vmatprep.subr.mxu0 0.0
  %2307 = vmatpush1.msra.mxu0 0.0
  %2308 = vmatprep.subr.mxu0 0.0
  %2309 = vmatpush1.msra.mxu0 0.0
  %2310 = vmatprep.subr.mxu0 0.0
  %2311 = vmatpush1.msra.mxu0 0.0
  %2312 = vmatprep.subr.mxu0 0.0
  %2313 = vmatpush1.msra.mxu0 0.0
  %2314 = vmatprep.subr.mxu0 0.0
  %2315 = vmatpush1.msra.mxu0 0.0
  %2316 = vmatprep.subr.mxu0 0.0
  %2317 = vmatpush1.msra.mxu0 0.0
  %2318 = vmatprep.subr.mxu0 0.0
  %2319 = vmatpush1.msra.mxu0 0.0
  %2320 = vmatprep.subr.mxu0 0.0
  %2321 = vmatpush1.msra.mxu0 0.0
  %2322 = vmatprep.subr.mxu0 0.0
  %2323 = vmatpush1.msra.mxu0 0.0
  %2324 = vmatprep.subr.mxu0 0.0
  %2325 = vmatpush1.msra.mxu0 0.0
  %2326 = vmatprep.subr.mxu0 0.0
  %2327 = vmatpush1.msra.mxu0 0.0
  %2328 = vmatprep.subr.mxu0 0.0
  %2329 = vmatpush1.msra.mxu0 0.0
  %2330 = vmatprep.subr.mxu0 0.0
  %2331 = vmatpush1.msra.mxu0 0.0
  %2332 = vmatprep.subr.mxu0 0.0
  %2333 = vmatpush1.msra.mxu0 0.0
  %2334 = vmatprep.subr.mxu0 0.0
  %2335 = vmatpush1.msra.mxu0 0.0
  %2336 = vmatprep.subr.mxu0 0.0
  %2337 = vmatpush1.msra.mxu0 0.0
  %2338 = vmatprep.subr.mxu0 0.0
  %2339 = vmatpush1.msra.mxu0 0.0
  %2340 = vmatprep.subr.mxu0 0.0
  %2341 = vmatpush1.msra.mxu0 0.0
  %2342 = vmatprep.subr.mxu0 0.0
  %2343 = vmatpush1.msra.mxu0 0.0
  %2344 = vmatprep.subr.mxu0 0.0
  %2345 = vmatpush1.msra.mxu0 0.0
  %2346 = vmatprep.subr.mxu0 0.0
  %2347 = vmatpush1.msra.mxu0 0.0
  %2348 = vmatprep.subr.mxu0 0.0
  %2349 = vmatpush1.msra.mxu0 0.0
  %2350 = vmatprep.subr.mxu0 0.0
  %2351 = vmatpush1.msra.mxu0 0.0
  %2352 = vmatprep.mubr.f32.mxu0 0.0
  %2353 = vmatmul.mubr.f32.gmra.mrb[0].mxu0 %v2241
  %v2354 = vpop.f32.mrb[0].mxu0
  %v2355 = vadd.f32 0.0, %v2354
  %v2356 = vpop.f32.mrb[0].mxu0
  %v2357 = vadd.f32 0.0, %v2356
  %2358 = vmatprep.mubr.f32.mxu0 0.0
  %2359 = vmatmul.mubr.f32.gmra.mrb[0].mxu0 %v2244
  %v2360 = vpop.f32.mrb[0].mxu0
  %v2361 = vadd.f32 0.0, %v2360
  %v2362 = vpop.f32.mrb[0].mxu0
  %v2363 = vadd.f32 0.0, %v2362
  %2364 = vmatprep.mubr.f32.mxu0 0.0
  %2365 = vmatmul.mubr.f32.gmra.mrb[0].mxu0 %v2247
  %v2366 = vpop.f32.mrb[0].mxu0
  %v2367 = vadd.f32 0.0, %v2366
  %v2368 = vpop.f32.mrb[0].mxu0
  %v2369 = vadd.f32 0.0, %v2368
  %2370 = vmatprep.mubr.f32.mxu0 0.0
  %2371 = vmatmul.mubr.f32.gmra.mrb[0].mxu0 %v2250
  %v2372 = vpop.f32.mrb[0].mxu0
  %v2373 = vadd.f32 0.0, %v2372
  %v2374 = vpop.f32.mrb[0].mxu0
  %v2375 = vadd.f32 0.0, %v2374
  %2376 = vmatprep.mubr.f32.mxu0 0.0
  %2377 = vmatmul.mubr.f32.gmra.mrb[0].mxu0 %v2253
  %v2378 = vpop.f32.mrb[0].mxu0
  %v2379 = vadd.f32 0.0, %v2378
  %v2380 = vpop.f32.mrb[0].mxu0
  %v2381 = vadd.f32 0.0, %v2380
  %2382 = vmatprep.mubr.f32.mxu0 0.0
  %2383 = vmatmul.mubr.f32.gmra.mrb[0].mxu0 %v2256
  %v2384 = vpop.f32.mrb[0].mxu0
  %v2385 = vadd.f32 0.0, %v2384
  %v2386 = vpop.f32.mrb[0].mxu0
  %v2387 = vadd.f32 0.0, %v2386
  %2388 = vmatprep.mubr.f32.mxu0 0.0
  %2389 = vmatmul.mubr.f32.gmra.mrb[0].mxu0 %v2259
  %v2390 = vpop.f32.mrb[0].mxu0
  %v2391 = vadd.f32 0.0, %v2390
  %v2392 = vpop.f32.mrb[0].mxu0
  %v2393 = vadd.f32 0.0, %v2392
  %2394 = vmatprep.mubr.f32.mxu0 0.0
  %2395 = vmatmul.mubr.f32.gmra.mrb[0].mxu0 %v2262
  %v2396 = vpop.f32.mrb[0].mxu0
  %v2397 = vadd.f32 0.0, %v2396
  %v2398 = vpop.f32.mrb[0].mxu0
  %v2399 = vadd.f32 0.0, %v2398
  %2400 = vmatprep.mubr.f32.mxu0 0.0
  %2401 = vmatmul.mubr.f32.gmra.mrb[0].mxu0 %v2265
  %v2402 = vpop.f32.mrb[0].mxu0
  %v2403 = vadd.f32 0.0, %v2402
  %v2404 = vpop.f32.mrb[0].mxu0
  %v2405 = vadd.f32 0.0, %v2404
  %2406 = vmatprep.mubr.f32.mxu0 0.0
  %2407 = vmatmul.mubr.f32.gmra.mrb[0].mxu0 %v2268
  %v2408 = vpop.f32.mrb[0].mxu0
  %v2409 = vadd.f32 0.0, %v2408
  %v2410 = vpop.f32.mrb[0].mxu0
  %v2411 = vadd.f32 0.0, %v2410
  %2412 = vmatprep.mubr.f32.mxu0 0.0
  %2413 = vmatmul.mubr.f32.gmra.mrb[0].mxu0 %v2271
  %v2414 = vpop.f32.mrb[0].mxu0
  %v2415 = vadd.f32 0.0, %v2414
  %v2416 = vpop.f32.mrb[0].mxu0
  %v2417 = vadd.f32 0.0, %v2416
  %2418 = vmatprep.mubr.f32.mxu0 0.0
  %2419 = vmatmul.mubr.f32.gmra.mrb[0].mxu0 %v2274
  %v2420 = vpop.f32.mrb[0].mxu0
  %v2421 = vadd.f32 0.0, %v2420
  %v2422 = vpop.f32.mrb[0].mxu0
  %v2423 = vadd.f32 0.0, %v2422
  %2424 = vmatprep.mubr.f32.mxu0 0.0
  %2425 = vmatmul.mubr.f32.gmra.mrb[0].mxu0 %v2277
  %v2426 = vpop.f32.mrb[0].mxu0
  %v2427 = vadd.f32 0.0, %v2426
  %v2428 = vpop.f32.mrb[0].mxu0
  %v2429 = vadd.f32 0.0, %v2428
  %2430 = vmatprep.mubr.f32.mxu0 0.0
  %2431 = vmatmul.mubr.f32.gmra.mrb[0].mxu0 %v2280
  %v2432 = vpop.f32.mrb[0].mxu0
  %v2433 = vadd.f32 0.0, %v2432
  %v2434 = vpop.f32.mrb[0].mxu0
  %v2435 = vadd.f32 0.0, %v2434
  %2436 = vmatprep.mubr.f32.mxu0 0.0
  %2437 = vmatmul.mubr.f32.gmra.mrb[0].mxu0 %v2283
  %v2438 = vpop.f32.mrb[0].mxu0
  %v2439 = vadd.f32 0.0, %v2438
  %v2440 = vpop.f32.mrb[0].mxu0
  %v2441 = vadd.f32 0.0, %v2440
  %2442 = vmatprep.mubr.f32.mxu0 0.0
  %2443 = vmatmul.mubr.f32.gmra.mrb[0].mxu0 %v2286
  %v2444 = vpop.f32.mrb[0].mxu0
  %v2445 = vadd.f32 0.0, %v2444
  %v2446 = vpop.f32.mrb[0].mxu0
  %v2447 = vadd.f32 0.0, %v2446
  %2448 = vdwg.mxu0
  %v2449 = vld [vmem:[#allocation5] sm:$0xff]
  %v2450 = vld [vmem:[#allocation5 + $0x8] sm:$0xff]
  %v2451 = vld [vmem:[#allocation5 + $0x10] sm:$0xff]
  %v2452 = vld [vmem:[#allocation5 + $0x18] sm:$0xff]
  %v2453 = vld [vmem:[#allocation5 + $0x20] sm:$0xff]
  %v2454 = vld [vmem:[#allocation5 + $0x28] sm:$0xff]
  %v2455 = vld [vmem:[#allocation5 + $0x30] sm:$0xff]
  %v2456 = vld [vmem:[#allocation5 + $0x38] sm:$0xff]
  %v2457 = vld [vmem:[#allocation5 + $0x40] sm:$0xff]
  %v2458 = vld [vmem:[#allocation5 + $0x48] sm:$0xff]
  %v2459 = vld [vmem:[#allocation5 + $0x50] sm:$0xff]
  %v2460 = vld [vmem:[#allocation5 + $0x58] sm:$0xff]
  %v2461 = vld [vmem:[#allocation5 + $0x60] sm:$0xff]
  %v2462 = vld [vmem:[#allocation5 + $0x68] sm:$0xff]
  %v2463 = vld [vmem:[#allocation5 + $0x70] sm:$0xff]
  %v2464 = vld [vmem:[#allocation5 + $0x78] sm:$0xff]
  %v2465 = vld [vmem:[#allocation5 + $0x80] sm:$0xff]
  %v2466 = vld [vmem:[#allocation5 + $0x88] sm:$0xff]
  %v2467 = vld [vmem:[#allocation5 + $0x90] sm:$0xff]
  %v2468 = vld [vmem:[#allocation5 + $0x98] sm:$0xff]
  %v2469 = vld [vmem:[#allocation5 + $0xa0] sm:$0xff]
  %v2470 = vld [vmem:[#allocation5 + $0xa8] sm:$0xff]
  %v2471 = vld [vmem:[#allocation5 + $0xb0] sm:$0xff]
  %v2472 = vld [vmem:[#allocation5 + $0xb8] sm:$0xff]
  %v2473 = vld [vmem:[#allocation5 + $0xc0] sm:$0xff]
  %v2474 = vld [vmem:[#allocation5 + $0xc8] sm:$0xff]
  %v2475 = vld [vmem:[#allocation5 + $0xd0] sm:$0xff]
  %v2476 = vld [vmem:[#allocation5 + $0xd8] sm:$0xff]
  %v2477 = vld [vmem:[#allocation5 + $0xe0] sm:$0xff]
  %v2478 = vld [vmem:[#allocation5 + $0xe8] sm:$0xff]
  %v2479 = vld [vmem:[#allocation5 + $0xf0] sm:$0xff]
  %v2480 = vld [vmem:[#allocation5 + $0xf8] sm:$0xff]
  %v2481 = vmul.f32 %v2449, %v2355
  %v2482 = vmul.f32 %v2450, %v2357
  %v2483 = vmul.f32 %v2451, %v2361
  %v2484 = vmul.f32 %v2452, %v2363
  %v2485 = vmul.f32 %v2453, %v2367
  %v2486 = vmul.f32 %v2454, %v2369
  %v2487 = vmul.f32 %v2455, %v2373
  %v2488 = vmul.f32 %v2456, %v2375
  %v2489 = vmul.f32 %v2457, %v2379
  %v2490 = vmul.f32 %v2458, %v2381
  %v2491 = vmul.f32 %v2459, %v2385
  %v2492 = vmul.f32 %v2460, %v2387
  %v2493 = vmul.f32 %v2461, %v2391
  %v2494 = vmul.f32 %v2462, %v2393
  %v2495 = vmul.f32 %v2463, %v2397
  %v2496 = vmul.f32 %v2464, %v2399
  %v2497 = vmul.f32 %v2465, %v2403
  %v2498 = vmul.f32 %v2466, %v2405
  %v2499 = vmul.f32 %v2467, %v2409
  %v2500 = vmul.f32 %v2468, %v2411
  %v2501 = vmul.f32 %v2469, %v2415
  %v2502 = vmul.f32 %v2470, %v2417
  %v2503 = vmul.f32 %v2471, %v2421
  %v2504 = vmul.f32 %v2472, %v2423
  %v2505 = vmul.f32 %v2473, %v2427
  %v2506 = vmul.f32 %v2474, %v2429
  %v2507 = vmul.f32 %v2475, %v2433
  %v2508 = vmul.f32 %v2476, %v2435
  %v2509 = vmul.f32 %v2477, %v2439
  %v2510 = vmul.f32 %v2478, %v2441
  %v2511 = vmul.f32 %v2479, %v2445
  %v2512 = vmul.f32 %v2480, %v2447
  %v2513 = vld [vmem:[%s12] sm:$0xff]
  %v2514 = vld [vmem:[%s12 + $0x8] sm:$0xff]
  %v2515 = vld [vmem:[%s12 + $0x10] sm:$0xff]
  %v2516 = vld [vmem:[%s12 + $0x18] sm:$0xff]
  %v2517 = vld [vmem:[%s12 + $0x20] sm:$0xff]
  %v2518 = vld [vmem:[%s12 + $0x28] sm:$0xff]
  %v2519 = vld [vmem:[%s12 + $0x30] sm:$0xff]
  %v2520 = vld [vmem:[%s12 + $0x38] sm:$0xff]
  %v2521 = vld [vmem:[%s12 + $0x40] sm:$0xff]
  %v2522 = vld [vmem:[%s12 + $0x48] sm:$0xff]
  %v2523 = vld [vmem:[%s12 + $0x50] sm:$0xff]
  %v2524 = vld [vmem:[%s12 + $0x58] sm:$0xff]
  %v2525 = vld [vmem:[%s12 + $0x60] sm:$0xff]
  %v2526 = vld [vmem:[%s12 + $0x68] sm:$0xff]
  %v2527 = vld [vmem:[%s12 + $0x70] sm:$0xff]
  %v2528 = vld [vmem:[%s12 + $0x78] sm:$0xff]
  %v2529 = vld [vmem:[%s12 + $0x80] sm:$0xff]
  %v2530 = vld [vmem:[%s12 + $0x88] sm:$0xff]
  %v2531 = vld [vmem:[%s12 + $0x90] sm:$0xff]
  %v2532 = vld [vmem:[%s12 + $0x98] sm:$0xff]
  %v2533 = vld [vmem:[%s12 + $0xa0] sm:$0xff]
  %v2534 = vld [vmem:[%s12 + $0xa8] sm:$0xff]
  %v2535 = vld [vmem:[%s12 + $0xb0] sm:$0xff]
  %v2536 = vld [vmem:[%s12 + $0xb8] sm:$0xff]
  %v2537 = vld [vmem:[%s12 + $0xc0] sm:$0xff]
  %v2538 = vld [vmem:[%s12 + $0xc8] sm:$0xff]
  %v2539 = vld [vmem:[%s12 + $0xd0] sm:$0xff]
  %v2540 = vld [vmem:[%s12 + $0xd8] sm:$0xff]
  %v2541 = vld [vmem:[%s12 + $0xe0] sm:$0xff]
  %v2542 = vld [vmem:[%s12 + $0xe8] sm:$0xff]
  %v2543 = vld [vmem:[%s12 + $0xf0] sm:$0xff]
  %v2544 = vld [vmem:[%s12 + $0xf8] sm:$0xff]
  %v2545 = vld [vmem:[%s13] sm:$0x1]
  %v2547 = vlaneseq
  %v2548 = vshrl.u32 %v2547, 7
  %v2549 = vsub.s32 0, %v2548
  %v2550 = vrot.slane %v2545, %v2549
  %v2552 = vmul.f32 %v749, %v2550
  %v2553 = vmul.f32 %v750, %v2550
  %v2554 = vmul.f32 %v751, %v2550
  %v2555 = vmul.f32 %v752, %v2550
  %v2556 = vmul.f32 %v753, %v2550
  %v2557 = vmul.f32 %v754, %v2550
  %v2558 = vmul.f32 %v755, %v2550
  %v2559 = vmul.f32 %v756, %v2550
  %v2560 = vmul.f32 %v757, %v2550
  %v2561 = vmul.f32 %v758, %v2550
  %v2562 = vmul.f32 %v759, %v2550
  %v2563 = vmul.f32 %v760, %v2550
  %v2564 = vmul.f32 %v761, %v2550
  %v2565 = vmul.f32 %v762, %v2550
  %v2566 = vmul.f32 %v763, %v2550
  %v2567 = vmul.f32 %v764, %v2550
  %2568 = vmatprep.subr.mxu0 0.0
  %2569 = vmatpush1.msra.mxu0 %v2513
  %2570 = vmatprep.subr.mxu0 0.0
  %2571 = vmatpush1.msra.mxu0 %v2514
  %2572 = vmatprep.subr.mxu0 0.0
  %2573 = vmatpush1.msra.mxu0 %v2515
  %2574 = vmatprep.subr.mxu0 0.0
  %2575 = vmatpush1.msra.mxu0 %v2516
  %2576 = vmatprep.subr.mxu0 0.0
  %2577 = vmatpush1.msra.mxu0 %v2517
  %2578 = vmatprep.subr.mxu0 0.0
  %2579 = vmatpush1.msra.mxu0 %v2518
  %2580 = vmatprep.subr.mxu0 0.0
  %2581 = vmatpush1.msra.mxu0 %v2519
  %2582 = vmatprep.subr.mxu0 0.0
  %2583 = vmatpush1.msra.mxu0 %v2520
  %2584 = vmatprep.subr.mxu0 0.0
  %2585 = vmatpush1.msra.mxu0 %v2521
  %2586 = vmatprep.subr.mxu0 0.0
  %2587 = vmatpush1.msra.mxu0 %v2522
  %2588 = vmatprep.subr.mxu0 0.0
  %2589 = vmatpush1.msra.mxu0 %v2523
  %2590 = vmatprep.subr.mxu0 0.0
  %2591 = vmatpush1.msra.mxu0 %v2524
  %2592 = vmatprep.subr.mxu0 0.0
  %2593 = vmatpush1.msra.mxu0 %v2525
  %2594 = vmatprep.subr.mxu0 0.0
  %2595 = vmatpush1.msra.mxu0 %v2526
  %2596 = vmatprep.subr.mxu0 0.0
  %2597 = vmatpush1.msra.mxu0 %v2527
  %2598 = vmatprep.subr.mxu0 0.0
  %2599 = vmatpush1.msra.mxu0 %v2528
  %2600 = vmatprep.subr.mxu0 0.0
  %2601 = vmatpush1.msra.mxu0 %v2529
  %2602 = vmatprep.subr.mxu0 0.0
  %2603 = vmatpush1.msra.mxu0 %v2530
  %2604 = vmatprep.subr.mxu0 0.0
  %2605 = vmatpush1.msra.mxu0 %v2531
  %2606 = vmatprep.subr.mxu0 0.0
  %2607 = vmatpush1.msra.mxu0 %v2532
  %2608 = vmatprep.subr.mxu0 0.0
  %2609 = vmatpush1.msra.mxu0 %v2533
  %2610 = vmatprep.subr.mxu0 0.0
  %2611 = vmatpush1.msra.mxu0 %v2534
  %2612 = vmatprep.subr.mxu0 0.0
  %2613 = vmatpush1.msra.mxu0 %v2535
  %2614 = vmatprep.subr.mxu0 0.0
  %2615 = vmatpush1.msra.mxu0 %v2536
  %2616 = vmatprep.subr.mxu0 0.0
  %2617 = vmatpush1.msra.mxu0 %v2537
  %2618 = vmatprep.subr.mxu0 0.0
  %2619 = vmatpush1.msra.mxu0 %v2538
  %2620 = vmatprep.subr.mxu0 0.0
  %2621 = vmatpush1.msra.mxu0 %v2539
  %2622 = vmatprep.subr.mxu0 0.0
  %2623 = vmatpush1.msra.mxu0 %v2540
  %2624 = vmatprep.subr.mxu0 0.0
  %2625 = vmatpush1.msra.mxu0 %v2541
  %2626 = vmatprep.subr.mxu0 0.0
  %2627 = vmatpush1.msra.mxu0 %v2542
  %2628 = vmatprep.subr.mxu0 0.0
  %2629 = vmatpush1.msra.mxu0 %v2543
  %2630 = vmatprep.subr.mxu0 0.0
  %2631 = vmatpush1.msra.mxu0 %v2544
  %2632 = vmatprep.mubr.f32.mxu0 %v2482
  %2633 = vmatmul.mubr.f32.gmra.mrb[0].mxu0 %v2481
  %v2634 = vpop.f32.mrb[0].mxu0
  %v2635 = vadd.f32 %v2552, %v2634
  %v2636 = vpop.f32.mrb[0].mxu0
  %2637 = vmatprep.mubr.f32.mxu0 %v2484
  %2638 = vmatmul.mubr.f32.gmra.mrb[0].mxu0 %v2483
  %v2639 = vpop.f32.mrb[0].mxu0
  %v2640 = vadd.f32 %v2553, %v2639
  %v2641 = vpop.f32.mrb[0].mxu0
  %2642 = vmatprep.mubr.f32.mxu0 %v2486
  %2643 = vmatmul.mubr.f32.gmra.mrb[0].mxu0 %v2485
  %v2644 = vpop.f32.mrb[0].mxu0
  %v2645 = vadd.f32 %v2554, %v2644
  %v2646 = vpop.f32.mrb[0].mxu0
  %2647 = vmatprep.mubr.f32.mxu0 %v2488
  %2648 = vmatmul.mubr.f32.gmra.mrb[0].mxu0 %v2487
  %v2649 = vpop.f32.mrb[0].mxu0
  %v2650 = vadd.f32 %v2555, %v2649
  %v2651 = vpop.f32.mrb[0].mxu0
  %2652 = vmatprep.mubr.f32.mxu0 %v2490
  %2653 = vmatmul.mubr.f32.gmra.mrb[0].mxu0 %v2489
  %v2654 = vpop.f32.mrb[0].mxu0
  %v2655 = vadd.f32 %v2556, %v2654
  %v2656 = vpop.f32.mrb[0].mxu0
  %2657 = vmatprep.mubr.f32.mxu0 %v2492
  %2658 = vmatmul.mubr.f32.gmra.mrb[0].mxu0 %v2491
  %v2659 = vpop.f32.mrb[0].mxu0
  %v2660 = vadd.f32 %v2557, %v2659
  %v2661 = vpop.f32.mrb[0].mxu0
  %2662 = vmatprep.mubr.f32.mxu0 %v2494
  %2663 = vmatmul.mubr.f32.gmra.mrb[0].mxu0 %v2493
  %v2664 = vpop.f32.mrb[0].mxu0
  %v2665 = vadd.f32 %v2558, %v2664
  %v2666 = vpop.f32.mrb[0].mxu0
  %2667 = vmatprep.mubr.f32.mxu0 %v2496
  %2668 = vmatmul.mubr.f32.gmra.mrb[0].mxu0 %v2495
  %v2669 = vpop.f32.mrb[0].mxu0
  %v2670 = vadd.f32 %v2559, %v2669
  %v2671 = vpop.f32.mrb[0].mxu0
  %2672 = vmatprep.mubr.f32.mxu0 %v2498
  %2673 = vmatmul.mubr.f32.gmra.mrb[0].mxu0 %v2497
  %v2674 = vpop.f32.mrb[0].mxu0
  %v2675 = vadd.f32 %v2560, %v2674
  %v2676 = vpop.f32.mrb[0].mxu0
  %2677 = vmatprep.mubr.f32.mxu0 %v2500
  %2678 = vmatmul.mubr.f32.gmra.mrb[0].mxu0 %v2499
  %v2679 = vpop.f32.mrb[0].mxu0
  %v2680 = vadd.f32 %v2561, %v2679
  %v2681 = vpop.f32.mrb[0].mxu0
  %2682 = vmatprep.mubr.f32.mxu0 %v2502
  %2683 = vmatmul.mubr.f32.gmra.mrb[0].mxu0 %v2501
  %v2684 = vpop.f32.mrb[0].mxu0
  %v2685 = vadd.f32 %v2562, %v2684
  %v2686 = vpop.f32.mrb[0].mxu0
  %2687 = vmatprep.mubr.f32.mxu0 %v2504
  %2688 = vmatmul.mubr.f32.gmra.mrb[0].mxu0 %v2503
  %v2689 = vpop.f32.mrb[0].mxu0
  %v2690 = vadd.f32 %v2563, %v2689
  %v2691 = vpop.f32.mrb[0].mxu0
  %2692 = vmatprep.mubr.f32.mxu0 %v2506
  %2693 = vmatmul.mubr.f32.gmra.mrb[0].mxu0 %v2505
  %v2694 = vpop.f32.mrb[0].mxu0
  %v2695 = vadd.f32 %v2564, %v2694
  %v2696 = vpop.f32.mrb[0].mxu0
  %2697 = vmatprep.mubr.f32.mxu0 %v2508
  %2698 = vmatmul.mubr.f32.gmra.mrb[0].mxu0 %v2507
  %v2699 = vpop.f32.mrb[0].mxu0
  %v2700 = vadd.f32 %v2565, %v2699
  %v2701 = vpop.f32.mrb[0].mxu0
  %2702 = vmatprep.mubr.f32.mxu0 %v2510
  %2703 = vmatmul.mubr.f32.gmra.mrb[0].mxu0 %v2509
  %v2704 = vpop.f32.mrb[0].mxu0
  %v2705 = vadd.f32 %v2566, %v2704
  %v2706 = vpop.f32.mrb[0].mxu0
  %2707 = vmatprep.mubr.f32.mxu0 %v2512
  %2708 = vmatmul.mubr.f32.gmra.mrb[0].mxu0 %v2511
  %v2709 = vpop.f32.mrb[0].mxu0
  %v2710 = vadd.f32 %v2567, %v2709
  %v2711 = vpop.f32.mrb[0].mxu0
  %2712 = vdwg.mxu0
  %v2713 = vsub.f32 0.0, %v252
  %v2714 = vsub.f32 0.0, %v255
  %v2715 = vsub.f32 0.0, %v260
  %v2716 = vsub.f32 0.0, %v263
  %v2717 = vsub.f32 0.0, %v268
  %v2718 = vsub.f32 0.0, %v271
  %v2719 = vsub.f32 0.0, %v276
  %v2720 = vsub.f32 0.0, %v279
  %v2721 = vsub.f32 0.0, %v284
  %v2722 = vsub.f32 0.0, %v287
  %v2723 = vsub.f32 0.0, %v292
  %v2724 = vsub.f32 0.0, %v295
  %v2725 = vsub.f32 0.0, %v300
  %v2726 = vsub.f32 0.0, %v303
  %v2727 = vsub.f32 0.0, %v308
  %v2728 = vsub.f32 0.0, %v311
  %v2729 = vmul.f32 %v2713, 1.442695
  %v2730 = vpow.pop %v2729
  %v2731 = vmul.f32 %v2714, 1.442695
  %v2732 = vpow.pop %v2731
  %v2733 = vmul.f32 %v2715, 1.442695
  %v2734 = vpow.pop %v2733
  %v2735 = vmul.f32 %v2716, 1.442695
  %v2736 = vpow.pop %v2735
  %v2737 = vmul.f32 %v2717, 1.442695
  %v2738 = vpow.pop %v2737
  %v2739 = vmul.f32 %v2718, 1.442695
  %v2740 = vpow.pop %v2739
  %v2741 = vmul.f32 %v2719, 1.442695
  %v2742 = vpow.pop %v2741
  %v2743 = vmul.f32 %v2720, 1.442695
  %v2744 = vpow.pop %v2743
  %v2745 = vmul.f32 %v2721, 1.442695
  %v2746 = vpow.pop %v2745
  %v2747 = vmul.f32 %v2722, 1.442695
  %v2748 = vpow.pop %v2747
  %v2749 = vmul.f32 %v2723, 1.442695
  %v2750 = vpow.pop %v2749
  %v2751 = vmul.f32 %v2724, 1.442695
  %v2752 = vpow.pop %v2751
  %v2753 = vmul.f32 %v2725, 1.442695
  %v2754 = vpow.pop %v2753
  %v2755 = vmul.f32 %v2726, 1.442695
  %v2756 = vpow.pop %v2755
  %v2757 = vmul.f32 %v2727, 1.442695
  %v2758 = vpow.pop %v2757
  %v2759 = vmul.f32 %v2728, 1.442695
  %v2760 = vpow.pop %v2759
  %v2761 = vadd.f32 %v2730, 1.0
  %v2762 = vadd.f32 %v2732, 1.0
  %v2763 = vadd.f32 %v2734, 1.0
  %v2764 = vadd.f32 %v2736, 1.0
  %v2765 = vadd.f32 %v2738, 1.0
  %v2766 = vadd.f32 %v2740, 1.0
  %v2767 = vadd.f32 %v2742, 1.0
  %v2768 = vadd.f32 %v2744, 1.0
  %v2769 = vadd.f32 %v2746, 1.0
  %v2770 = vadd.f32 %v2748, 1.0
  %v2771 = vadd.f32 %v2750, 1.0
  %v2772 = vadd.f32 %v2752, 1.0
  %v2773 = vadd.f32 %v2754, 1.0
  %v2774 = vadd.f32 %v2756, 1.0
  %v2775 = vadd.f32 %v2758, 1.0
  %v2776 = vadd.f32 %v2760, 1.0
  %v2777 = vrcp.pop %v2761
  %v2778 = vrcp.pop %v2762
  %v2779 = vrcp.pop %v2763
  %v2780 = vrcp.pop %v2764
  %v2781 = vrcp.pop %v2765
  %v2782 = vrcp.pop %v2766
  %v2783 = vrcp.pop %v2767
  %v2784 = vrcp.pop %v2768
  %v2785 = vrcp.pop %v2769
  %v2786 = vrcp.pop %v2770
  %v2787 = vrcp.pop %v2771
  %v2788 = vrcp.pop %v2772
  %v2789 = vrcp.pop %v2773
  %v2790 = vrcp.pop %v2774
  %v2791 = vrcp.pop %v2775
  %v2792 = vrcp.pop %v2776
  %v2793 = vmul.f32 %v252, %v2777
  %v2794 = vmul.f32 %v255, %v2778
  %v2795 = vmul.f32 %v260, %v2779
  %v2796 = vmul.f32 %v263, %v2780
  %v2797 = vmul.f32 %v268, %v2781
  %v2798 = vmul.f32 %v271, %v2782
  %v2799 = vmul.f32 %v276, %v2783
  %v2800 = vmul.f32 %v279, %v2784
  %v2801 = vmul.f32 %v284, %v2785
  %v2802 = vmul.f32 %v287, %v2786
  %v2803 = vmul.f32 %v292, %v2787
  %v2804 = vmul.f32 %v295, %v2788
  %v2805 = vmul.f32 %v300, %v2789
  %v2806 = vmul.f32 %v303, %v2790
  %v2807 = vmul.f32 %v308, %v2791
  %v2808 = vmul.f32 %v311, %v2792
  %v2809 = vmul.f32 %v2635, %v2793
  %v2810 = vmul.f32 %v2640, %v2794
  %v2811 = vmul.f32 %v2645, %v2795
  %v2812 = vmul.f32 %v2650, %v2796
  %v2813 = vmul.f32 %v2655, %v2797
  %v2814 = vmul.f32 %v2660, %v2798
  %v2815 = vmul.f32 %v2665, %v2799
  %v2816 = vmul.f32 %v2670, %v2800
  %v2817 = vmul.f32 %v2675, %v2801
  %v2818 = vmul.f32 %v2680, %v2802
  %v2819 = vmul.f32 %v2685, %v2803
  %v2820 = vmul.f32 %v2690, %v2804
  %v2821 = vmul.f32 %v2695, %v2805
  %v2822 = vmul.f32 %v2700, %v2806
  %v2823 = vmul.f32 %v2705, %v2807
  %v2824 = vmul.f32 %v2710, %v2808
  %v2825 = vpack.c.bf16 %v2810, %v2809
  %v2826 = vpack.c.bf16 %v2812, %v2811
  %v2827 = vpack.c.bf16 %v2814, %v2813
  %v2828 = vpack.c.bf16 %v2816, %v2815
  %v2829 = vpack.c.bf16 %v2818, %v2817
  %v2830 = vpack.c.bf16 %v2820, %v2819
  %v2831 = vpack.c.bf16 %v2822, %v2821
  %v2832 = vpack.c.bf16 %v2824, %v2823
  %v2833 = vld [vmem:[%s14] sm:$0xf]
  %v2834 = vld [vmem:[%s14 + $0x4] sm:$0xf]
  %v2837 = vunpack.c.l.b16 %v2833
  %v2838 = vunpack.c.l.b16 %v2834
  %v2839 = vpack.c.b16 %v2838, %v2837
  %v2842 = vsel %vm790, %v2825, 0
  %v2845 = vsel %vm790, %v2826, 0
  %v2848 = vsel %vm790, %v2827, 0
  %v2851 = vsel %vm790, %v2828, 0
  %v2854 = vsel %vm790, %v2829, 0
  %v2857 = vsel %vm790, %v2830, 0
  %v2860 = vsel %vm790, %v2831, 0
  %v2863 = vsel %vm790, %v2832, 0
  %2865 = vmatprep.subr.bf16.mxu0 0
  %2866 = vmatpush1.bf16.msra.mxu0 %v2839
  %2867 = vmatprep.subr.bf16.mxu0 0
  %2868 = vmatpush1.bf16.msra.mxu0 0
  %2869 = vmatprep.subr.bf16.mxu0 0
  %2870 = vmatpush1.bf16.msra.mxu0 0
  %2871 = vmatprep.subr.bf16.mxu0 0
  %2872 = vmatpush1.bf16.msra.mxu0 0
  %2873 = vmatprep.subr.bf16.mxu0 0
  %2874 = vmatpush1.bf16.msra.mxu0 0
  %2875 = vmatprep.subr.bf16.mxu0 0
  %2876 = vmatpush1.bf16.msra.mxu0 0
  %2877 = vmatprep.subr.bf16.mxu0 0
  %2878 = vmatpush1.bf16.msra.mxu0 0
  %2879 = vmatprep.subr.bf16.mxu0 0
  %2880 = vmatpush1.bf16.msra.mxu0 0
  %2881 = vmatprep.subr.bf16.mxu0 0
  %2882 = vmatpush1.bf16.msra.mxu0 0
  %2883 = vmatprep.subr.bf16.mxu0 0
  %2884 = vmatpush1.bf16.msra.mxu0 0
  %2885 = vmatprep.subr.bf16.mxu0 0
  %2886 = vmatpush1.bf16.msra.mxu0 0
  %2887 = vmatprep.subr.bf16.mxu0 0
  %2888 = vmatpush1.bf16.msra.mxu0 0
  %2889 = vmatprep.subr.bf16.mxu0 0
  %2890 = vmatpush1.bf16.msra.mxu0 0
  %2891 = vmatprep.subr.bf16.mxu0 0
  %2892 = vmatpush1.bf16.msra.mxu0 0
  %2893 = vmatprep.subr.bf16.mxu0 0
  %2894 = vmatpush1.bf16.msra.mxu0 0
  %2895 = vmatprep.subr.bf16.mxu0 0
  %2896 = vmatpush1.bf16.msra.mxu0 0
  %2897 = vmatprep.mubr.bf16.mxu0 0
  %2898 = vmatmul.mubr.bf16.gmra.mrb[0].mxu0 %v2842
  %v2899 = vpop.f32.mrb[0].mxu0
  %v2900 = vadd.f32 0.0, %v2899
  %v2901 = vpop.f32.mrb[0].mxu0
  %v2902 = vpop.f32.mrb[0].mxu0
  %v2903 = vadd.f32 0.0, %v2902
  %v2904 = vpop.f32.mrb[0].mxu0
  %2905 = vmatprep.mubr.bf16.mxu0 0
  %2906 = vmatmul.mubr.bf16.gmra.mrb[0].mxu0 %v2845
  %v2907 = vpop.f32.mrb[0].mxu0
  %v2908 = vadd.f32 0.0, %v2907
  %v2909 = vpop.f32.mrb[0].mxu0
  %v2910 = vpop.f32.mrb[0].mxu0
  %v2911 = vadd.f32 0.0, %v2910
  %v2912 = vpop.f32.mrb[0].mxu0
  %2913 = vmatprep.mubr.bf16.mxu0 0
  %2914 = vmatmul.mubr.bf16.gmra.mrb[0].mxu0 %v2848
  %v2915 = vpop.f32.mrb[0].mxu0
  %v2916 = vadd.f32 0.0, %v2915
  %v2917 = vpop.f32.mrb[0].mxu0
  %v2918 = vpop.f32.mrb[0].mxu0
  %v2919 = vadd.f32 0.0, %v2918
  %v2920 = vpop.f32.mrb[0].mxu0
  %2921 = vmatprep.mubr.bf16.mxu0 0
  %2922 = vmatmul.mubr.bf16.gmra.mrb[0].mxu0 %v2851
  %v2923 = vpop.f32.mrb[0].mxu0
  %v2924 = vadd.f32 0.0, %v2923
  %v2925 = vpop.f32.mrb[0].mxu0
  %v2926 = vpop.f32.mrb[0].mxu0
  %v2927 = vadd.f32 0.0, %v2926
  %v2928 = vpop.f32.mrb[0].mxu0
  %2929 = vmatprep.mubr.bf16.mxu0 0
  %2930 = vmatmul.mubr.bf16.gmra.mrb[0].mxu0 %v2854
  %v2931 = vpop.f32.mrb[0].mxu0
  %v2932 = vadd.f32 0.0, %v2931
  %v2933 = vpop.f32.mrb[0].mxu0
  %v2934 = vpop.f32.mrb[0].mxu0
  %v2935 = vadd.f32 0.0, %v2934
  %v2936 = vpop.f32.mrb[0].mxu0
  %2937 = vmatprep.mubr.bf16.mxu0 0
  %2938 = vmatmul.mubr.bf16.gmra.mrb[0].mxu0 %v2857
  %v2939 = vpop.f32.mrb[0].mxu0
  %v2940 = vadd.f32 0.0, %v2939
  %v2941 = vpop.f32.mrb[0].mxu0
  %v2942 = vpop.f32.mrb[0].mxu0
  %v2943 = vadd.f32 0.0, %v2942
  %v2944 = vpop.f32.mrb[0].mxu0
  %2945 = vmatprep.mubr.bf16.mxu0 0
  %2946 = vmatmul.mubr.bf16.gmra.mrb[0].mxu0 %v2860
  %v2947 = vpop.f32.mrb[0].mxu0
  %v2948 = vadd.f32 0.0, %v2947
  %v2949 = vpop.f32.mrb[0].mxu0
  %v2950 = vpop.f32.mrb[0].mxu0
  %v2951 = vadd.f32 0.0, %v2950
  %v2952 = vpop.f32.mrb[0].mxu0
  %2953 = vmatprep.mubr.bf16.mxu0 0
  %2954 = vmatmul.mubr.bf16.gmra.mrb[0].mxu0 %v2863
  %v2955 = vpop.f32.mrb[0].mxu0
  %v2956 = vadd.f32 0.0, %v2955
  %v2957 = vpop.f32.mrb[0].mxu0
  %v2958 = vpop.f32.mrb[0].mxu0
  %v2959 = vadd.f32 0.0, %v2958
  %v2960 = vpop.f32.mrb[0].mxu0
  %2961 = vdwg.mxu0
  %2962 = vst.msk [vmem:[%s15] sm:$0xff] %vm87, %v2900
  %2963 = vst.msk [vmem:[%s15 + $0x8] sm:$0xff] %vm87, %v2903
  %2964 = vst.msk [vmem:[%s15 + $0x10] sm:$0xff] %vm87, %v2908
  %2965 = vst.msk [vmem:[%s15 + $0x18] sm:$0xff] %vm87, %v2911
  %2966 = vst.msk [vmem:[%s15 + $0x20] sm:$0xff] %vm87, %v2916
  %2967 = vst.msk [vmem:[%s15 + $0x28] sm:$0xff] %vm87, %v2919
  %2968 = vst.msk [vmem:[%s15 + $0x30] sm:$0xff] %vm87, %v2924
  %2969 = vst.msk [vmem:[%s15 + $0x38] sm:$0xff] %vm87, %v2927
  %2970 = vst.msk [vmem:[%s15 + $0x40] sm:$0xff] %vm87, %v2932
  %2971 = vst.msk [vmem:[%s15 + $0x48] sm:$0xff] %vm87, %v2935
  %2972 = vst.msk [vmem:[%s15 + $0x50] sm:$0xff] %vm87, %v2940
  %2973 = vst.msk [vmem:[%s15 + $0x58] sm:$0xff] %vm87, %v2943
  %2974 = vst.msk [vmem:[%s15 + $0x60] sm:$0xff] %vm87, %v2948
  %2975 = vst.msk [vmem:[%s15 + $0x68] sm:$0xff] %vm87, %v2951
  %2976 = vst.msk [vmem:[%s15 + $0x70] sm:$0xff] %vm87, %v2956
  %2977 = vst.msk [vmem:[%s15 + $0x78] sm:$0xff] %vm87, %v2959
  // Predicated region
  $region73: #{tpu_custom_call.1} parent=0 // pred_check
    _
  $region74: #{tpu_custom_call.1} parent=0 // pred_check_branch
    %2979 = sbr.rel (0) target = $region76
  $region75: #{tpu_custom_call.1} parent=0 // pred_region
    _
  $region76: #{tpu_custom_call.1} parent=0 // pred_fallthru
    _
  // Predicated region
  $region77: #{tpu_custom_call.1} parent=0 // pred_check
    _
  $region78: #{tpu_custom_call.1} parent=0 // pred_check_branch
    %2981 = sbr.rel (0) target = $region80
  $region79: #{tpu_custom_call.1} parent=0 // pred_region
    _
  $region80: #{tpu_custom_call.1} parent=0 // pred_fallthru
    _

</llo_original>
